<compile_context>
chip_gen: v5e
topology: v5e:2x2
jax: 0.10.0
libtpu: 0.0.40
codegen_flags: <defaults>
</compile_context>

<pallas_src>
import jax
import jax.numpy as jnp
from jax import lax
from jax.experimental import pallas as pl
from jax.experimental.pallas import tpu as pltpu

EPS = 1e-5  # PyTorch default eps for GroupNorm and F.layer_norm

# Synthetic (small) wav2vec-1.0-style configuration: (out_channels, kernel, stride)
EXTRACTOR_LAYERS = [(32, 10, 5), (32, 8, 4), (32, 4, 2)]
AGGREGATOR_LAYERS = [(32, 3, 1), (32, 3, 1)]
# TODO(synk): optional log_compression / skip-connections / residual_scale of the fairseq
# checkpoint config are omitted (they are off in the base wav2vec architecture), as is the
# pretrained checkpoint loading (synthetic deterministic parameters are used instead).


# ----------------------------------------------------------------------------
# Static layer plan
# ----------------------------------------------------------------------------
def _build_plan(T):
    """Static per-layer metadata (shapes, strides, padding) for the fused kernel."""
    plan = []
    c_in, t_in = 1, T
    layers = [("ext", cfg) for cfg in EXTRACTOR_LAYERS] + \
             [("agg", cfg) for cfg in AGGREGATOR_LAYERS]
    for kind, (c_out, k, s) in layers:
        pad = (k - 1) if kind == "agg" else 0          # causal ReplicationPad1d((K-1, 0))
        t_out = (t_in + pad - k) // s + 1
        plan.append(dict(kind=kind, c_in=c_in, c_out=c_out, k=k, s=s, pad=pad,
                         t_in=t_in, t_out=t_out, bias=(kind == "agg")))
        c_in, t_in = c_out, t_out
    for i, L in enumerate(plan):
        # replication-pad rows the NEXT layer needs prepended in this layer's output buffer
        L["out_pad"] = plan[i + 1]["pad"] if i + 1 < len(plan) else 0
        L["last"] = i == len(plan) - 1
    return plan


# ----------------------------------------------------------------------------
# In-kernel helpers
# ----------------------------------------------------------------------------
def _gn_relu(y, gamma, beta):
    """GroupNorm(num_groups=1, affine) over one sample's (T, C) activation, fused w/ ReLU.

    Single-pass statistics (sum / sum-of-squares, f32); normalize + affine collapsed into
    a single y * scale + shift.
    """
    inv_n = 1.0 / float(y.shape[0] * y.shape[1])
    s1 = jnp.sum(y)
    s2 = jnp.sum(y * y)
    mean = s1 * inv_n
    var = s2 * inv_n - mean * mean
    rstd = lax.rsqrt(var + EPS)
    scale = gamma * rstd                  # (1, C)
    shift = beta - mean * scale           # (1, C)
    return jnp.maximum(y * scale + shift, 0.0)


def _store_act(act_ref, bi, y, pad):
    """Write a layer output to its VMEM buffer, left-replicating row 0 `pad` times
    (fairseq ConvAggregator causal ReplicationPad1d applied at write time)."""
    act_ref[bi, pad:pad + y.shape[0], :] = y
    for p in range(pad):
        act_ref[bi, p:p + 1, :] = y[0:1, :]


def _build_kernel(plan, B):
    n_layers = len(plan)

    def kernel(*refs):
        # --- unpack refs: x0, per-layer (w[, b], gamma, beta), output, activation scratch
        it = iter(refs)
        x0_ref = next(it)
        lrefs = []
        for L in plan:
            w_r = next(it)
            b_r = next(it) if L["bias"] else None
            g_r = next(it)
            be_r = next(it)
            lrefs.append((w_r, b_r, g_r, be_r))
        o_ref = next(it)
        act_refs = list(it)                    # one VMEM buffer per non-final layer

        # --- hoisted loop-invariants --------------------------------------------------
        # 0/1 downsampling matrices for strided layers (sel[i][t, u] = 1 iff u == t*s);
        # applied as a tiny matmul on the stride-1 conv slab (keeps VMEM reads contiguous).
        sel = {}
        for i in range(1, n_layers):
            L = plan[i]
            if L["s"] == 1:
                continue
            t_full = L["t_in"] + L["pad"] - L["k"] + 1
            r = lax.broadcasted_iota(jnp.int32, (L["t_out"], t_full), 0)
            c = lax.broadcasted_iota(jnp.int32, (L["t_out"], t_full), 1)
            sel[i] = (c == r * L["s"]).astype(jnp.float32)
        # small per-layer (1, C) vectors, loaded once (not per batch iteration)
        affine = []
        for (w_r, b_r, g_r, be_r) in lrefs:
            affine.append((b_r[...] if b_r is not None else None, g_r[...], be_r[...]))

        gsum = jnp.float32(0.0)
        gsumsq = jnp.float32(0.0)

        # --- batch loop (static unroll; everything below stays in VMEM / vregs) --------
        # TODO(synk): for v7x's 2 TensorCores, shard this loop over a parallel grid/core
        # axis and turn the final global layer-norm into a cross-core two-pass reduction.
        for bi in range(B):
            # ---- layer 0: Conv1d(C_in=1, K, stride) via phase-grouped waveform --------
            L0 = plan[0]
            m0 = L0["k"] // L0["s"]
            w0 = lrefs[0][0]                                     # (m0, s0, C_out)
            t0 = L0["t_out"]
            y = jnp.dot(x0_ref[bi, 0:t0, :], w0[0],
                        preferred_element_type=jnp.float32)
            for q in range(1, m0):
                y = y + jnp.dot(x0_ref[bi, q:q + t0, :], w0[q],
                                preferred_element_type=jnp.float32)
            y = _gn_relu(y, affine[0][1], affine[0][2])          # bias=False: skip add
            _store_act(act_refs[0], bi, y, L0["out_pad"])

            # ---- layers 1..n-1: K shifted matmuls (+ selection matmul if strided) -----
            for i in range(1, n_layers):
                L = plan[i]
                w_ref = lrefs[i][0]                              # (K, C_in, C_out)
                bias, gamma, beta = affine[i]
                src = act_refs[i - 1]
                t_slab = L["t_in"] + L["pad"] - L["k"] + 1       # stride-1 output rows
                y = jnp.dot(src[bi, 0:t_slab, :], w_ref[0],
                            preferred_element_type=jnp.float32)
                for k in range(1, L["k"]):
                    y = y + jnp.dot(src[bi, k:k + t_slab, :], w_ref[k],
                                    preferred_element_type=jnp.float32)
                if L["s"] > 1:
                    y = jnp.dot(sel[i], y, preferred_element_type=jnp.float32)
                if bias is not None:
                    y = y + bias
                y = _gn_relu(y, gamma, beta)
                if L["last"]:
                    # already in (T', C) layout == PyTorch .transpose(2, 1) output
                    o_ref[bi] = y
                    gsum = gsum + jnp.sum(y)
                    gsumsq = gsumsq + jnp.sum(y * y)
                else:
                    _store_act(act_refs[i], bi, y, L["out_pad"])

        # ---- F.layer_norm(out, out.shape): global (all-dims) normalization, no affine --
        inv_n = 1.0 / float(B * plan[-1]["t_out"] * plan[-1]["c_out"])
        mean = gsum * inv_n
        var = gsumsq * inv_n - mean * mean
        rstd = lax.rsqrt(var + EPS)
        o_ref[...] = (o_ref[...] - mean) * rstd

    return kernel


# ----------------------------------------------------------------------------
# Wrapper: one fused pallas_call for the whole forward
# ----------------------------------------------------------------------------
def fairseq_wav2vec1_forward(wav, params):
    """Fused forward. wav: (B, T) float32 -> (B, T_frames, C) float32.

    Mirrors FairseqWav2Vec1.extract_features in frozen/eval mode. Note: .squeeze(0) is a
    no-op for B > 1 (the module's transpose(2, 1) is only valid for B > 1 anyway), so the
    output keeps its batch dimension.
    """
    B, T = wav.shape
    plan = _build_plan(T)
    layer_params = list(params["extractor"]) + list(params["aggregator"])

    L0 = plan[0]
    assert L0["c_in"] == 1
    assert T % L0["s"] == 0 and L0["k"] % L0["s"] == 0, (
        "layer-0 phase decomposition assumes T and K divisible by the stride")
    m0 = L0["k"] // L0["s"]
    # Phase-grouped waveform: x0[b, u, j] = wav[b, u*stride + j]   (pure reshape, no gather)
    x0 = wav.astype(jnp.float32).reshape(B, T // L0["s"], L0["s"])

    inputs = [x0]
    in_specs = [pl.BlockSpec(x0.shape, lambda: (0, 0, 0))]

    def _add(arr):
        arr = arr.astype(jnp.float32)
        inputs.append(arr)
        nd = arr.ndim
        in_specs.append(pl.BlockSpec(arr.shape, lambda nd=nd: (0,) * nd))

    for i, (L, lp) in enumerate(zip(plan, layer_params)):
        w = lp["w"]                                    # (C_out, C_in, K) - PyTorch layout
        if i == 0:
            # (C_out, 1, K) -> (K//s, s, C_out) with W[q, j, c] = w[c, 0, q*s + j]
            wk = w.reshape(L["c_out"], m0, L["s"]).transpose(1, 2, 0)
        else:
            # per-tap matrices for the (T, C) layout: W[k] = w[:, :, k].T
            wk = jnp.transpose(w, (2, 1, 0))           # (K, C_in, C_out)
        _add(wk)
        if L["bias"]:
            _add(lp["b"].reshape(1, L["c_out"]))
        _add(lp["gamma"].reshape(1, L["c_out"]))
        _add(lp["beta"].reshape(1, L["c_out"]))

    out_shape = (B, plan[-1]["t_out"], plan[-1]["c_out"])
    # One VMEM activation buffer per non-final layer (rows include the next layer's causal
    # replication pad). Peak scratch here is ~50 KB. For production-scale audio (long T,
    # C=512) this is where a time-tiled grid + two-pass norms (and bf16 MXU inputs) would
    # be added to respect v7x's 64 MiB VMEM.  # TODO(synk)
    scratch_shapes = [
        pltpu.VMEM((B, L["t_out"] + L["out_pad"], L["c_out"]), jnp.float32)
        for L in plan[:-1]
    ]

    return pl.pallas_call(
        _build_kernel(plan, B),
        out_shape=jax.ShapeDtypeStruct(out_shape, jnp.float32),
        in_specs=in_specs,
        out_specs=pl.BlockSpec(out_shape, lambda: (0, 0, 0)),
        scratch_shapes=scratch_shapes,
    )(*inputs)


# ----------------------------------------------------------------------------
# Deterministic synthetic parameters
# ----------------------------------------------------------------------------
def init_params(key):
    params = {"extractor": [], "aggregator": []}
    c_in = 1
    for (c_out, k, s) in EXTRACTOR_LAYERS:
        key, kw = jax.random.split(key)
        w = jax.random.normal(kw, (c_out, c_in, k), jnp.float32) * (1.0 / (c_in * k)) ** 0.5
        params["extractor"].append(dict(
            w=w,                                       # extractor Conv1d has bias=False
            gamma=jnp.ones((c_out,), jnp.float32),
            beta=jnp.zeros((c_out,), jnp.float32)))
        c_in = c_out
    for (c_out, k, s) in AGGREGATOR_LAYERS:
        key, kw, kb = jax.random.split(key, 3)
        w = jax.random.normal(kw, (c_out, c_in, k), jnp.float32) * (1.0 / (c_in * k)) ** 0.5
        b = jax.random.normal(kb, (c_out,), jnp.float32) * 0.01
        params["aggregator"].append(dict(
            w=w, b=b,                                  # aggregator Conv1d has bias
            gamma=jnp.ones((c_out,), jnp.float32),
            beta=jnp.zeros((c_out,), jnp.float32)))
        c_in = c_out
    return params


# ----------------------------------------------------------------------------
# Pure-JAX reference (mirrors the PyTorch ops) for a correctness check
# ----------------------------------------------------------------------------
def _reference_forward(wav, params):
    hi = jax.lax.Precision.HIGHEST

    def conv1d(x, w, b, stride):
        _, _, t = x.shape
        _, _, k = w.shape
        t_out = (t - k) // stride + 1
        idx = jnp.arange(t_out)[:, None] * stride + jnp.arange(k)[None, :]
        patches = x[:, :, idx]                          # (B, C_in, T_out, K)
        y = jnp.einsum("bcok,dck->bdo", patches, w, precision=hi)
        return y + b[None, :, None]

    def gn_relu(y, gamma, beta):
        mean = jnp.mean(y, axis=(1, 2), keepdims=True)
        var = jnp.mean(jnp.square(y - mean), axis=(1, 2), keepdims=True)
        y = (y - mean) / jnp.sqrt(var + EPS)
        return jnp.maximum(gamma[None, :, None] * y + beta[None, :, None], 0.0)

    x = wav[:, None, :]
    for lp, (c_out, k, s) in zip(params["extractor"], EXTRACTOR_LAYERS):
        x = gn_relu(conv1d(x, lp["w"], jnp.zeros((c_out,), jnp.float32), s),
                    lp["gamma"], lp["beta"])
    for lp, (c_out, k, s) in zip(params["aggregator"], AGGREGATOR_LAYERS):
        xp = jnp.pad(x, ((0, 0), (0, 0), (k - 1, 0)), mode="edge")
        x = gn_relu(conv1d(xp, lp["w"], lp["b"], s), lp["gamma"], lp["beta"])
    x = jnp.transpose(x, (0, 2, 1))                     # (B, T', C)
    mean = jnp.mean(x)
    var = jnp.mean(jnp.square(x - mean))
    return (x - mean) / jnp.sqrt(var + EPS)


if __name__ == "__main__":
    key = jax.random.PRNGKey(0)
    key, kp, kx = jax.random.split(key, 3)

    params = init_params(kp)

    B, T = 2, 640
    wav = jax.random.normal(kx, (B, T), jnp.float32)

    out = jax.jit(fairseq_wav2vec1_forward)(wav, params)
    out = jax.block_until_ready(out)

    # Expected frame count: 640 -> 127 -> 30 -> 14 (extractor); aggregator preserves length.
    assert out.shape == (B, 14, EXTRACTOR_LAYERS[-1][0]), out.shape
    assert bool(jnp.all(jnp.isfinite(out)))

    ref = _reference_forward(wav, params)
    err = float(jnp.max(jnp.abs(out - ref)))
    assert err < 1e-3, f"max abs error vs reference: {err}"

    print("KERNEL_OK")
</pallas_src>

<mosaic_0001>
module attributes {stable_mosaic.version = 11 : i64} {
  func.func @kernel(%arg0: memref<2x128x5xf32, #tpu.memory_space<vmem>>, %arg1: memref<2x5x32xf32, #tpu.memory_space<vmem>>, %arg2: memref<1x32xf32, #tpu.memory_space<vmem>>, %arg3: memref<1x32xf32, #tpu.memory_space<vmem>>, %arg4: memref<8x32x32xf32, #tpu.memory_space<vmem>>, %arg5: memref<1x32xf32, #tpu.memory_space<vmem>>, %arg6: memref<1x32xf32, #tpu.memory_space<vmem>>, %arg7: memref<4x32x32xf32, #tpu.memory_space<vmem>>, %arg8: memref<1x32xf32, #tpu.memory_space<vmem>>, %arg9: memref<1x32xf32, #tpu.memory_space<vmem>>, %arg10: memref<3x32x32xf32, #tpu.memory_space<vmem>>, %arg11: memref<1x32xf32, #tpu.memory_space<vmem>>, %arg12: memref<1x32xf32, #tpu.memory_space<vmem>>, %arg13: memref<1x32xf32, #tpu.memory_space<vmem>>, %arg14: memref<3x32x32xf32, #tpu.memory_space<vmem>>, %arg15: memref<1x32xf32, #tpu.memory_space<vmem>>, %arg16: memref<1x32xf32, #tpu.memory_space<vmem>>, %arg17: memref<1x32xf32, #tpu.memory_space<vmem>>, %arg18: memref<2x14x32xf32, #tpu.memory_space<vmem>>, %arg19: memref<2x127x32xf32, #tpu.memory_space<vmem>>, %arg20: memref<2x30x32xf32, #tpu.memory_space<vmem>>, %arg21: memref<2x16x32xf32, #tpu.memory_space<vmem>>, %arg22: memref<2x16x32xf32, #tpu.memory_space<vmem>>) attributes {dimension_semantics = [], scalar_prefetch = 0 : i64, scratch_operands = 4 : i64, tpu.core_type = #tpu.core_type<tc>} {
    %0 = tpu.iota {dimensions = array<i32: 0>} : vector<30x120xi32>
    %1 = tpu.iota {dimensions = array<i32: 1>} : vector<30x120xi32>
    %c4_i32 = arith.constant 4 : i32
    %2 = vector.broadcast %c4_i32 : i32 to vector<30x120xi32>
    %3 = arith.muli %0, %2 : vector<30x120xi32>
    %4 = arith.cmpi eq, %1, %3 : vector<30x120xi32>
    %5 = arith.extui %4 : vector<30x120xi1> to vector<30x120xi32>
    %6 = arith.sitofp %5 : vector<30x120xi32> to vector<30x120xf32>
    %7 = tpu.iota {dimensions = array<i32: 0>} : vector<14x27xi32>
    %8 = tpu.iota {dimensions = array<i32: 1>} : vector<14x27xi32>
    %c2_i32 = arith.constant 2 : i32
    %9 = vector.broadcast %c2_i32 : i32 to vector<14x27xi32>
    %10 = arith.muli %7, %9 : vector<14x27xi32>
    %11 = arith.cmpi eq, %8, %10 : vector<14x27xi32>
    %12 = arith.extui %11 : vector<14x27xi1> to vector<14x27xi32>
    %13 = arith.sitofp %12 : vector<14x27xi32> to vector<14x27xf32>
    %c0 = arith.constant 0 : index
    %c0_0 = arith.constant 0 : index
    %14 = vector.load %arg2[%c0, %c0_0] : memref<1x32xf32, #tpu.memory_space<vmem>>, vector<1x32xf32>
    %c0_1 = arith.constant 0 : index
    %c0_2 = arith.constant 0 : index
    %15 = vector.load %arg3[%c0_1, %c0_2] : memref<1x32xf32, #tpu.memory_space<vmem>>, vector<1x32xf32>
    %c0_3 = arith.constant 0 : index
    %c0_4 = arith.constant 0 : index
    %16 = vector.load %arg5[%c0_3, %c0_4] : memref<1x32xf32, #tpu.memory_space<vmem>>, vector<1x32xf32>
    %c0_5 = arith.constant 0 : index
    %c0_6 = arith.constant 0 : index
    %17 = vector.load %arg6[%c0_5, %c0_6] : memref<1x32xf32, #tpu.memory_space<vmem>>, vector<1x32xf32>
    %c0_7 = arith.constant 0 : index
    %c0_8 = arith.constant 0 : index
    %18 = vector.load %arg8[%c0_7, %c0_8] : memref<1x32xf32, #tpu.memory_space<vmem>>, vector<1x32xf32>
    %c0_9 = arith.constant 0 : index
    %c0_10 = arith.constant 0 : index
    %19 = vector.load %arg9[%c0_9, %c0_10] : memref<1x32xf32, #tpu.memory_space<vmem>>, vector<1x32xf32>
    %c0_11 = arith.constant 0 : index
    %c0_12 = arith.constant 0 : index
    %20 = vector.load %arg11[%c0_11, %c0_12] : memref<1x32xf32, #tpu.memory_space<vmem>>, vector<1x32xf32>
    %c0_13 = arith.constant 0 : index
    %c0_14 = arith.constant 0 : index
    %21 = vector.load %arg12[%c0_13, %c0_14] : memref<1x32xf32, #tpu.memory_space<vmem>>, vector<1x32xf32>
    %c0_15 = arith.constant 0 : index
    %c0_16 = arith.constant 0 : index
    %22 = vector.load %arg13[%c0_15, %c0_16] : memref<1x32xf32, #tpu.memory_space<vmem>>, vector<1x32xf32>
    %c0_17 = arith.constant 0 : index
    %c0_18 = arith.constant 0 : index
    %23 = vector.load %arg15[%c0_17, %c0_18] : memref<1x32xf32, #tpu.memory_space<vmem>>, vector<1x32xf32>
    %c0_19 = arith.constant 0 : index
    %c0_20 = arith.constant 0 : index
    %24 = vector.load %arg16[%c0_19, %c0_20] : memref<1x32xf32, #tpu.memory_space<vmem>>, vector<1x32xf32>
    %c0_21 = arith.constant 0 : index
    %c0_22 = arith.constant 0 : index
    %25 = vector.load %arg17[%c0_21, %c0_22] : memref<1x32xf32, #tpu.memory_space<vmem>>, vector<1x32xf32>
    %c0_23 = arith.constant 0 : index
    %c0_24 = arith.constant 0 : index
    %c0_25 = arith.constant 0 : index
    %26 = vector.load %arg0[%c0_23, %c0_24, %c0_25] : memref<2x128x5xf32, #tpu.memory_space<vmem>>, vector<1x127x5xf32>
    %27 = vector.shape_cast %26 : vector<1x127x5xf32> to vector<127x5xf32>
    %c0_26 = arith.constant 0 : index
    %c0_27 = arith.constant 0 : index
    %c0_28 = arith.constant 0 : index
    %28 = vector.load %arg1[%c0_26, %c0_27, %c0_28] : memref<2x5x32xf32, #tpu.memory_space<vmem>>, vector<1x5x32xf32>
    %29 = vector.shape_cast %28 : vector<1x5x32xf32> to vector<5x32xf32>
    %cst = arith.constant dense<0.000000e+00> : vector<127x32xf32>
    %30 = tpu.matmul %27, %29, %cst {dimension_numbers = #tpu.dot_dimension_numbers<[1], [0], [0], [1], [0, 0, 1, 1], [], []>} : vector<127x5xf32>, vector<5x32xf32>, vector<127x32xf32> -> vector<127x32xf32>
    %c0_29 = arith.constant 0 : index
    %c1 = arith.constant 1 : index
    %c0_30 = arith.constant 0 : index
    %31 = vector.load %arg0[%c0_29, %c1, %c0_30] : memref<2x128x5xf32, #tpu.memory_space<vmem>>, vector<1x127x5xf32>
    %32 = vector.shape_cast %31 : vector<1x127x5xf32> to vector<127x5xf32>
    %c1_31 = arith.constant 1 : index
    %c0_32 = arith.constant 0 : index
    %c0_33 = arith.constant 0 : index
    %33 = vector.load %arg1[%c1_31, %c0_32, %c0_33] : memref<2x5x32xf32, #tpu.memory_space<vmem>>, vector<1x5x32xf32>
    %34 = vector.shape_cast %33 : vector<1x5x32xf32> to vector<5x32xf32>
    %cst_34 = arith.constant dense<0.000000e+00> : vector<127x32xf32>
    %35 = tpu.matmul %32, %34, %cst_34 {dimension_numbers = #tpu.dot_dimension_numbers<[1], [0], [0], [1], [0, 0, 1, 1], [], []>} : vector<127x5xf32>, vector<5x32xf32>, vector<127x32xf32> -> vector<127x32xf32>
    %36 = arith.addf %30, %35 : vector<127x32xf32>
    %37 = vector.shape_cast %36 : vector<127x32xf32> to vector<1x127x32xf32>
    %cst_35 = arith.constant dense<0.000000e+00> : vector<1xf32>
    %38 = vector.multi_reduction <add>, %37, %cst_35 [1, 2] : vector<1x127x32xf32> to vector<1xf32>
    %39 = vector.shape_cast %38 : vector<1xf32> to vector<1x1x1xf32>
    %40 = vector.extract %39[0, 0, 0] : f32 from vector<1x1x1xf32>
    %41 = arith.mulf %36, %36 : vector<127x32xf32>
    %42 = vector.shape_cast %41 : vector<127x32xf32> to vector<1x127x32xf32>
    %cst_36 = arith.constant dense<0.000000e+00> : vector<1xf32>
    %43 = vector.multi_reduction <add>, %42, %cst_36 [1, 2] : vector<1x127x32xf32> to vector<1xf32>
    %44 = vector.shape_cast %43 : vector<1xf32> to vector<1x1x1xf32>
    %45 = vector.extract %44[0, 0, 0] : f32 from vector<1x1x1xf32>
    %cst_37 = arith.constant 2.460630e-04 : f32
    %46 = arith.mulf %40, %cst_37 : f32
    %cst_38 = arith.constant 2.460630e-04 : f32
    %47 = arith.mulf %45, %cst_38 : f32
    %48 = arith.mulf %46, %46 : f32
    %49 = arith.subf %47, %48 : f32
    %cst_39 = arith.constant 9.99999974E-6 : f32
    %50 = arith.addf %49, %cst_39 : f32
    %51 = math.rsqrt %50 : f32
    %52 = vector.broadcast %51 : f32 to vector<1x32xf32>
    %53 = arith.mulf %14, %52 : vector<1x32xf32>
    %54 = vector.broadcast %46 : f32 to vector<1x32xf32>
    %55 = arith.mulf %54, %53 : vector<1x32xf32>
    %56 = arith.subf %15, %55 : vector<1x32xf32>
    %57 = vector.broadcast %53 : vector<1x32xf32> to vector<127x32xf32>
    %58 = arith.mulf %36, %57 : vector<127x32xf32>
    %59 = vector.broadcast %56 : vector<1x32xf32> to vector<127x32xf32>
    %60 = arith.addf %58, %59 : vector<127x32xf32>
    %cst_40 = arith.constant 0.000000e+00 : f32
    %61 = vector.broadcast %cst_40 : f32 to vector<127x32xf32>
    %62 = arith.maximumf %60, %61 : vector<127x32xf32>
    %c0_41 = arith.constant 0 : index
    %c0_42 = arith.constant 0 : index
    %c0_43 = arith.constant 0 : index
    %63 = vector.load %arg19[%c0_41, %c0_42, %c0_43] : memref<2x127x32xf32, #tpu.memory_space<vmem>>, vector<1x127x32xf32>
    %64 = vector.shape_cast %63 : vector<1x127x32xf32> to vector<127x32xf32>
    %65 = vector.shape_cast %62 : vector<127x32xf32> to vector<1x127x32xf32>
    tpu.vector_store %arg19[%c0_41, %c0_42, %c0_43], %65 {strides = array<i32>} : memref<2x127x32xf32, #tpu.memory_space<vmem>>, vector<1x127x32xf32>,
    %c0_44 = arith.constant 0 : index
    %c0_45 = arith.constant 0 : index
    %c0_46 = arith.constant 0 : index
    %66 = vector.load %arg19[%c0_44, %c0_45, %c0_46] : memref<2x127x32xf32, #tpu.memory_space<vmem>>, vector<1x120x32xf32>
    %67 = vector.shape_cast %66 : vector<1x120x32xf32> to vector<120x32xf32>
    %c0_47 = arith.constant 0 : index
    %c0_48 = arith.constant 0 : index
    %c0_49 = arith.constant 0 : index
    %68 = vector.load %arg4[%c0_47, %c0_48, %c0_49] : memref<8x32x32xf32, #tpu.memory_space<vmem>>, vector<1x32x32xf32>
    %69 = vector.shape_cast %68 : vector<1x32x32xf32> to vector<32x32xf32>
    %cst_50 = arith.constant dense<0.000000e+00> : vector<120x32xf32>
    %70 = tpu.matmul %67, %69, %cst_50 {dimension_numbers = #tpu.dot_dimension_numbers<[1], [0], [0], [1], [0, 0, 1, 1], [], []>} : vector<120x32xf32>, vector<32x32xf32>, vector<120x32xf32> -> vector<120x32xf32>
    %c0_51 = arith.constant 0 : index
    %c1_52 = arith.constant 1 : index
    %c0_53 = arith.constant 0 : index
    %71 = vector.load %arg19[%c0_51, %c1_52, %c0_53] : memref<2x127x32xf32, #tpu.memory_space<vmem>>, vector<1x120x32xf32>
    %72 = vector.shape_cast %71 : vector<1x120x32xf32> to vector<120x32xf32>
    %c1_54 = arith.constant 1 : index
    %c0_55 = arith.constant 0 : index
    %c0_56 = arith.constant 0 : index
    %73 = vector.load %arg4[%c1_54, %c0_55, %c0_56] : memref<8x32x32xf32, #tpu.memory_space<vmem>>, vector<1x32x32xf32>
    %74 = vector.shape_cast %73 : vector<1x32x32xf32> to vector<32x32xf32>
    %cst_57 = arith.constant dense<0.000000e+00> : vector<120x32xf32>
    %75 = tpu.matmul %72, %74, %cst_57 {dimension_numbers = #tpu.dot_dimension_numbers<[1], [0], [0], [1], [0, 0, 1, 1], [], []>} : vector<120x32xf32>, vector<32x32xf32>, vector<120x32xf32> -> vector<120x32xf32>
    %76 = arith.addf %70, %75 : vector<120x32xf32>
    %c0_58 = arith.constant 0 : index
    %c2 = arith.constant 2 : index
    %c0_59 = arith.constant 0 : index
    %77 = vector.load %arg19[%c0_58, %c2, %c0_59] : memref<2x127x32xf32, #tpu.memory_space<vmem>>, vector<1x120x32xf32>
    %78 = vector.shape_cast %77 : vector<1x120x32xf32> to vector<120x32xf32>
    %c2_60 = arith.constant 2 : index
    %c0_61 = arith.constant 0 : index
    %c0_62 = arith.constant 0 : index
    %79 = vector.load %arg4[%c2_60, %c0_61, %c0_62] : memref<8x32x32xf32, #tpu.memory_space<vmem>>, vector<1x32x32xf32>
    %80 = vector.shape_cast %79 : vector<1x32x32xf32> to vector<32x32xf32>
    %cst_63 = arith.constant dense<0.000000e+00> : vector<120x32xf32>
    %81 = tpu.matmul %78, %80, %cst_63 {dimension_numbers = #tpu.dot_dimension_numbers<[1], [0], [0], [1], [0, 0, 1, 1], [], []>} : vector<120x32xf32>, vector<32x32xf32>, vector<120x32xf32> -> vector<120x32xf32>
    %82 = arith.addf %76, %81 : vector<120x32xf32>
    %c0_64 = arith.constant 0 : index
    %c3 = arith.constant 3 : index
    %c0_65 = arith.constant 0 : index
    %83 = vector.load %arg19[%c0_64, %c3, %c0_65] : memref<2x127x32xf32, #tpu.memory_space<vmem>>, vector<1x120x32xf32>
    %84 = vector.shape_cast %83 : vector<1x120x32xf32> to vector<120x32xf32>
    %c3_66 = arith.constant 3 : index
    %c0_67 = arith.constant 0 : index
    %c0_68 = arith.constant 0 : index
    %85 = vector.load %arg4[%c3_66, %c0_67, %c0_68] : memref<8x32x32xf32, #tpu.memory_space<vmem>>, vector<1x32x32xf32>
    %86 = vector.shape_cast %85 : vector<1x32x32xf32> to vector<32x32xf32>
    %cst_69 = arith.constant dense<0.000000e+00> : vector<120x32xf32>
    %87 = tpu.matmul %84, %86, %cst_69 {dimension_numbers = #tpu.dot_dimension_numbers<[1], [0], [0], [1], [0, 0, 1, 1], [], []>} : vector<120x32xf32>, vector<32x32xf32>, vector<120x32xf32> -> vector<120x32xf32>
    %88 = arith.addf %82, %87 : vector<120x32xf32>
    %c0_70 = arith.constant 0 : index
    %c4 = arith.constant 4 : index
    %c0_71 = arith.constant 0 : index
    %89 = vector.load %arg19[%c0_70, %c4, %c0_71] : memref<2x127x32xf32, #tpu.memory_space<vmem>>, vector<1x120x32xf32>
    %90 = vector.shape_cast %89 : vector<1x120x32xf32> to vector<120x32xf32>
    %c4_72 = arith.constant 4 : index
    %c0_73 = arith.constant 0 : index
    %c0_74 = arith.constant 0 : index
    %91 = vector.load %arg4[%c4_72, %c0_73, %c0_74] : memref<8x32x32xf32, #tpu.memory_space<vmem>>, vector<1x32x32xf32>
    %92 = vector.shape_cast %91 : vector<1x32x32xf32> to vector<32x32xf32>
    %cst_75 = arith.constant dense<0.000000e+00> : vector<120x32xf32>
    %93 = tpu.matmul %90, %92, %cst_75 {dimension_numbers = #tpu.dot_dimension_numbers<[1], [0], [0], [1], [0, 0, 1, 1], [], []>} : vector<120x32xf32>, vector<32x32xf32>, vector<120x32xf32> -> vector<120x32xf32>
    %94 = arith.addf %88, %93 : vector<120x32xf32>
    %c0_76 = arith.constant 0 : index
    %c5 = arith.constant 5 : index
    %c0_77 = arith.constant 0 : index
    %95 = vector.load %arg19[%c0_76, %c5, %c0_77] : memref<2x127x32xf32, #tpu.memory_space<vmem>>, vector<1x120x32xf32>
    %96 = vector.shape_cast %95 : vector<1x120x32xf32> to vector<120x32xf32>
    %c5_78 = arith.constant 5 : index
    %c0_79 = arith.constant 0 : index
    %c0_80 = arith.constant 0 : index
    %97 = vector.load %arg4[%c5_78, %c0_79, %c0_80] : memref<8x32x32xf32, #tpu.memory_space<vmem>>, vector<1x32x32xf32>
    %98 = vector.shape_cast %97 : vector<1x32x32xf32> to vector<32x32xf32>
    %cst_81 = arith.constant dense<0.000000e+00> : vector<120x32xf32>
    %99 = tpu.matmul %96, %98, %cst_81 {dimension_numbers = #tpu.dot_dimension_numbers<[1], [0], [0], [1], [0, 0, 1, 1], [], []>} : vector<120x32xf32>, vector<32x32xf32>, vector<120x32xf32> -> vector<120x32xf32>
    %100 = arith.addf %94, %99 : vector<120x32xf32>
    %c0_82 = arith.constant 0 : index
    %c6 = arith.constant 6 : index
    %c0_83 = arith.constant 0 : index
    %101 = vector.load %arg19[%c0_82, %c6, %c0_83] : memref<2x127x32xf32, #tpu.memory_space<vmem>>, vector<1x120x32xf32>
    %102 = vector.shape_cast %101 : vector<1x120x32xf32> to vector<120x32xf32>
    %c6_84 = arith.constant 6 : index
    %c0_85 = arith.constant 0 : index
    %c0_86 = arith.constant 0 : index
    %103 = vector.load %arg4[%c6_84, %c0_85, %c0_86] : memref<8x32x32xf32, #tpu.memory_space<vmem>>, vector<1x32x32xf32>
    %104 = vector.shape_cast %103 : vector<1x32x32xf32> to vector<32x32xf32>
    %cst_87 = arith.constant dense<0.000000e+00> : vector<120x32xf32>
    %105 = tpu.matmul %102, %104, %cst_87 {dimension_numbers = #tpu.dot_dimension_numbers<[1], [0], [0], [1], [0, 0, 1, 1], [], []>} : vector<120x32xf32>, vector<32x32xf32>, vector<120x32xf32> -> vector<120x32xf32>
    %106 = arith.addf %100, %105 : vector<120x32xf32>
    %c0_88 = arith.constant 0 : index
    %c7 = arith.constant 7 : index
    %c0_89 = arith.constant 0 : index
    %107 = vector.load %arg19[%c0_88, %c7, %c0_89] : memref<2x127x32xf32, #tpu.memory_space<vmem>>, vector<1x120x32xf32>
    %108 = vector.shape_cast %107 : vector<1x120x32xf32> to vector<120x32xf32>
    %c7_90 = arith.constant 7 : index
    %c0_91 = arith.constant 0 : index
    %c0_92 = arith.constant 0 : index
    %109 = vector.load %arg4[%c7_90, %c0_91, %c0_92] : memref<8x32x32xf32, #tpu.memory_space<vmem>>, vector<1x32x32xf32>
    %110 = vector.shape_cast %109 : vector<1x32x32xf32> to vector<32x32xf32>
    %cst_93 = arith.constant dense<0.000000e+00> : vector<120x32xf32>
    %111 = tpu.matmul %108, %110, %cst_93 {dimension_numbers = #tpu.dot_dimension_numbers<[1], [0], [0], [1], [0, 0, 1, 1], [], []>} : vector<120x32xf32>, vector<32x32xf32>, vector<120x32xf32> -> vector<120x32xf32>
    %112 = arith.addf %106, %111 : vector<120x32xf32>
    %cst_94 = arith.constant dense<0.000000e+00> : vector<30x32xf32>
    %113 = tpu.matmul %6, %112, %cst_94 {dimension_numbers = #tpu.dot_dimension_numbers<[1], [0], [0], [1], [0, 0, 1, 1], [], []>} : vector<30x120xf32>, vector<120x32xf32>, vector<30x32xf32> -> vector<30x32xf32>
    %114 = vector.shape_cast %113 : vector<30x32xf32> to vector<1x30x32xf32>
    %cst_95 = arith.constant dense<0.000000e+00> : vector<1xf32>
    %115 = vector.multi_reduction <add>, %114, %cst_95 [1, 2] : vector<1x30x32xf32> to vector<1xf32>
    %116 = vector.shape_cast %115 : vector<1xf32> to vector<1x1x1xf32>
    %117 = vector.extract %116[0, 0, 0] : f32 from vector<1x1x1xf32>
    %118 = arith.mulf %113, %113 : vector<30x32xf32>
    %119 = vector.shape_cast %118 : vector<30x32xf32> to vector<1x30x32xf32>
    %cst_96 = arith.constant dense<0.000000e+00> : vector<1xf32>
    %120 = vector.multi_reduction <add>, %119, %cst_96 [1, 2] : vector<1x30x32xf32> to vector<1xf32>
    %121 = vector.shape_cast %120 : vector<1xf32> to vector<1x1x1xf32>
    %122 = vector.extract %121[0, 0, 0] : f32 from vector<1x1x1xf32>
    %cst_97 = arith.constant 0.00104166672 : f32
    %123 = arith.mulf %117, %cst_97 : f32
    %cst_98 = arith.constant 0.00104166672 : f32
    %124 = arith.mulf %122, %cst_98 : f32
    %125 = arith.mulf %123, %123 : f32
    %126 = arith.subf %124, %125 : f32
    %cst_99 = arith.constant 9.99999974E-6 : f32
    %127 = arith.addf %126, %cst_99 : f32
    %128 = math.rsqrt %127 : f32
    %129 = vector.broadcast %128 : f32 to vector<1x32xf32>
    %130 = arith.mulf %16, %129 : vector<1x32xf32>
    %131 = vector.broadcast %123 : f32 to vector<1x32xf32>
    %132 = arith.mulf %131, %130 : vector<1x32xf32>
    %133 = arith.subf %17, %132 : vector<1x32xf32>
    %134 = vector.broadcast %130 : vector<1x32xf32> to vector<30x32xf32>
    %135 = arith.mulf %113, %134 : vector<30x32xf32>
    %136 = vector.broadcast %133 : vector<1x32xf32> to vector<30x32xf32>
    %137 = arith.addf %135, %136 : vector<30x32xf32>
    %cst_100 = arith.constant 0.000000e+00 : f32
    %138 = vector.broadcast %cst_100 : f32 to vector<30x32xf32>
    %139 = arith.maximumf %137, %138 : vector<30x32xf32>
    %c0_101 = arith.constant 0 : index
    %c0_102 = arith.constant 0 : index
    %c0_103 = arith.constant 0 : index
    %140 = vector.load %arg20[%c0_101, %c0_102, %c0_103] : memref<2x30x32xf32, #tpu.memory_space<vmem>>, vector<1x30x32xf32>
    %141 = vector.shape_cast %140 : vector<1x30x32xf32> to vector<30x32xf32>
    %142 = vector.shape_cast %139 : vector<30x32xf32> to vector<1x30x32xf32>
    tpu.vector_store %arg20[%c0_101, %c0_102, %c0_103], %142 {strides = array<i32>} : memref<2x30x32xf32, #tpu.memory_space<vmem>>, vector<1x30x32xf32>,
    %c0_104 = arith.constant 0 : index
    %c0_105 = arith.constant 0 : index
    %c0_106 = arith.constant 0 : index
    %143 = vector.load %arg20[%c0_104, %c0_105, %c0_106] : memref<2x30x32xf32, #tpu.memory_space<vmem>>, vector<1x27x32xf32>
    %144 = vector.shape_cast %143 : vector<1x27x32xf32> to vector<27x32xf32>
    %c0_107 = arith.constant 0 : index
    %c0_108 = arith.constant 0 : index
    %c0_109 = arith.constant 0 : index
    %145 = vector.load %arg7[%c0_107, %c0_108, %c0_109] : memref<4x32x32xf32, #tpu.memory_space<vmem>>, vector<1x32x32xf32>
    %146 = vector.shape_cast %145 : vector<1x32x32xf32> to vector<32x32xf32>
    %cst_110 = arith.constant dense<0.000000e+00> : vector<27x32xf32>
    %147 = tpu.matmul %144, %146, %cst_110 {dimension_numbers = #tpu.dot_dimension_numbers<[1], [0], [0], [1], [0, 0, 1, 1], [], []>} : vector<27x32xf32>, vector<32x32xf32>, vector<27x32xf32> -> vector<27x32xf32>
    %c0_111 = arith.constant 0 : index
    %c1_112 = arith.constant 1 : index
    %c0_113 = arith.constant 0 : index
    %148 = vector.load %arg20[%c0_111, %c1_112, %c0_113] : memref<2x30x32xf32, #tpu.memory_space<vmem>>, vector<1x27x32xf32>
    %149 = vector.shape_cast %148 : vector<1x27x32xf32> to vector<27x32xf32>
    %c1_114 = arith.constant 1 : index
    %c0_115 = arith.constant 0 : index
    %c0_116 = arith.constant 0 : index
    %150 = vector.load %arg7[%c1_114, %c0_115, %c0_116] : memref<4x32x32xf32, #tpu.memory_space<vmem>>, vector<1x32x32xf32>
    %151 = vector.shape_cast %150 : vector<1x32x32xf32> to vector<32x32xf32>
    %cst_117 = arith.constant dense<0.000000e+00> : vector<27x32xf32>
    %152 = tpu.matmul %149, %151, %cst_117 {dimension_numbers = #tpu.dot_dimension_numbers<[1], [0], [0], [1], [0, 0, 1, 1], [], []>} : vector<27x32xf32>, vector<32x32xf32>, vector<27x32xf32> -> vector<27x32xf32>
    %153 = arith.addf %147, %152 : vector<27x32xf32>
    %c0_118 = arith.constant 0 : index
    %c2_119 = arith.constant 2 : index
    %c0_120 = arith.constant 0 : index
    %154 = vector.load %arg20[%c0_118, %c2_119, %c0_120] : memref<2x30x32xf32, #tpu.memory_space<vmem>>, vector<1x27x32xf32>
    %155 = vector.shape_cast %154 : vector<1x27x32xf32> to vector<27x32xf32>
    %c2_121 = arith.constant 2 : index
    %c0_122 = arith.constant 0 : index
    %c0_123 = arith.constant 0 : index
    %156 = vector.load %arg7[%c2_121, %c0_122, %c0_123] : memref<4x32x32xf32, #tpu.memory_space<vmem>>, vector<1x32x32xf32>
    %157 = vector.shape_cast %156 : vector<1x32x32xf32> to vector<32x32xf32>
    %cst_124 = arith.constant dense<0.000000e+00> : vector<27x32xf32>
    %158 = tpu.matmul %155, %157, %cst_124 {dimension_numbers = #tpu.dot_dimension_numbers<[1], [0], [0], [1], [0, 0, 1, 1], [], []>} : vector<27x32xf32>, vector<32x32xf32>, vector<27x32xf32> -> vector<27x32xf32>
    %159 = arith.addf %153, %158 : vector<27x32xf32>
    %c0_125 = arith.constant 0 : index
    %c3_126 = arith.constant 3 : index
    %c0_127 = arith.constant 0 : index
    %160 = vector.load %arg20[%c0_125, %c3_126, %c0_127] : memref<2x30x32xf32, #tpu.memory_space<vmem>>, vector<1x27x32xf32>
    %161 = vector.shape_cast %160 : vector<1x27x32xf32> to vector<27x32xf32>
    %c3_128 = arith.constant 3 : index
    %c0_129 = arith.constant 0 : index
    %c0_130 = arith.constant 0 : index
    %162 = vector.load %arg7[%c3_128, %c0_129, %c0_130] : memref<4x32x32xf32, #tpu.memory_space<vmem>>, vector<1x32x32xf32>
    %163 = vector.shape_cast %162 : vector<1x32x32xf32> to vector<32x32xf32>
    %cst_131 = arith.constant dense<0.000000e+00> : vector<27x32xf32>
    %164 = tpu.matmul %161, %163, %cst_131 {dimension_numbers = #tpu.dot_dimension_numbers<[1], [0], [0], [1], [0, 0, 1, 1], [], []>} : vector<27x32xf32>, vector<32x32xf32>, vector<27x32xf32> -> vector<27x32xf32>
    %165 = arith.addf %159, %164 : vector<27x32xf32>
    %cst_132 = arith.constant dense<0.000000e+00> : vector<14x32xf32>
    %166 = tpu.matmul %13, %165, %cst_132 {dimension_numbers = #tpu.dot_dimension_numbers<[1], [0], [0], [1], [0, 0, 1, 1], [], []>} : vector<14x27xf32>, vector<27x32xf32>, vector<14x32xf32> -> vector<14x32xf32>
    %167 = vector.shape_cast %166 : vector<14x32xf32> to vector<1x14x32xf32>
    %cst_133 = arith.constant dense<0.000000e+00> : vector<1xf32>
    %168 = vector.multi_reduction <add>, %167, %cst_133 [1, 2] : vector<1x14x32xf32> to vector<1xf32>
    %169 = vector.shape_cast %168 : vector<1xf32> to vector<1x1x1xf32>
    %170 = vector.extract %169[0, 0, 0] : f32 from vector<1x1x1xf32>
    %171 = arith.mulf %166, %166 : vector<14x32xf32>
    %172 = vector.shape_cast %171 : vector<14x32xf32> to vector<1x14x32xf32>
    %cst_134 = arith.constant dense<0.000000e+00> : vector<1xf32>
    %173 = vector.multi_reduction <add>, %172, %cst_134 [1, 2] : vector<1x14x32xf32> to vector<1xf32>
    %174 = vector.shape_cast %173 : vector<1xf32> to vector<1x1x1xf32>
    %175 = vector.extract %174[0, 0, 0] : f32 from vector<1x1x1xf32>
    %cst_135 = arith.constant 0.00223214296 : f32
    %176 = arith.mulf %170, %cst_135 : f32
    %cst_136 = arith.constant 0.00223214296 : f32
    %177 = arith.mulf %175, %cst_136 : f32
    %178 = arith.mulf %176, %176 : f32
    %179 = arith.subf %177, %178 : f32
    %cst_137 = arith.constant 9.99999974E-6 : f32
    %180 = arith.addf %179, %cst_137 : f32
    %181 = math.rsqrt %180 : f32
    %182 = vector.broadcast %181 : f32 to vector<1x32xf32>
    %183 = arith.mulf %18, %182 : vector<1x32xf32>
    %184 = vector.broadcast %176 : f32 to vector<1x32xf32>
    %185 = arith.mulf %184, %183 : vector<1x32xf32>
    %186 = arith.subf %19, %185 : vector<1x32xf32>
    %187 = vector.broadcast %183 : vector<1x32xf32> to vector<14x32xf32>
    %188 = arith.mulf %166, %187 : vector<14x32xf32>
    %189 = vector.broadcast %186 : vector<1x32xf32> to vector<14x32xf32>
    %190 = arith.addf %188, %189 : vector<14x32xf32>
    %cst_138 = arith.constant 0.000000e+00 : f32
    %191 = vector.broadcast %cst_138 : f32 to vector<14x32xf32>
    %192 = arith.maximumf %190, %191 : vector<14x32xf32>
    %c0_139 = arith.constant 0 : index
    %c2_140 = arith.constant 2 : index
    %c0_141 = arith.constant 0 : index
    %193 = vector.load %arg21[%c0_139, %c2_140, %c0_141] : memref<2x16x32xf32, #tpu.memory_space<vmem>>, vector<1x14x32xf32>
    %194 = vector.shape_cast %193 : vector<1x14x32xf32> to vector<14x32xf32>
    %195 = vector.shape_cast %192 : vector<14x32xf32> to vector<1x14x32xf32>
    tpu.vector_store %arg21[%c0_139, %c2_140, %c0_141], %195 {strides = array<i32>} : memref<2x16x32xf32, #tpu.memory_space<vmem>>, vector<1x14x32xf32>,
    %196 = vector.extract_strided_slice %192 {offsets = [0, 0], sizes = [1, 32], strides = [1, 1]} : vector<14x32xf32> to vector<1x32xf32>
    %c0_142 = arith.constant 0 : index
    %c0_143 = arith.constant 0 : index
    %c0_144 = arith.constant 0 : index
    %197 = vector.load %arg21[%c0_142, %c0_143, %c0_144] : memref<2x16x32xf32, #tpu.memory_space<vmem>>, vector<1x1x32xf32>
    %198 = vector.shape_cast %197 : vector<1x1x32xf32> to vector<1x32xf32>
    %199 = vector.shape_cast %196 : vector<1x32xf32> to vector<1x1x32xf32>
    tpu.vector_store %arg21[%c0_142, %c0_143, %c0_144], %199 {strides = array<i32>} : memref<2x16x32xf32, #tpu.memory_space<vmem>>, vector<1x1x32xf32>,
    %200 = vector.extract_strided_slice %192 {offsets = [0, 0], sizes = [1, 32], strides = [1, 1]} : vector<14x32xf32> to vector<1x32xf32>
    %c0_145 = arith.constant 0 : index
    %c1_146 = arith.constant 1 : index
    %c0_147 = arith.constant 0 : index
    %201 = vector.load %arg21[%c0_145, %c1_146, %c0_147] : memref<2x16x32xf32, #tpu.memory_space<vmem>>, vector<1x1x32xf32>
    %202 = vector.shape_cast %201 : vector<1x1x32xf32> to vector<1x32xf32>
    %203 = vector.shape_cast %200 : vector<1x32xf32> to vector<1x1x32xf32>
    tpu.vector_store %arg21[%c0_145, %c1_146, %c0_147], %203 {strides = array<i32>} : memref<2x16x32xf32, #tpu.memory_space<vmem>>, vector<1x1x32xf32>,
    %c0_148 = arith.constant 0 : index
    %c0_149 = arith.constant 0 : index
    %c0_150 = arith.constant 0 : index
    %204 = vector.load %arg21[%c0_148, %c0_149, %c0_150] : memref<2x16x32xf32, #tpu.memory_space<vmem>>, vector<1x14x32xf32>
    %205 = vector.shape_cast %204 : vector<1x14x32xf32> to vector<14x32xf32>
    %c0_151 = arith.constant 0 : index
    %c0_152 = arith.constant 0 : index
    %c0_153 = arith.constant 0 : index
    %206 = vector.load %arg10[%c0_151, %c0_152, %c0_153] : memref<3x32x32xf32, #tpu.memory_space<vmem>>, vector<1x32x32xf32>
    %207 = vector.shape_cast %206 : vector<1x32x32xf32> to vector<32x32xf32>
    %cst_154 = arith.constant dense<0.000000e+00> : vector<14x32xf32>
    %208 = tpu.matmul %205, %207, %cst_154 {dimension_numbers = #tpu.dot_dimension_numbers<[1], [0], [0], [1], [0, 0, 1, 1], [], []>} : vector<14x32xf32>, vector<32x32xf32>, vector<14x32xf32> -> vector<14x32xf32>
    %c0_155 = arith.constant 0 : index
    %c1_156 = arith.constant 1 : index
    %c0_157 = arith.constant 0 : index
    %209 = vector.load %arg21[%c0_155, %c1_156, %c0_157] : memref<2x16x32xf32, #tpu.memory_space<vmem>>, vector<1x14x32xf32>
    %210 = vector.shape_cast %209 : vector<1x14x32xf32> to vector<14x32xf32>
    %c1_158 = arith.constant 1 : index
    %c0_159 = arith.constant 0 : index
    %c0_160 = arith.constant 0 : index
    %211 = vector.load %arg10[%c1_158, %c0_159, %c0_160] : memref<3x32x32xf32, #tpu.memory_space<vmem>>, vector<1x32x32xf32>
    %212 = vector.shape_cast %211 : vector<1x32x32xf32> to vector<32x32xf32>
    %cst_161 = arith.constant dense<0.000000e+00> : vector<14x32xf32>
    %213 = tpu.matmul %210, %212, %cst_161 {dimension_numbers = #tpu.dot_dimension_numbers<[1], [0], [0], [1], [0, 0, 1, 1], [], []>} : vector<14x32xf32>, vector<32x32xf32>, vector<14x32xf32> -> vector<14x32xf32>
    %214 = arith.addf %208, %213 : vector<14x32xf32>
    %c0_162 = arith.constant 0 : index
    %c2_163 = arith.constant 2 : index
    %c0_164 = arith.constant 0 : index
    %215 = vector.load %arg21[%c0_162, %c2_163, %c0_164] : memref<2x16x32xf32, #tpu.memory_space<vmem>>, vector<1x14x32xf32>
    %216 = vector.shape_cast %215 : vector<1x14x32xf32> to vector<14x32xf32>
    %c2_165 = arith.constant 2 : index
    %c0_166 = arith.constant 0 : index
    %c0_167 = arith.constant 0 : index
    %217 = vector.load %arg10[%c2_165, %c0_166, %c0_167] : memref<3x32x32xf32, #tpu.memory_space<vmem>>, vector<1x32x32xf32>
    %218 = vector.shape_cast %217 : vector<1x32x32xf32> to vector<32x32xf32>
    %cst_168 = arith.constant dense<0.000000e+00> : vector<14x32xf32>
    %219 = tpu.matmul %216, %218, %cst_168 {dimension_numbers = #tpu.dot_dimension_numbers<[1], [0], [0], [1], [0, 0, 1, 1], [], []>} : vector<14x32xf32>, vector<32x32xf32>, vector<14x32xf32> -> vector<14x32xf32>
    %220 = arith.addf %214, %219 : vector<14x32xf32>
    %221 = vector.broadcast %20 : vector<1x32xf32> to vector<14x32xf32>
    %222 = arith.addf %220, %221 : vector<14x32xf32>
    %223 = vector.shape_cast %222 : vector<14x32xf32> to vector<1x14x32xf32>
    %cst_169 = arith.constant dense<0.000000e+00> : vector<1xf32>
    %224 = vector.multi_reduction <add>, %223, %cst_169 [1, 2] : vector<1x14x32xf32> to vector<1xf32>
    %225 = vector.shape_cast %224 : vector<1xf32> to vector<1x1x1xf32>
    %226 = vector.extract %225[0, 0, 0] : f32 from vector<1x1x1xf32>
    %227 = arith.mulf %222, %222 : vector<14x32xf32>
    %228 = vector.shape_cast %227 : vector<14x32xf32> to vector<1x14x32xf32>
    %cst_170 = arith.constant dense<0.000000e+00> : vector<1xf32>
    %229 = vector.multi_reduction <add>, %228, %cst_170 [1, 2] : vector<1x14x32xf32> to vector<1xf32>
    %230 = vector.shape_cast %229 : vector<1xf32> to vector<1x1x1xf32>
    %231 = vector.extract %230[0, 0, 0] : f32 from vector<1x1x1xf32>
    %cst_171 = arith.constant 0.00223214296 : f32
    %232 = arith.mulf %226, %cst_171 : f32
    %cst_172 = arith.constant 0.00223214296 : f32
    %233 = arith.mulf %231, %cst_172 : f32
    %234 = arith.mulf %232, %232 : f32
    %235 = arith.subf %233, %234 : f32
    %cst_173 = arith.constant 9.99999974E-6 : f32
    %236 = arith.addf %235, %cst_173 : f32
    %237 = math.rsqrt %236 : f32
    %238 = vector.broadcast %237 : f32 to vector<1x32xf32>
    %239 = arith.mulf %21, %238 : vector<1x32xf32>
    %240 = vector.broadcast %232 : f32 to vector<1x32xf32>
    %241 = arith.mulf %240, %239 : vector<1x32xf32>
    %242 = arith.subf %22, %241 : vector<1x32xf32>
    %243 = vector.broadcast %239 : vector<1x32xf32> to vector<14x32xf32>
    %244 = arith.mulf %222, %243 : vector<14x32xf32>
    %245 = vector.broadcast %242 : vector<1x32xf32> to vector<14x32xf32>
    %246 = arith.addf %244, %245 : vector<14x32xf32>
    %cst_174 = arith.constant 0.000000e+00 : f32
    %247 = vector.broadcast %cst_174 : f32 to vector<14x32xf32>
    %248 = arith.maximumf %246, %247 : vector<14x32xf32>
    %c0_175 = arith.constant 0 : index
    %c2_176 = arith.constant 2 : index
    %c0_177 = arith.constant 0 : index
    %249 = vector.load %arg22[%c0_175, %c2_176, %c0_177] : memref<2x16x32xf32, #tpu.memory_space<vmem>>, vector<1x14x32xf32>
    %250 = vector.shape_cast %249 : vector<1x14x32xf32> to vector<14x32xf32>
    %251 = vector.shape_cast %248 : vector<14x32xf32> to vector<1x14x32xf32>
    tpu.vector_store %arg22[%c0_175, %c2_176, %c0_177], %251 {strides = array<i32>} : memref<2x16x32xf32, #tpu.memory_space<vmem>>, vector<1x14x32xf32>,
    %252 = vector.extract_strided_slice %248 {offsets = [0, 0], sizes = [1, 32], strides = [1, 1]} : vector<14x32xf32> to vector<1x32xf32>
    %c0_178 = arith.constant 0 : index
    %c0_179 = arith.constant 0 : index
    %c0_180 = arith.constant 0 : index
    %253 = vector.load %arg22[%c0_178, %c0_179, %c0_180] : memref<2x16x32xf32, #tpu.memory_space<vmem>>, vector<1x1x32xf32>
    %254 = vector.shape_cast %253 : vector<1x1x32xf32> to vector<1x32xf32>
    %255 = vector.shape_cast %252 : vector<1x32xf32> to vector<1x1x32xf32>
    tpu.vector_store %arg22[%c0_178, %c0_179, %c0_180], %255 {strides = array<i32>} : memref<2x16x32xf32, #tpu.memory_space<vmem>>, vector<1x1x32xf32>,
    %256 = vector.extract_strided_slice %248 {offsets = [0, 0], sizes = [1, 32], strides = [1, 1]} : vector<14x32xf32> to vector<1x32xf32>
    %c0_181 = arith.constant 0 : index
    %c1_182 = arith.constant 1 : index
    %c0_183 = arith.constant 0 : index
    %257 = vector.load %arg22[%c0_181, %c1_182, %c0_183] : memref<2x16x32xf32, #tpu.memory_space<vmem>>, vector<1x1x32xf32>
    %258 = vector.shape_cast %257 : vector<1x1x32xf32> to vector<1x32xf32>
    %259 = vector.shape_cast %256 : vector<1x32xf32> to vector<1x1x32xf32>
    tpu.vector_store %arg22[%c0_181, %c1_182, %c0_183], %259 {strides = array<i32>} : memref<2x16x32xf32, #tpu.memory_space<vmem>>, vector<1x1x32xf32>,
    %c0_184 = arith.constant 0 : index
    %c0_185 = arith.constant 0 : index
    %c0_186 = arith.constant 0 : index
    %260 = vector.load %arg22[%c0_184, %c0_185, %c0_186] : memref<2x16x32xf32, #tpu.memory_space<vmem>>, vector<1x14x32xf32>
    %261 = vector.shape_cast %260 : vector<1x14x32xf32> to vector<14x32xf32>
    %c0_187 = arith.constant 0 : index
    %c0_188 = arith.constant 0 : index
    %c0_189 = arith.constant 0 : index
    %262 = vector.load %arg14[%c0_187, %c0_188, %c0_189] : memref<3x32x32xf32, #tpu.memory_space<vmem>>, vector<1x32x32xf32>
    %263 = vector.shape_cast %262 : vector<1x32x32xf32> to vector<32x32xf32>
    %cst_190 = arith.constant dense<0.000000e+00> : vector<14x32xf32>
    %264 = tpu.matmul %261, %263, %cst_190 {dimension_numbers = #tpu.dot_dimension_numbers<[1], [0], [0], [1], [0, 0, 1, 1], [], []>} : vector<14x32xf32>, vector<32x32xf32>, vector<14x32xf32> -> vector<14x32xf32>
    %c0_191 = arith.constant 0 : index
    %c1_192 = arith.constant 1 : index
    %c0_193 = arith.constant 0 : index
    %265 = vector.load %arg22[%c0_191, %c1_192, %c0_193] : memref<2x16x32xf32, #tpu.memory_space<vmem>>, vector<1x14x32xf32>
    %266 = vector.shape_cast %265 : vector<1x14x32xf32> to vector<14x32xf32>
    %c1_194 = arith.constant 1 : index
    %c0_195 = arith.constant 0 : index
    %c0_196 = arith.constant 0 : index
    %267 = vector.load %arg14[%c1_194, %c0_195, %c0_196] : memref<3x32x32xf32, #tpu.memory_space<vmem>>, vector<1x32x32xf32>
    %268 = vector.shape_cast %267 : vector<1x32x32xf32> to vector<32x32xf32>
    %cst_197 = arith.constant dense<0.000000e+00> : vector<14x32xf32>
    %269 = tpu.matmul %266, %268, %cst_197 {dimension_numbers = #tpu.dot_dimension_numbers<[1], [0], [0], [1], [0, 0, 1, 1], [], []>} : vector<14x32xf32>, vector<32x32xf32>, vector<14x32xf32> -> vector<14x32xf32>
    %270 = arith.addf %264, %269 : vector<14x32xf32>
    %c0_198 = arith.constant 0 : index
    %c2_199 = arith.constant 2 : index
    %c0_200 = arith.constant 0 : index
    %271 = vector.load %arg22[%c0_198, %c2_199, %c0_200] : memref<2x16x32xf32, #tpu.memory_space<vmem>>, vector<1x14x32xf32>
    %272 = vector.shape_cast %271 : vector<1x14x32xf32> to vector<14x32xf32>
    %c2_201 = arith.constant 2 : index
    %c0_202 = arith.constant 0 : index
    %c0_203 = arith.constant 0 : index
    %273 = vector.load %arg14[%c2_201, %c0_202, %c0_203] : memref<3x32x32xf32, #tpu.memory_space<vmem>>, vector<1x32x32xf32>
    %274 = vector.shape_cast %273 : vector<1x32x32xf32> to vector<32x32xf32>
    %cst_204 = arith.constant dense<0.000000e+00> : vector<14x32xf32>
    %275 = tpu.matmul %272, %274, %cst_204 {dimension_numbers = #tpu.dot_dimension_numbers<[1], [0], [0], [1], [0, 0, 1, 1], [], []>} : vector<14x32xf32>, vector<32x32xf32>, vector<14x32xf32> -> vector<14x32xf32>
    %276 = arith.addf %270, %275 : vector<14x32xf32>
    %277 = vector.broadcast %23 : vector<1x32xf32> to vector<14x32xf32>
    %278 = arith.addf %276, %277 : vector<14x32xf32>
    %279 = vector.shape_cast %278 : vector<14x32xf32> to vector<1x14x32xf32>
    %cst_205 = arith.constant dense<0.000000e+00> : vector<1xf32>
    %280 = vector.multi_reduction <add>, %279, %cst_205 [1, 2] : vector<1x14x32xf32> to vector<1xf32>
    %281 = vector.shape_cast %280 : vector<1xf32> to vector<1x1x1xf32>
    %282 = vector.extract %281[0, 0, 0] : f32 from vector<1x1x1xf32>
    %283 = arith.mulf %278, %278 : vector<14x32xf32>
    %284 = vector.shape_cast %283 : vector<14x32xf32> to vector<1x14x32xf32>
    %cst_206 = arith.constant dense<0.000000e+00> : vector<1xf32>
    %285 = vector.multi_reduction <add>, %284, %cst_206 [1, 2] : vector<1x14x32xf32> to vector<1xf32>
    %286 = vector.shape_cast %285 : vector<1xf32> to vector<1x1x1xf32>
    %287 = vector.extract %286[0, 0, 0] : f32 from vector<1x1x1xf32>
    %cst_207 = arith.constant 0.00223214296 : f32
    %288 = arith.mulf %282, %cst_207 : f32
    %cst_208 = arith.constant 0.00223214296 : f32
    %289 = arith.mulf %287, %cst_208 : f32
    %290 = arith.mulf %288, %288 : f32
    %291 = arith.subf %289, %290 : f32
    %cst_209 = arith.constant 9.99999974E-6 : f32
    %292 = arith.addf %291, %cst_209 : f32
    %293 = math.rsqrt %292 : f32
    %294 = vector.broadcast %293 : f32 to vector<1x32xf32>
    %295 = arith.mulf %24, %294 : vector<1x32xf32>
    %296 = vector.broadcast %288 : f32 to vector<1x32xf32>
    %297 = arith.mulf %296, %295 : vector<1x32xf32>
    %298 = arith.subf %25, %297 : vector<1x32xf32>
    %299 = vector.broadcast %295 : vector<1x32xf32> to vector<14x32xf32>
    %300 = arith.mulf %278, %299 : vector<14x32xf32>
    %301 = vector.broadcast %298 : vector<1x32xf32> to vector<14x32xf32>
    %302 = arith.addf %300, %301 : vector<14x32xf32>
    %cst_210 = arith.constant 0.000000e+00 : f32
    %303 = vector.broadcast %cst_210 : f32 to vector<14x32xf32>
    %304 = arith.maximumf %302, %303 : vector<14x32xf32>
    %c0_211 = arith.constant 0 : index
    %c0_212 = arith.constant 0 : index
    %c0_213 = arith.constant 0 : index
    %305 = vector.load %arg18[%c0_211, %c0_212, %c0_213] : memref<2x14x32xf32, #tpu.memory_space<vmem>>, vector<1x14x32xf32>
    %306 = vector.shape_cast %305 : vector<1x14x32xf32> to vector<14x32xf32>
    %307 = vector.shape_cast %304 : vector<14x32xf32> to vector<1x14x32xf32>
    tpu.vector_store %arg18[%c0_211, %c0_212, %c0_213], %307 {strides = array<i32>} : memref<2x14x32xf32, #tpu.memory_space<vmem>>, vector<1x14x32xf32>,
    %308 = vector.shape_cast %304 : vector<14x32xf32> to vector<1x14x32xf32>
    %cst_214 = arith.constant dense<0.000000e+00> : vector<1xf32>
    %309 = vector.multi_reduction <add>, %308, %cst_214 [1, 2] : vector<1x14x32xf32> to vector<1xf32>
    %310 = vector.shape_cast %309 : vector<1xf32> to vector<1x1x1xf32>
    %311 = vector.extract %310[0, 0, 0] : f32 from vector<1x1x1xf32>
    %cst_215 = arith.constant 0.000000e+00 : f32
    %312 = arith.addf %cst_215, %311 : f32
    %313 = arith.mulf %304, %304 : vector<14x32xf32>
    %314 = vector.shape_cast %313 : vector<14x32xf32> to vector<1x14x32xf32>
    %cst_216 = arith.constant dense<0.000000e+00> : vector<1xf32>
    %315 = vector.multi_reduction <add>, %314, %cst_216 [1, 2] : vector<1x14x32xf32> to vector<1xf32>
    %316 = vector.shape_cast %315 : vector<1xf32> to vector<1x1x1xf32>
    %317 = vector.extract %316[0, 0, 0] : f32 from vector<1x1x1xf32>
    %cst_217 = arith.constant 0.000000e+00 : f32
    %318 = arith.addf %cst_217, %317 : f32
    %c1_218 = arith.constant 1 : index
    %c0_219 = arith.constant 0 : index
    %c0_220 = arith.constant 0 : index
    %319 = vector.load %arg0[%c1_218, %c0_219, %c0_220] : memref<2x128x5xf32, #tpu.memory_space<vmem>>, vector<1x127x5xf32>
    %320 = vector.shape_cast %319 : vector<1x127x5xf32> to vector<127x5xf32>
    %c0_221 = arith.constant 0 : index
    %c0_222 = arith.constant 0 : index
    %c0_223 = arith.constant 0 : index
    %321 = vector.load %arg1[%c0_221, %c0_222, %c0_223] : memref<2x5x32xf32, #tpu.memory_space<vmem>>, vector<1x5x32xf32>
    %322 = vector.shape_cast %321 : vector<1x5x32xf32> to vector<5x32xf32>
    %cst_224 = arith.constant dense<0.000000e+00> : vector<127x32xf32>
    %323 = tpu.matmul %320, %322, %cst_224 {dimension_numbers = #tpu.dot_dimension_numbers<[1], [0], [0], [1], [0, 0, 1, 1], [], []>} : vector<127x5xf32>, vector<5x32xf32>, vector<127x32xf32> -> vector<127x32xf32>
    %c1_225 = arith.constant 1 : index
    %c1_226 = arith.constant 1 : index
    %c0_227 = arith.constant 0 : index
    %324 = vector.load %arg0[%c1_225, %c1_226, %c0_227] : memref<2x128x5xf32, #tpu.memory_space<vmem>>, vector<1x127x5xf32>
    %325 = vector.shape_cast %324 : vector<1x127x5xf32> to vector<127x5xf32>
    %c1_228 = arith.constant 1 : index
    %c0_229 = arith.constant 0 : index
    %c0_230 = arith.constant 0 : index
    %326 = vector.load %arg1[%c1_228, %c0_229, %c0_230] : memref<2x5x32xf32, #tpu.memory_space<vmem>>, vector<1x5x32xf32>
    %327 = vector.shape_cast %326 : vector<1x5x32xf32> to vector<5x32xf32>
    %cst_231 = arith.constant dense<0.000000e+00> : vector<127x32xf32>
    %328 = tpu.matmul %325, %327, %cst_231 {dimension_numbers = #tpu.dot_dimension_numbers<[1], [0], [0], [1], [0, 0, 1, 1], [], []>} : vector<127x5xf32>, vector<5x32xf32>, vector<127x32xf32> -> vector<127x32xf32>
    %329 = arith.addf %323, %328 : vector<127x32xf32>
    %330 = vector.shape_cast %329 : vector<127x32xf32> to vector<1x127x32xf32>
    %cst_232 = arith.constant dense<0.000000e+00> : vector<1xf32>
    %331 = vector.multi_reduction <add>, %330, %cst_232 [1, 2] : vector<1x127x32xf32> to vector<1xf32>
    %332 = vector.shape_cast %331 : vector<1xf32> to vector<1x1x1xf32>
    %333 = vector.extract %332[0, 0, 0] : f32 from vector<1x1x1xf32>
    %334 = arith.mulf %329, %329 : vector<127x32xf32>
    %335 = vector.shape_cast %334 : vector<127x32xf32> to vector<1x127x32xf32>
    %cst_233 = arith.constant dense<0.000000e+00> : vector<1xf32>
    %336 = vector.multi_reduction <add>, %335, %cst_233 [1, 2] : vector<1x127x32xf32> to vector<1xf32>
    %337 = vector.shape_cast %336 : vector<1xf32> to vector<1x1x1xf32>
    %338 = vector.extract %337[0, 0, 0] : f32 from vector<1x1x1xf32>
    %cst_234 = arith.constant 2.460630e-04 : f32
    %339 = arith.mulf %333, %cst_234 : f32
    %cst_235 = arith.constant 2.460630e-04 : f32
    %340 = arith.mulf %338, %cst_235 : f32
    %341 = arith.mulf %339, %339 : f32
    %342 = arith.subf %340, %341 : f32
    %cst_236 = arith.constant 9.99999974E-6 : f32
    %343 = arith.addf %342, %cst_236 : f32
    %344 = math.rsqrt %343 : f32
    %345 = vector.broadcast %344 : f32 to vector<1x32xf32>
    %346 = arith.mulf %14, %345 : vector<1x32xf32>
    %347 = vector.broadcast %339 : f32 to vector<1x32xf32>
    %348 = arith.mulf %347, %346 : vector<1x32xf32>
    %349 = arith.subf %15, %348 : vector<1x32xf32>
    %350 = vector.broadcast %346 : vector<1x32xf32> to vector<127x32xf32>
    %351 = arith.mulf %329, %350 : vector<127x32xf32>
    %352 = vector.broadcast %349 : vector<1x32xf32> to vector<127x32xf32>
    %353 = arith.addf %351, %352 : vector<127x32xf32>
    %cst_237 = arith.constant 0.000000e+00 : f32
    %354 = vector.broadcast %cst_237 : f32 to vector<127x32xf32>
    %355 = arith.maximumf %353, %354 : vector<127x32xf32>
    %c1_238 = arith.constant 1 : index
    %c0_239 = arith.constant 0 : index
    %c0_240 = arith.constant 0 : index
    %356 = vector.load %arg19[%c1_238, %c0_239, %c0_240] : memref<2x127x32xf32, #tpu.memory_space<vmem>>, vector<1x127x32xf32>
    %357 = vector.shape_cast %356 : vector<1x127x32xf32> to vector<127x32xf32>
    %358 = vector.shape_cast %355 : vector<127x32xf32> to vector<1x127x32xf32>
    tpu.vector_store %arg19[%c1_238, %c0_239, %c0_240], %358 {strides = array<i32>} : memref<2x127x32xf32, #tpu.memory_space<vmem>>, vector<1x127x32xf32>,
    %c1_241 = arith.constant 1 : index
    %c0_242 = arith.constant 0 : index
    %c0_243 = arith.constant 0 : index
    %359 = vector.load %arg19[%c1_241, %c0_242, %c0_243] : memref<2x127x32xf32, #tpu.memory_space<vmem>>, vector<1x120x32xf32>
    %360 = vector.shape_cast %359 : vector<1x120x32xf32> to vector<120x32xf32>
    %c0_244 = arith.constant 0 : index
    %c0_245 = arith.constant 0 : index
    %c0_246 = arith.constant 0 : index
    %361 = vector.load %arg4[%c0_244, %c0_245, %c0_246] : memref<8x32x32xf32, #tpu.memory_space<vmem>>, vector<1x32x32xf32>
    %362 = vector.shape_cast %361 : vector<1x32x32xf32> to vector<32x32xf32>
    %cst_247 = arith.constant dense<0.000000e+00> : vector<120x32xf32>
    %363 = tpu.matmul %360, %362, %cst_247 {dimension_numbers = #tpu.dot_dimension_numbers<[1], [0], [0], [1], [0, 0, 1, 1], [], []>} : vector<120x32xf32>, vector<32x32xf32>, vector<120x32xf32> -> vector<120x32xf32>
    %c1_248 = arith.constant 1 : index
    %c1_249 = arith.constant 1 : index
    %c0_250 = arith.constant 0 : index
    %364 = vector.load %arg19[%c1_248, %c1_249, %c0_250] : memref<2x127x32xf32, #tpu.memory_space<vmem>>, vector<1x120x32xf32>
    %365 = vector.shape_cast %364 : vector<1x120x32xf32> to vector<120x32xf32>
    %c1_251 = arith.constant 1 : index
    %c0_252 = arith.constant 0 : index
    %c0_253 = arith.constant 0 : index
    %366 = vector.load %arg4[%c1_251, %c0_252, %c0_253] : memref<8x32x32xf32, #tpu.memory_space<vmem>>, vector<1x32x32xf32>
    %367 = vector.shape_cast %366 : vector<1x32x32xf32> to vector<32x32xf32>
    %cst_254 = arith.constant dense<0.000000e+00> : vector<120x32xf32>
    %368 = tpu.matmul %365, %367, %cst_254 {dimension_numbers = #tpu.dot_dimension_numbers<[1], [0], [0], [1], [0, 0, 1, 1], [], []>} : vector<120x32xf32>, vector<32x32xf32>, vector<120x32xf32> -> vector<120x32xf32>
    %369 = arith.addf %363, %368 : vector<120x32xf32>
    %c1_255 = arith.constant 1 : index
    %c2_256 = arith.constant 2 : index
    %c0_257 = arith.constant 0 : index
    %370 = vector.load %arg19[%c1_255, %c2_256, %c0_257] : memref<2x127x32xf32, #tpu.memory_space<vmem>>, vector<1x120x32xf32>
    %371 = vector.shape_cast %370 : vector<1x120x32xf32> to vector<120x32xf32>
    %c2_258 = arith.constant 2 : index
    %c0_259 = arith.constant 0 : index
    %c0_260 = arith.constant 0 : index
    %372 = vector.load %arg4[%c2_258, %c0_259, %c0_260] : memref<8x32x32xf32, #tpu.memory_space<vmem>>, vector<1x32x32xf32>
    %373 = vector.shape_cast %372 : vector<1x32x32xf32> to vector<32x32xf32>
    %cst_261 = arith.constant dense<0.000000e+00> : vector<120x32xf32>
    %374 = tpu.matmul %371, %373, %cst_261 {dimension_numbers = #tpu.dot_dimension_numbers<[1], [0], [0], [1], [0, 0, 1, 1], [], []>} : vector<120x32xf32>, vector<32x32xf32>, vector<120x32xf32> -> vector<120x32xf32>
    %375 = arith.addf %369, %374 : vector<120x32xf32>
    %c1_262 = arith.constant 1 : index
    %c3_263 = arith.constant 3 : index
    %c0_264 = arith.constant 0 : index
    %376 = vector.load %arg19[%c1_262, %c3_263, %c0_264] : memref<2x127x32xf32, #tpu.memory_space<vmem>>, vector<1x120x32xf32>
    %377 = vector.shape_cast %376 : vector<1x120x32xf32> to vector<120x32xf32>
    %c3_265 = arith.constant 3 : index
    %c0_266 = arith.constant 0 : index
    %c0_267 = arith.constant 0 : index
    %378 = vector.load %arg4[%c3_265, %c0_266, %c0_267] : memref<8x32x32xf32, #tpu.memory_space<vmem>>, vector<1x32x32xf32>
    %379 = vector.shape_cast %378 : vector<1x32x32xf32> to vector<32x32xf32>
    %cst_268 = arith.constant dense<0.000000e+00> : vector<120x32xf32>
    %380 = tpu.matmul %377, %379, %cst_268 {dimension_numbers = #tpu.dot_dimension_numbers<[1], [0], [0], [1], [0, 0, 1, 1], [], []>} : vector<120x32xf32>, vector<32x32xf32>, vector<120x32xf32> -> vector<120x32xf32>
    %381 = arith.addf %375, %380 : vector<120x32xf32>
    %c1_269 = arith.constant 1 : index
    %c4_270 = arith.constant 4 : index
    %c0_271 = arith.constant 0 : index
    %382 = vector.load %arg19[%c1_269, %c4_270, %c0_271] : memref<2x127x32xf32, #tpu.memory_space<vmem>>, vector<1x120x32xf32>
    %383 = vector.shape_cast %382 : vector<1x120x32xf32> to vector<120x32xf32>
    %c4_272 = arith.constant 4 : index
    %c0_273 = arith.constant 0 : index
    %c0_274 = arith.constant 0 : index
    %384 = vector.load %arg4[%c4_272, %c0_273, %c0_274] : memref<8x32x32xf32, #tpu.memory_space<vmem>>, vector<1x32x32xf32>
    %385 = vector.shape_cast %384 : vector<1x32x32xf32> to vector<32x32xf32>
    %cst_275 = arith.constant dense<0.000000e+00> : vector<120x32xf32>
    %386 = tpu.matmul %383, %385, %cst_275 {dimension_numbers = #tpu.dot_dimension_numbers<[1], [0], [0], [1], [0, 0, 1, 1], [], []>} : vector<120x32xf32>, vector<32x32xf32>, vector<120x32xf32> -> vector<120x32xf32>
    %387 = arith.addf %381, %386 : vector<120x32xf32>
    %c1_276 = arith.constant 1 : index
    %c5_277 = arith.constant 5 : index
    %c0_278 = arith.constant 0 : index
    %388 = vector.load %arg19[%c1_276, %c5_277, %c0_278] : memref<2x127x32xf32, #tpu.memory_space<vmem>>, vector<1x120x32xf32>
    %389 = vector.shape_cast %388 : vector<1x120x32xf32> to vector<120x32xf32>
    %c5_279 = arith.constant 5 : index
    %c0_280 = arith.constant 0 : index
    %c0_281 = arith.constant 0 : index
    %390 = vector.load %arg4[%c5_279, %c0_280, %c0_281] : memref<8x32x32xf32, #tpu.memory_space<vmem>>, vector<1x32x32xf32>
    %391 = vector.shape_cast %390 : vector<1x32x32xf32> to vector<32x32xf32>
    %cst_282 = arith.constant dense<0.000000e+00> : vector<120x32xf32>
    %392 = tpu.matmul %389, %391, %cst_282 {dimension_numbers = #tpu.dot_dimension_numbers<[1], [0], [0], [1], [0, 0, 1, 1], [], []>} : vector<120x32xf32>, vector<32x32xf32>, vector<120x32xf32> -> vector<120x32xf32>
    %393 = arith.addf %387, %392 : vector<120x32xf32>
    %c1_283 = arith.constant 1 : index
    %c6_284 = arith.constant 6 : index
    %c0_285 = arith.constant 0 : index
    %394 = vector.load %arg19[%c1_283, %c6_284, %c0_285] : memref<2x127x32xf32, #tpu.memory_space<vmem>>, vector<1x120x32xf32>
    %395 = vector.shape_cast %394 : vector<1x120x32xf32> to vector<120x32xf32>
    %c6_286 = arith.constant 6 : index
    %c0_287 = arith.constant 0 : index
    %c0_288 = arith.constant 0 : index
    %396 = vector.load %arg4[%c6_286, %c0_287, %c0_288] : memref<8x32x32xf32, #tpu.memory_space<vmem>>, vector<1x32x32xf32>
    %397 = vector.shape_cast %396 : vector<1x32x32xf32> to vector<32x32xf32>
    %cst_289 = arith.constant dense<0.000000e+00> : vector<120x32xf32>
    %398 = tpu.matmul %395, %397, %cst_289 {dimension_numbers = #tpu.dot_dimension_numbers<[1], [0], [0], [1], [0, 0, 1, 1], [], []>} : vector<120x32xf32>, vector<32x32xf32>, vector<120x32xf32> -> vector<120x32xf32>
    %399 = arith.addf %393, %398 : vector<120x32xf32>
    %c1_290 = arith.constant 1 : index
    %c7_291 = arith.constant 7 : index
    %c0_292 = arith.constant 0 : index
    %400 = vector.load %arg19[%c1_290, %c7_291, %c0_292] : memref<2x127x32xf32, #tpu.memory_space<vmem>>, vector<1x120x32xf32>
    %401 = vector.shape_cast %400 : vector<1x120x32xf32> to vector<120x32xf32>
    %c7_293 = arith.constant 7 : index
    %c0_294 = arith.constant 0 : index
    %c0_295 = arith.constant 0 : index
    %402 = vector.load %arg4[%c7_293, %c0_294, %c0_295] : memref<8x32x32xf32, #tpu.memory_space<vmem>>, vector<1x32x32xf32>
    %403 = vector.shape_cast %402 : vector<1x32x32xf32> to vector<32x32xf32>
    %cst_296 = arith.constant dense<0.000000e+00> : vector<120x32xf32>
    %404 = tpu.matmul %401, %403, %cst_296 {dimension_numbers = #tpu.dot_dimension_numbers<[1], [0], [0], [1], [0, 0, 1, 1], [], []>} : vector<120x32xf32>, vector<32x32xf32>, vector<120x32xf32> -> vector<120x32xf32>
    %405 = arith.addf %399, %404 : vector<120x32xf32>
    %cst_297 = arith.constant dense<0.000000e+00> : vector<30x32xf32>
    %406 = tpu.matmul %6, %405, %cst_297 {dimension_numbers = #tpu.dot_dimension_numbers<[1], [0], [0], [1], [0, 0, 1, 1], [], []>} : vector<30x120xf32>, vector<120x32xf32>, vector<30x32xf32> -> vector<30x32xf32>
    %407 = vector.shape_cast %406 : vector<30x32xf32> to vector<1x30x32xf32>
    %cst_298 = arith.constant dense<0.000000e+00> : vector<1xf32>
    %408 = vector.multi_reduction <add>, %407, %cst_298 [1, 2] : vector<1x30x32xf32> to vector<1xf32>
    %409 = vector.shape_cast %408 : vector<1xf32> to vector<1x1x1xf32>
    %410 = vector.extract %409[0, 0, 0] : f32 from vector<1x1x1xf32>
    %411 = arith.mulf %406, %406 : vector<30x32xf32>
    %412 = vector.shape_cast %411 : vector<30x32xf32> to vector<1x30x32xf32>
    %cst_299 = arith.constant dense<0.000000e+00> : vector<1xf32>
    %413 = vector.multi_reduction <add>, %412, %cst_299 [1, 2] : vector<1x30x32xf32> to vector<1xf32>
    %414 = vector.shape_cast %413 : vector<1xf32> to vector<1x1x1xf32>
    %415 = vector.extract %414[0, 0, 0] : f32 from vector<1x1x1xf32>
    %cst_300 = arith.constant 0.00104166672 : f32
    %416 = arith.mulf %410, %cst_300 : f32
    %cst_301 = arith.constant 0.00104166672 : f32
    %417 = arith.mulf %415, %cst_301 : f32
    %418 = arith.mulf %416, %416 : f32
    %419 = arith.subf %417, %418 : f32
    %cst_302 = arith.constant 9.99999974E-6 : f32
    %420 = arith.addf %419, %cst_302 : f32
    %421 = math.rsqrt %420 : f32
    %422 = vector.broadcast %421 : f32 to vector<1x32xf32>
    %423 = arith.mulf %16, %422 : vector<1x32xf32>
    %424 = vector.broadcast %416 : f32 to vector<1x32xf32>
    %425 = arith.mulf %424, %423 : vector<1x32xf32>
    %426 = arith.subf %17, %425 : vector<1x32xf32>
    %427 = vector.broadcast %423 : vector<1x32xf32> to vector<30x32xf32>
    %428 = arith.mulf %406, %427 : vector<30x32xf32>
    %429 = vector.broadcast %426 : vector<1x32xf32> to vector<30x32xf32>
    %430 = arith.addf %428, %429 : vector<30x32xf32>
    %cst_303 = arith.constant 0.000000e+00 : f32
    %431 = vector.broadcast %cst_303 : f32 to vector<30x32xf32>
    %432 = arith.maximumf %430, %431 : vector<30x32xf32>
    %c1_304 = arith.constant 1 : index
    %c0_305 = arith.constant 0 : index
    %c0_306 = arith.constant 0 : index
    %433 = vector.load %arg20[%c1_304, %c0_305, %c0_306] : memref<2x30x32xf32, #tpu.memory_space<vmem>>, vector<1x30x32xf32>
    %434 = vector.shape_cast %433 : vector<1x30x32xf32> to vector<30x32xf32>
    %435 = vector.shape_cast %432 : vector<30x32xf32> to vector<1x30x32xf32>
    tpu.vector_store %arg20[%c1_304, %c0_305, %c0_306], %435 {strides = array<i32>} : memref<2x30x32xf32, #tpu.memory_space<vmem>>, vector<1x30x32xf32>,
    %c1_307 = arith.constant 1 : index
    %c0_308 = arith.constant 0 : index
    %c0_309 = arith.constant 0 : index
    %436 = vector.load %arg20[%c1_307, %c0_308, %c0_309] : memref<2x30x32xf32, #tpu.memory_space<vmem>>, vector<1x27x32xf32>
    %437 = vector.shape_cast %436 : vector<1x27x32xf32> to vector<27x32xf32>
    %c0_310 = arith.constant 0 : index
    %c0_311 = arith.constant 0 : index
    %c0_312 = arith.constant 0 : index
    %438 = vector.load %arg7[%c0_310, %c0_311, %c0_312] : memref<4x32x32xf32, #tpu.memory_space<vmem>>, vector<1x32x32xf32>
    %439 = vector.shape_cast %438 : vector<1x32x32xf32> to vector<32x32xf32>
    %cst_313 = arith.constant dense<0.000000e+00> : vector<27x32xf32>
    %440 = tpu.matmul %437, %439, %cst_313 {dimension_numbers = #tpu.dot_dimension_numbers<[1], [0], [0], [1], [0, 0, 1, 1], [], []>} : vector<27x32xf32>, vector<32x32xf32>, vector<27x32xf32> -> vector<27x32xf32>
    %c1_314 = arith.constant 1 : index
    %c1_315 = arith.constant 1 : index
    %c0_316 = arith.constant 0 : index
    %441 = vector.load %arg20[%c1_314, %c1_315, %c0_316] : memref<2x30x32xf32, #tpu.memory_space<vmem>>, vector<1x27x32xf32>
    %442 = vector.shape_cast %441 : vector<1x27x32xf32> to vector<27x32xf32>
    %c1_317 = arith.constant 1 : index
    %c0_318 = arith.constant 0 : index
    %c0_319 = arith.constant 0 : index
    %443 = vector.load %arg7[%c1_317, %c0_318, %c0_319] : memref<4x32x32xf32, #tpu.memory_space<vmem>>, vector<1x32x32xf32>
    %444 = vector.shape_cast %443 : vector<1x32x32xf32> to vector<32x32xf32>
    %cst_320 = arith.constant dense<0.000000e+00> : vector<27x32xf32>
    %445 = tpu.matmul %442, %444, %cst_320 {dimension_numbers = #tpu.dot_dimension_numbers<[1], [0], [0], [1], [0, 0, 1, 1], [], []>} : vector<27x32xf32>, vector<32x32xf32>, vector<27x32xf32> -> vector<27x32xf32>
    %446 = arith.addf %440, %445 : vector<27x32xf32>
    %c1_321 = arith.constant 1 : index
    %c2_322 = arith.constant 2 : index
    %c0_323 = arith.constant 0 : index
    %447 = vector.load %arg20[%c1_321, %c2_322, %c0_323] : memref<2x30x32xf32, #tpu.memory_space<vmem>>, vector<1x27x32xf32>
    %448 = vector.shape_cast %447 : vector<1x27x32xf32> to vector<27x32xf32>
    %c2_324 = arith.constant 2 : index
    %c0_325 = arith.constant 0 : index
    %c0_326 = arith.constant 0 : index
    %449 = vector.load %arg7[%c2_324, %c0_325, %c0_326] : memref<4x32x32xf32, #tpu.memory_space<vmem>>, vector<1x32x32xf32>
    %450 = vector.shape_cast %449 : vector<1x32x32xf32> to vector<32x32xf32>
    %cst_327 = arith.constant dense<0.000000e+00> : vector<27x32xf32>
    %451 = tpu.matmul %448, %450, %cst_327 {dimension_numbers = #tpu.dot_dimension_numbers<[1], [0], [0], [1], [0, 0, 1, 1], [], []>} : vector<27x32xf32>, vector<32x32xf32>, vector<27x32xf32> -> vector<27x32xf32>
    %452 = arith.addf %446, %451 : vector<27x32xf32>
    %c1_328 = arith.constant 1 : index
    %c3_329 = arith.constant 3 : index
    %c0_330 = arith.constant 0 : index
    %453 = vector.load %arg20[%c1_328, %c3_329, %c0_330] : memref<2x30x32xf32, #tpu.memory_space<vmem>>, vector<1x27x32xf32>
    %454 = vector.shape_cast %453 : vector<1x27x32xf32> to vector<27x32xf32>
    %c3_331 = arith.constant 3 : index
    %c0_332 = arith.constant 0 : index
    %c0_333 = arith.constant 0 : index
    %455 = vector.load %arg7[%c3_331, %c0_332, %c0_333] : memref<4x32x32xf32, #tpu.memory_space<vmem>>, vector<1x32x32xf32>
    %456 = vector.shape_cast %455 : vector<1x32x32xf32> to vector<32x32xf32>
    %cst_334 = arith.constant dense<0.000000e+00> : vector<27x32xf32>
    %457 = tpu.matmul %454, %456, %cst_334 {dimension_numbers = #tpu.dot_dimension_numbers<[1], [0], [0], [1], [0, 0, 1, 1], [], []>} : vector<27x32xf32>, vector<32x32xf32>, vector<27x32xf32> -> vector<27x32xf32>
    %458 = arith.addf %452, %457 : vector<27x32xf32>
    %cst_335 = arith.constant dense<0.000000e+00> : vector<14x32xf32>
    %459 = tpu.matmul %13, %458, %cst_335 {dimension_numbers = #tpu.dot_dimension_numbers<[1], [0], [0], [1], [0, 0, 1, 1], [], []>} : vector<14x27xf32>, vector<27x32xf32>, vector<14x32xf32> -> vector<14x32xf32>
    %460 = vector.shape_cast %459 : vector<14x32xf32> to vector<1x14x32xf32>
    %cst_336 = arith.constant dense<0.000000e+00> : vector<1xf32>
    %461 = vector.multi_reduction <add>, %460, %cst_336 [1, 2] : vector<1x14x32xf32> to vector<1xf32>
    %462 = vector.shape_cast %461 : vector<1xf32> to vector<1x1x1xf32>
    %463 = vector.extract %462[0, 0, 0] : f32 from vector<1x1x1xf32>
    %464 = arith.mulf %459, %459 : vector<14x32xf32>
    %465 = vector.shape_cast %464 : vector<14x32xf32> to vector<1x14x32xf32>
    %cst_337 = arith.constant dense<0.000000e+00> : vector<1xf32>
    %466 = vector.multi_reduction <add>, %465, %cst_337 [1, 2] : vector<1x14x32xf32> to vector<1xf32>
    %467 = vector.shape_cast %466 : vector<1xf32> to vector<1x1x1xf32>
    %468 = vector.extract %467[0, 0, 0] : f32 from vector<1x1x1xf32>
    %cst_338 = arith.constant 0.00223214296 : f32
    %469 = arith.mulf %463, %cst_338 : f32
    %cst_339 = arith.constant 0.00223214296 : f32
    %470 = arith.mulf %468, %cst_339 : f32
    %471 = arith.mulf %469, %469 : f32
    %472 = arith.subf %470, %471 : f32
    %cst_340 = arith.constant 9.99999974E-6 : f32
    %473 = arith.addf %472, %cst_340 : f32
    %474 = math.rsqrt %473 : f32
    %475 = vector.broadcast %474 : f32 to vector<1x32xf32>
    %476 = arith.mulf %18, %475 : vector<1x32xf32>
    %477 = vector.broadcast %469 : f32 to vector<1x32xf32>
    %478 = arith.mulf %477, %476 : vector<1x32xf32>
    %479 = arith.subf %19, %478 : vector<1x32xf32>
    %480 = vector.broadcast %476 : vector<1x32xf32> to vector<14x32xf32>
    %481 = arith.mulf %459, %480 : vector<14x32xf32>
    %482 = vector.broadcast %479 : vector<1x32xf32> to vector<14x32xf32>
    %483 = arith.addf %481, %482 : vector<14x32xf32>
    %cst_341 = arith.constant 0.000000e+00 : f32
    %484 = vector.broadcast %cst_341 : f32 to vector<14x32xf32>
    %485 = arith.maximumf %483, %484 : vector<14x32xf32>
    %c1_342 = arith.constant 1 : index
    %c2_343 = arith.constant 2 : index
    %c0_344 = arith.constant 0 : index
    %486 = vector.load %arg21[%c1_342, %c2_343, %c0_344] : memref<2x16x32xf32, #tpu.memory_space<vmem>>, vector<1x14x32xf32>
    %487 = vector.shape_cast %486 : vector<1x14x32xf32> to vector<14x32xf32>
    %488 = vector.shape_cast %485 : vector<14x32xf32> to vector<1x14x32xf32>
    tpu.vector_store %arg21[%c1_342, %c2_343, %c0_344], %488 {strides = array<i32>} : memref<2x16x32xf32, #tpu.memory_space<vmem>>, vector<1x14x32xf32>,
    %489 = vector.extract_strided_slice %485 {offsets = [0, 0], sizes = [1, 32], strides = [1, 1]} : vector<14x32xf32> to vector<1x32xf32>
    %c1_345 = arith.constant 1 : index
    %c0_346 = arith.constant 0 : index
    %c0_347 = arith.constant 0 : index
    %490 = vector.load %arg21[%c1_345, %c0_346, %c0_347] : memref<2x16x32xf32, #tpu.memory_space<vmem>>, vector<1x1x32xf32>
    %491 = vector.shape_cast %490 : vector<1x1x32xf32> to vector<1x32xf32>
    %492 = vector.shape_cast %489 : vector<1x32xf32> to vector<1x1x32xf32>
    tpu.vector_store %arg21[%c1_345, %c0_346, %c0_347], %492 {strides = array<i32>} : memref<2x16x32xf32, #tpu.memory_space<vmem>>, vector<1x1x32xf32>,
    %493 = vector.extract_strided_slice %485 {offsets = [0, 0], sizes = [1, 32], strides = [1, 1]} : vector<14x32xf32> to vector<1x32xf32>
    %c1_348 = arith.constant 1 : index
    %c1_349 = arith.constant 1 : index
    %c0_350 = arith.constant 0 : index
    %494 = vector.load %arg21[%c1_348, %c1_349, %c0_350] : memref<2x16x32xf32, #tpu.memory_space<vmem>>, vector<1x1x32xf32>
    %495 = vector.shape_cast %494 : vector<1x1x32xf32> to vector<1x32xf32>
    %496 = vector.shape_cast %493 : vector<1x32xf32> to vector<1x1x32xf32>
    tpu.vector_store %arg21[%c1_348, %c1_349, %c0_350], %496 {strides = array<i32>} : memref<2x16x32xf32, #tpu.memory_space<vmem>>, vector<1x1x32xf32>,
    %c1_351 = arith.constant 1 : index
    %c0_352 = arith.constant 0 : index
    %c0_353 = arith.constant 0 : index
    %497 = vector.load %arg21[%c1_351, %c0_352, %c0_353] : memref<2x16x32xf32, #tpu.memory_space<vmem>>, vector<1x14x32xf32>
    %498 = vector.shape_cast %497 : vector<1x14x32xf32> to vector<14x32xf32>
    %c0_354 = arith.constant 0 : index
    %c0_355 = arith.constant 0 : index
    %c0_356 = arith.constant 0 : index
    %499 = vector.load %arg10[%c0_354, %c0_355, %c0_356] : memref<3x32x32xf32, #tpu.memory_space<vmem>>, vector<1x32x32xf32>
    %500 = vector.shape_cast %499 : vector<1x32x32xf32> to vector<32x32xf32>
    %cst_357 = arith.constant dense<0.000000e+00> : vector<14x32xf32>
    %501 = tpu.matmul %498, %500, %cst_357 {dimension_numbers = #tpu.dot_dimension_numbers<[1], [0], [0], [1], [0, 0, 1, 1], [], []>} : vector<14x32xf32>, vector<32x32xf32>, vector<14x32xf32> -> vector<14x32xf32>
    %c1_358 = arith.constant 1 : index
    %c1_359 = arith.constant 1 : index
    %c0_360 = arith.constant 0 : index
    %502 = vector.load %arg21[%c1_358, %c1_359, %c0_360] : memref<2x16x32xf32, #tpu.memory_space<vmem>>, vector<1x14x32xf32>
    %503 = vector.shape_cast %502 : vector<1x14x32xf32> to vector<14x32xf32>
    %c1_361 = arith.constant 1 : index
    %c0_362 = arith.constant 0 : index
    %c0_363 = arith.constant 0 : index
    %504 = vector.load %arg10[%c1_361, %c0_362, %c0_363] : memref<3x32x32xf32, #tpu.memory_space<vmem>>, vector<1x32x32xf32>
    %505 = vector.shape_cast %504 : vector<1x32x32xf32> to vector<32x32xf32>
    %cst_364 = arith.constant dense<0.000000e+00> : vector<14x32xf32>
    %506 = tpu.matmul %503, %505, %cst_364 {dimension_numbers = #tpu.dot_dimension_numbers<[1], [0], [0], [1], [0, 0, 1, 1], [], []>} : vector<14x32xf32>, vector<32x32xf32>, vector<14x32xf32> -> vector<14x32xf32>
    %507 = arith.addf %501, %506 : vector<14x32xf32>
    %c1_365 = arith.constant 1 : index
    %c2_366 = arith.constant 2 : index
    %c0_367 = arith.constant 0 : index
    %508 = vector.load %arg21[%c1_365, %c2_366, %c0_367] : memref<2x16x32xf32, #tpu.memory_space<vmem>>, vector<1x14x32xf32>
    %509 = vector.shape_cast %508 : vector<1x14x32xf32> to vector<14x32xf32>
    %c2_368 = arith.constant 2 : index
    %c0_369 = arith.constant 0 : index
    %c0_370 = arith.constant 0 : index
    %510 = vector.load %arg10[%c2_368, %c0_369, %c0_370] : memref<3x32x32xf32, #tpu.memory_space<vmem>>, vector<1x32x32xf32>
    %511 = vector.shape_cast %510 : vector<1x32x32xf32> to vector<32x32xf32>
    %cst_371 = arith.constant dense<0.000000e+00> : vector<14x32xf32>
    %512 = tpu.matmul %509, %511, %cst_371 {dimension_numbers = #tpu.dot_dimension_numbers<[1], [0], [0], [1], [0, 0, 1, 1], [], []>} : vector<14x32xf32>, vector<32x32xf32>, vector<14x32xf32> -> vector<14x32xf32>
    %513 = arith.addf %507, %512 : vector<14x32xf32>
    %514 = vector.broadcast %20 : vector<1x32xf32> to vector<14x32xf32>
    %515 = arith.addf %513, %514 : vector<14x32xf32>
    %516 = vector.shape_cast %515 : vector<14x32xf32> to vector<1x14x32xf32>
    %cst_372 = arith.constant dense<0.000000e+00> : vector<1xf32>
    %517 = vector.multi_reduction <add>, %516, %cst_372 [1, 2] : vector<1x14x32xf32> to vector<1xf32>
    %518 = vector.shape_cast %517 : vector<1xf32> to vector<1x1x1xf32>
    %519 = vector.extract %518[0, 0, 0] : f32 from vector<1x1x1xf32>
    %520 = arith.mulf %515, %515 : vector<14x32xf32>
    %521 = vector.shape_cast %520 : vector<14x32xf32> to vector<1x14x32xf32>
    %cst_373 = arith.constant dense<0.000000e+00> : vector<1xf32>
    %522 = vector.multi_reduction <add>, %521, %cst_373 [1, 2] : vector<1x14x32xf32> to vector<1xf32>
    %523 = vector.shape_cast %522 : vector<1xf32> to vector<1x1x1xf32>
    %524 = vector.extract %523[0, 0, 0] : f32 from vector<1x1x1xf32>
    %cst_374 = arith.constant 0.00223214296 : f32
    %525 = arith.mulf %519, %cst_374 : f32
    %cst_375 = arith.constant 0.00223214296 : f32
    %526 = arith.mulf %524, %cst_375 : f32
    %527 = arith.mulf %525, %525 : f32
    %528 = arith.subf %526, %527 : f32
    %cst_376 = arith.constant 9.99999974E-6 : f32
    %529 = arith.addf %528, %cst_376 : f32
    %530 = math.rsqrt %529 : f32
    %531 = vector.broadcast %530 : f32 to vector<1x32xf32>
    %532 = arith.mulf %21, %531 : vector<1x32xf32>
    %533 = vector.broadcast %525 : f32 to vector<1x32xf32>
    %534 = arith.mulf %533, %532 : vector<1x32xf32>
    %535 = arith.subf %22, %534 : vector<1x32xf32>
    %536 = vector.broadcast %532 : vector<1x32xf32> to vector<14x32xf32>
    %537 = arith.mulf %515, %536 : vector<14x32xf32>
    %538 = vector.broadcast %535 : vector<1x32xf32> to vector<14x32xf32>
    %539 = arith.addf %537, %538 : vector<14x32xf32>
    %cst_377 = arith.constant 0.000000e+00 : f32
    %540 = vector.broadcast %cst_377 : f32 to vector<14x32xf32>
    %541 = arith.maximumf %539, %540 : vector<14x32xf32>
    %c1_378 = arith.constant 1 : index
    %c2_379 = arith.constant 2 : index
    %c0_380 = arith.constant 0 : index
    %542 = vector.load %arg22[%c1_378, %c2_379, %c0_380] : memref<2x16x32xf32, #tpu.memory_space<vmem>>, vector<1x14x32xf32>
    %543 = vector.shape_cast %542 : vector<1x14x32xf32> to vector<14x32xf32>
    %544 = vector.shape_cast %541 : vector<14x32xf32> to vector<1x14x32xf32>
    tpu.vector_store %arg22[%c1_378, %c2_379, %c0_380], %544 {strides = array<i32>} : memref<2x16x32xf32, #tpu.memory_space<vmem>>, vector<1x14x32xf32>,
    %545 = vector.extract_strided_slice %541 {offsets = [0, 0], sizes = [1, 32], strides = [1, 1]} : vector<14x32xf32> to vector<1x32xf32>
    %c1_381 = arith.constant 1 : index
    %c0_382 = arith.constant 0 : index
    %c0_383 = arith.constant 0 : index
    %546 = vector.load %arg22[%c1_381, %c0_382, %c0_383] : memref<2x16x32xf32, #tpu.memory_space<vmem>>, vector<1x1x32xf32>
    %547 = vector.shape_cast %546 : vector<1x1x32xf32> to vector<1x32xf32>
    %548 = vector.shape_cast %545 : vector<1x32xf32> to vector<1x1x32xf32>
    tpu.vector_store %arg22[%c1_381, %c0_382, %c0_383], %548 {strides = array<i32>} : memref<2x16x32xf32, #tpu.memory_space<vmem>>, vector<1x1x32xf32>,
    %549 = vector.extract_strided_slice %541 {offsets = [0, 0], sizes = [1, 32], strides = [1, 1]} : vector<14x32xf32> to vector<1x32xf32>
    %c1_384 = arith.constant 1 : index
    %c1_385 = arith.constant 1 : index
    %c0_386 = arith.constant 0 : index
    %550 = vector.load %arg22[%c1_384, %c1_385, %c0_386] : memref<2x16x32xf32, #tpu.memory_space<vmem>>, vector<1x1x32xf32>
    %551 = vector.shape_cast %550 : vector<1x1x32xf32> to vector<1x32xf32>
    %552 = vector.shape_cast %549 : vector<1x32xf32> to vector<1x1x32xf32>
    tpu.vector_store %arg22[%c1_384, %c1_385, %c0_386], %552 {strides = array<i32>} : memref<2x16x32xf32, #tpu.memory_space<vmem>>, vector<1x1x32xf32>,
    %c1_387 = arith.constant 1 : index
    %c0_388 = arith.constant 0 : index
    %c0_389 = arith.constant 0 : index
    %553 = vector.load %arg22[%c1_387, %c0_388, %c0_389] : memref<2x16x32xf32, #tpu.memory_space<vmem>>, vector<1x14x32xf32>
    %554 = vector.shape_cast %553 : vector<1x14x32xf32> to vector<14x32xf32>
    %c0_390 = arith.constant 0 : index
    %c0_391 = arith.constant 0 : index
    %c0_392 = arith.constant 0 : index
    %555 = vector.load %arg14[%c0_390, %c0_391, %c0_392] : memref<3x32x32xf32, #tpu.memory_space<vmem>>, vector<1x32x32xf32>
    %556 = vector.shape_cast %555 : vector<1x32x32xf32> to vector<32x32xf32>
    %cst_393 = arith.constant dense<0.000000e+00> : vector<14x32xf32>
    %557 = tpu.matmul %554, %556, %cst_393 {dimension_numbers = #tpu.dot_dimension_numbers<[1], [0], [0], [1], [0, 0, 1, 1], [], []>} : vector<14x32xf32>, vector<32x32xf32>, vector<14x32xf32> -> vector<14x32xf32>
    %c1_394 = arith.constant 1 : index
    %c1_395 = arith.constant 1 : index
    %c0_396 = arith.constant 0 : index
    %558 = vector.load %arg22[%c1_394, %c1_395, %c0_396] : memref<2x16x32xf32, #tpu.memory_space<vmem>>, vector<1x14x32xf32>
    %559 = vector.shape_cast %558 : vector<1x14x32xf32> to vector<14x32xf32>
    %c1_397 = arith.constant 1 : index
    %c0_398 = arith.constant 0 : index
    %c0_399 = arith.constant 0 : index
    %560 = vector.load %arg14[%c1_397, %c0_398, %c0_399] : memref<3x32x32xf32, #tpu.memory_space<vmem>>, vector<1x32x32xf32>
    %561 = vector.shape_cast %560 : vector<1x32x32xf32> to vector<32x32xf32>
    %cst_400 = arith.constant dense<0.000000e+00> : vector<14x32xf32>
    %562 = tpu.matmul %559, %561, %cst_400 {dimension_numbers = #tpu.dot_dimension_numbers<[1], [0], [0], [1], [0, 0, 1, 1], [], []>} : vector<14x32xf32>, vector<32x32xf32>, vector<14x32xf32> -> vector<14x32xf32>
    %563 = arith.addf %557, %562 : vector<14x32xf32>
    %c1_401 = arith.constant 1 : index
    %c2_402 = arith.constant 2 : index
    %c0_403 = arith.constant 0 : index
    %564 = vector.load %arg22[%c1_401, %c2_402, %c0_403] : memref<2x16x32xf32, #tpu.memory_space<vmem>>, vector<1x14x32xf32>
    %565 = vector.shape_cast %564 : vector<1x14x32xf32> to vector<14x32xf32>
    %c2_404 = arith.constant 2 : index
    %c0_405 = arith.constant 0 : index
    %c0_406 = arith.constant 0 : index
    %566 = vector.load %arg14[%c2_404, %c0_405, %c0_406] : memref<3x32x32xf32, #tpu.memory_space<vmem>>, vector<1x32x32xf32>
    %567 = vector.shape_cast %566 : vector<1x32x32xf32> to vector<32x32xf32>
    %cst_407 = arith.constant dense<0.000000e+00> : vector<14x32xf32>
    %568 = tpu.matmul %565, %567, %cst_407 {dimension_numbers = #tpu.dot_dimension_numbers<[1], [0], [0], [1], [0, 0, 1, 1], [], []>} : vector<14x32xf32>, vector<32x32xf32>, vector<14x32xf32> -> vector<14x32xf32>
    %569 = arith.addf %563, %568 : vector<14x32xf32>
    %570 = vector.broadcast %23 : vector<1x32xf32> to vector<14x32xf32>
    %571 = arith.addf %569, %570 : vector<14x32xf32>
    %572 = vector.shape_cast %571 : vector<14x32xf32> to vector<1x14x32xf32>
    %cst_408 = arith.constant dense<0.000000e+00> : vector<1xf32>
    %573 = vector.multi_reduction <add>, %572, %cst_408 [1, 2] : vector<1x14x32xf32> to vector<1xf32>
    %574 = vector.shape_cast %573 : vector<1xf32> to vector<1x1x1xf32>
    %575 = vector.extract %574[0, 0, 0] : f32 from vector<1x1x1xf32>
    %576 = arith.mulf %571, %571 : vector<14x32xf32>
    %577 = vector.shape_cast %576 : vector<14x32xf32> to vector<1x14x32xf32>
    %cst_409 = arith.constant dense<0.000000e+00> : vector<1xf32>
    %578 = vector.multi_reduction <add>, %577, %cst_409 [1, 2] : vector<1x14x32xf32> to vector<1xf32>
    %579 = vector.shape_cast %578 : vector<1xf32> to vector<1x1x1xf32>
    %580 = vector.extract %579[0, 0, 0] : f32 from vector<1x1x1xf32>
    %cst_410 = arith.constant 0.00223214296 : f32
    %581 = arith.mulf %575, %cst_410 : f32
    %cst_411 = arith.constant 0.00223214296 : f32
    %582 = arith.mulf %580, %cst_411 : f32
    %583 = arith.mulf %581, %581 : f32
    %584 = arith.subf %582, %583 : f32
    %cst_412 = arith.constant 9.99999974E-6 : f32
    %585 = arith.addf %584, %cst_412 : f32
    %586 = math.rsqrt %585 : f32
    %587 = vector.broadcast %586 : f32 to vector<1x32xf32>
    %588 = arith.mulf %24, %587 : vector<1x32xf32>
    %589 = vector.broadcast %581 : f32 to vector<1x32xf32>
    %590 = arith.mulf %589, %588 : vector<1x32xf32>
    %591 = arith.subf %25, %590 : vector<1x32xf32>
    %592 = vector.broadcast %588 : vector<1x32xf32> to vector<14x32xf32>
    %593 = arith.mulf %571, %592 : vector<14x32xf32>
    %594 = vector.broadcast %591 : vector<1x32xf32> to vector<14x32xf32>
    %595 = arith.addf %593, %594 : vector<14x32xf32>
    %cst_413 = arith.constant 0.000000e+00 : f32
    %596 = vector.broadcast %cst_413 : f32 to vector<14x32xf32>
    %597 = arith.maximumf %595, %596 : vector<14x32xf32>
    %c1_414 = arith.constant 1 : index
    %c0_415 = arith.constant 0 : index
    %c0_416 = arith.constant 0 : index
    %598 = vector.load %arg18[%c1_414, %c0_415, %c0_416] : memref<2x14x32xf32, #tpu.memory_space<vmem>>, vector<1x14x32xf32>
    %599 = vector.shape_cast %598 : vector<1x14x32xf32> to vector<14x32xf32>
    %600 = vector.shape_cast %597 : vector<14x32xf32> to vector<1x14x32xf32>
    tpu.vector_store %arg18[%c1_414, %c0_415, %c0_416], %600 {strides = array<i32>} : memref<2x14x32xf32, #tpu.memory_space<vmem>>, vector<1x14x32xf32>,
    %601 = vector.shape_cast %597 : vector<14x32xf32> to vector<1x14x32xf32>
    %cst_417 = arith.constant dense<0.000000e+00> : vector<1xf32>
    %602 = vector.multi_reduction <add>, %601, %cst_417 [1, 2] : vector<1x14x32xf32> to vector<1xf32>
    %603 = vector.shape_cast %602 : vector<1xf32> to vector<1x1x1xf32>
    %604 = vector.extract %603[0, 0, 0] : f32 from vector<1x1x1xf32>
    %605 = arith.addf %312, %604 : f32
    %606 = arith.mulf %597, %597 : vector<14x32xf32>
    %607 = vector.shape_cast %606 : vector<14x32xf32> to vector<1x14x32xf32>
    %cst_418 = arith.constant dense<0.000000e+00> : vector<1xf32>
    %608 = vector.multi_reduction <add>, %607, %cst_418 [1, 2] : vector<1x14x32xf32> to vector<1xf32>
    %609 = vector.shape_cast %608 : vector<1xf32> to vector<1x1x1xf32>
    %610 = vector.extract %609[0, 0, 0] : f32 from vector<1x1x1xf32>
    %611 = arith.addf %318, %610 : f32
    %cst_419 = arith.constant 0.00111607148 : f32
    %612 = arith.mulf %605, %cst_419 : f32
    %cst_420 = arith.constant 0.00111607148 : f32
    %613 = arith.mulf %611, %cst_420 : f32
    %614 = arith.mulf %612, %612 : f32
    %615 = arith.subf %613, %614 : f32
    %cst_421 = arith.constant 9.99999974E-6 : f32
    %616 = arith.addf %615, %cst_421 : f32
    %617 = math.rsqrt %616 : f32
    %c0_422 = arith.constant 0 : index
    %c0_423 = arith.constant 0 : index
    %c0_424 = arith.constant 0 : index
    %618 = vector.load %arg18[%c0_422, %c0_423, %c0_424] : memref<2x14x32xf32, #tpu.memory_space<vmem>>, vector<2x14x32xf32>
    %619 = vector.broadcast %612 : f32 to vector<2x14x32xf32>
    %620 = arith.subf %618, %619 : vector<2x14x32xf32>
    %621 = vector.broadcast %617 : f32 to vector<2x14x32xf32>
    %622 = arith.mulf %620, %621 : vector<2x14x32xf32>
    %c0_425 = arith.constant 0 : index
    %c0_426 = arith.constant 0 : index
    %c0_427 = arith.constant 0 : index
    %623 = vector.load %arg18[%c0_425, %c0_426, %c0_427] : memref<2x14x32xf32, #tpu.memory_space<vmem>>, vector<2x14x32xf32>
    tpu.vector_store %arg18[%c0_425, %c0_426, %c0_427], %622 {strides = array<i32>} : memref<2x14x32xf32, #tpu.memory_space<vmem>>, vector<2x14x32xf32>,
    return
  }
}

</mosaic_0001>

<llo_original>
// kernel: fairseq_wav2vec1_forward.1
$region0: #{fairseq_wav2vec1_forward.1}
  #allocation0 [shape = 'u32[]', space=smem, size = 0x4, offset = 0x4, fixed_abs, tag = 'smem constant byte address 0x4 - core index']
  #allocation1 [shape = 'u32[72,128]{1,0:T(1,128)}', space=vmem, size = 0x9000, scoped, tag = 'internal scratch']
  #allocation2 [shape = 'f32[2,127,32]{2,1,0:T(8,128)}', space=vmem, size = 0x20000, scoped, tag = 'scratch operand']
  #allocation3 [shape = 'f32[2,30,32]{2,1,0:T(8,128)}', space=vmem, size = 0x8000, scoped, tag = 'scratch operand']
  #allocation4 [shape = 'f32[2,16,32]{2,1,0:T(8,128)}', space=vmem, size = 0x4000, scoped, tag = 'scratch operand']
  #allocation5 [shape = 'f32[2,16,32]{2,1,0:T(8,128)}', space=vmem, size = 0x4000, scoped, tag = 'scratch operand']
  %s0 = inlined_call_operand.vmem [shape: f32[2,128,5], index: 0, kind: input, shape index: {}]
  %s1 = inlined_call_operand.vmem [shape: f32[2,5,32], index: 1, kind: input, shape index: {}]
  %s2 = inlined_call_operand.vmem [shape: f32[1,32], index: 2, kind: input, shape index: {}]
  %s3 = inlined_call_operand.vmem [shape: f32[1,32], index: 3, kind: input, shape index: {}]
  %s4 = inlined_call_operand.vmem [shape: f32[8,32,32], index: 4, kind: input, shape index: {}]
  %s5 = inlined_call_operand.vmem [shape: f32[1,32], index: 5, kind: input, shape index: {}]
  %s6 = inlined_call_operand.vmem [shape: f32[1,32], index: 6, kind: input, shape index: {}]
  %s7 = inlined_call_operand.vmem [shape: f32[4,32,32], index: 7, kind: input, shape index: {}]
  %s8 = inlined_call_operand.vmem [shape: f32[1,32], index: 8, kind: input, shape index: {}]
  %s9 = inlined_call_operand.vmem [shape: f32[1,32], index: 9, kind: input, shape index: {}]
  %s10 = inlined_call_operand.vmem [shape: f32[3,32,32], index: 10, kind: input, shape index: {}]
  %s11 = inlined_call_operand.vmem [shape: f32[1,32], index: 11, kind: input, shape index: {}]
  %s12 = inlined_call_operand.vmem [shape: f32[1,32], index: 12, kind: input, shape index: {}]
  %s13 = inlined_call_operand.vmem [shape: f32[1,32], index: 13, kind: input, shape index: {}]
  %s14 = inlined_call_operand.vmem [shape: f32[3,32,32], index: 14, kind: input, shape index: {}]
  %s15 = inlined_call_operand.vmem [shape: f32[1,32], index: 15, kind: input, shape index: {}]
  %s16 = inlined_call_operand.vmem [shape: f32[1,32], index: 16, kind: input, shape index: {}]
  %s17 = inlined_call_operand.vmem [shape: f32[1,32], index: 17, kind: input, shape index: {}]
  %s18 = inlined_call_operand.vmem [shape: f32[2,14,32], index: 18, kind: output, shape index: {}]
  %s19 = sld [smem:[#allocation0]]
  $region82: #{fairseq_wav2vec1_forward.1} parent=0
    _
  %s21 = ssub.s32 1, %s19
  %s22 = scalar_select 0, %s21, %s19
  // Predicated region
  $region2: #{fairseq_wav2vec1_forward.1} parent=0 // pred_check
    _
  $region3: #{fairseq_wav2vec1_forward.1} parent=0 // pred_check_branch
    %24 = sbr.rel (0) target = $region5
  $region4: #{fairseq_wav2vec1_forward.1} parent=0 // pred_region
    _
  $region5: #{fairseq_wav2vec1_forward.1} parent=0 // pred_fallthru
    _
  // Predicated region
  $region6: #{fairseq_wav2vec1_forward.1} parent=0 // pred_check
    _
  $region7: #{fairseq_wav2vec1_forward.1} parent=0 // pred_check_branch
    %26 = sbr.rel (0) target = $region9
  $region8: #{fairseq_wav2vec1_forward.1} parent=0 // pred_region
    _
  $region9: #{fairseq_wav2vec1_forward.1} parent=0 // pred_fallthru
    _
  // Predicated region
  $region10: #{fairseq_wav2vec1_forward.1} parent=0 // pred_check
    _
  $region11: #{fairseq_wav2vec1_forward.1} parent=0 // pred_check_branch
    %28 = sbr.rel (0) target = $region13
  $region12: #{fairseq_wav2vec1_forward.1} parent=0 // pred_region
    _
  $region13: #{fairseq_wav2vec1_forward.1} parent=0 // pred_fallthru
    _
  // Predicated region
  $region14: #{fairseq_wav2vec1_forward.1} parent=0 // pred_check
    _
  $region15: #{fairseq_wav2vec1_forward.1} parent=0 // pred_check_branch
    %30 = sbr.rel (0) target = $region17
  $region16: #{fairseq_wav2vec1_forward.1} parent=0 // pred_region
    _
  $region17: #{fairseq_wav2vec1_forward.1} parent=0 // pred_fallthru
    _
  // Predicated region
  $region18: #{fairseq_wav2vec1_forward.1} parent=0 // pred_check
    _
  $region19: #{fairseq_wav2vec1_forward.1} parent=0 // pred_check_branch
    %32 = sbr.rel (0) target = $region21
  $region20: #{fairseq_wav2vec1_forward.1} parent=0 // pred_region
    _
  $region21: #{fairseq_wav2vec1_forward.1} parent=0 // pred_fallthru
    _
  // Predicated region
  $region22: #{fairseq_wav2vec1_forward.1} parent=0 // pred_check
    _
  $region23: #{fairseq_wav2vec1_forward.1} parent=0 // pred_check_branch
    %34 = sbr.rel (0) target = $region25
  $region24: #{fairseq_wav2vec1_forward.1} parent=0 // pred_region
    _
  $region25: #{fairseq_wav2vec1_forward.1} parent=0 // pred_fallthru
    _
  // Predicated region
  $region26: #{fairseq_wav2vec1_forward.1} parent=0 // pred_check
    _
  $region27: #{fairseq_wav2vec1_forward.1} parent=0 // pred_check_branch
    %36 = sbr.rel (0) target = $region29
  $region28: #{fairseq_wav2vec1_forward.1} parent=0 // pred_region
    _
  $region29: #{fairseq_wav2vec1_forward.1} parent=0 // pred_fallthru
    _
  // Predicated region
  $region30: #{fairseq_wav2vec1_forward.1} parent=0 // pred_check
    _
  $region31: #{fairseq_wav2vec1_forward.1} parent=0 // pred_check_branch
    %38 = sbr.rel (0) target = $region33
  $region32: #{fairseq_wav2vec1_forward.1} parent=0 // pred_region
    _
  $region33: #{fairseq_wav2vec1_forward.1} parent=0 // pred_fallthru
    _
  // Predicated region
  $region34: #{fairseq_wav2vec1_forward.1} parent=0 // pred_check
    _
  $region35: #{fairseq_wav2vec1_forward.1} parent=0 // pred_check_branch
    %40 = sbr.rel (0) target = $region37
  $region36: #{fairseq_wav2vec1_forward.1} parent=0 // pred_region
    _
  $region37: #{fairseq_wav2vec1_forward.1} parent=0 // pred_fallthru
    _
  // Predicated region
  $region38: #{fairseq_wav2vec1_forward.1} parent=0 // pred_check
    _
  $region39: #{fairseq_wav2vec1_forward.1} parent=0 // pred_check_branch
    %42 = sbr.rel (0) target = $region41
  $region40: #{fairseq_wav2vec1_forward.1} parent=0 // pred_region
    _
  $region41: #{fairseq_wav2vec1_forward.1} parent=0 // pred_fallthru
    _
  // Predicated region
  $region42: #{fairseq_wav2vec1_forward.1} parent=0 // pred_check
    _
  $region43: #{fairseq_wav2vec1_forward.1} parent=0 // pred_check_branch
    %44 = sbr.rel (0) target = $region45
  $region44: #{fairseq_wav2vec1_forward.1} parent=0 // pred_region
    _
  $region45: #{fairseq_wav2vec1_forward.1} parent=0 // pred_fallthru
    _
  // Predicated region
  $region46: #{fairseq_wav2vec1_forward.1} parent=0 // pred_check
    _
  $region47: #{fairseq_wav2vec1_forward.1} parent=0 // pred_check_branch
    %46 = sbr.rel (0) target = $region49
  $region48: #{fairseq_wav2vec1_forward.1} parent=0 // pred_region
    _
  $region49: #{fairseq_wav2vec1_forward.1} parent=0 // pred_fallthru
    _
  // Predicated region
  $region50: #{fairseq_wav2vec1_forward.1} parent=0 // pred_check
    _
  $region51: #{fairseq_wav2vec1_forward.1} parent=0 // pred_check_branch
    %48 = sbr.rel (0) target = $region53
  $region52: #{fairseq_wav2vec1_forward.1} parent=0 // pred_region
    _
  $region53: #{fairseq_wav2vec1_forward.1} parent=0 // pred_fallthru
    _
  // Predicated region
  $region54: #{fairseq_wav2vec1_forward.1} parent=0 // pred_check
    _
  $region55: #{fairseq_wav2vec1_forward.1} parent=0 // pred_check_branch
    %50 = sbr.rel (0) target = $region57
  $region56: #{fairseq_wav2vec1_forward.1} parent=0 // pred_region
    _
  $region57: #{fairseq_wav2vec1_forward.1} parent=0 // pred_fallthru
    _
  // Predicated region
  $region58: #{fairseq_wav2vec1_forward.1} parent=0 // pred_check
    _
  $region59: #{fairseq_wav2vec1_forward.1} parent=0 // pred_check_branch
    %52 = sbr.rel (0) target = $region61
  $region60: #{fairseq_wav2vec1_forward.1} parent=0 // pred_region
    _
  $region61: #{fairseq_wav2vec1_forward.1} parent=0 // pred_fallthru
    _
  // Predicated region
  $region62: #{fairseq_wav2vec1_forward.1} parent=0 // pred_check
    _
  $region63: #{fairseq_wav2vec1_forward.1} parent=0 // pred_check_branch
    %54 = sbr.rel (0) target = $region65
  $region64: #{fairseq_wav2vec1_forward.1} parent=0 // pred_region
    _
  $region65: #{fairseq_wav2vec1_forward.1} parent=0 // pred_fallthru
    _
  // Predicated region
  $region66: #{fairseq_wav2vec1_forward.1} parent=0 // pred_check
    _
  $region67: #{fairseq_wav2vec1_forward.1} parent=0 // pred_check_branch
    %56 = sbr.rel (0) target = $region69
  $region68: #{fairseq_wav2vec1_forward.1} parent=0 // pred_region
    _
  $region69: #{fairseq_wav2vec1_forward.1} parent=0 // pred_fallthru
    _
  // Predicated region
  $region70: #{fairseq_wav2vec1_forward.1} parent=0 // pred_check
    _
  $region71: #{fairseq_wav2vec1_forward.1} parent=0 // pred_check_branch
    %58 = sbr.rel (0) target = $region73
  $region72: #{fairseq_wav2vec1_forward.1} parent=0 // pred_region
    _
  $region73: #{fairseq_wav2vec1_forward.1} parent=0 // pred_fallthru
    _
  %v59 = vlaneseq
  %v60 = vshrl.u32 %v59, 7
  %v61 = vadd.s32 %v60, 8
  %v62 = vadd.s32 %v60, 16
  %v63 = vadd.s32 %v60, 24
  %v64 = vlaneseq
  %v65 = vand.u32 %v64, 127
  %v66 = vmul.u32 %v60, 4
  %v67 = vmul.u32 %v61, 4
  %v68 = vmul.u32 %v62, 4
  %v69 = vmul.u32 %v63, 4
  %vm70 = vcmp.eq.s32.totalorder %v65, %v66
  %vm71 = vcmp.eq.s32.totalorder %v65, %v67
  %vm72 = vcmp.eq.s32.totalorder %v65, %v68
  %vm73 = vcmp.eq.s32.totalorder %v65, %v69
  %v74 = vsel %vm70, 1, 0
  %v75 = vsel %vm71, 1, 0
  %v76 = vsel %vm72, 1, 0
  %v77 = vsel %vm73, 1, 0
  %v78 = vcvt.s32.f32 %v74
  %v79 = vcvt.s32.f32 %v75
  %v80 = vcvt.s32.f32 %v76
  %v81 = vcvt.s32.f32 %v77
  %v82 = vmul.u32 %v60, 2
  %v83 = vmul.u32 %v61, 2
  %vm84 = vcmp.eq.s32.totalorder %v65, %v82
  %vm85 = vcmp.eq.s32.totalorder %v65, %v83
  %v86 = vsel %vm84, 1, 0
  %v87 = vsel %vm85, 1, 0
  %v88 = vcvt.s32.f32 %v86
  %v89 = vcvt.s32.f32 %v87
  %v90 = vld [vmem:[%s2] sm:$0x1]
  %v91 = vld [vmem:[%s3] sm:$0x1]
  %v92 = vld [vmem:[%s5] sm:$0x1]
  %v93 = vld [vmem:[%s6] sm:$0x1]
  %v94 = vld [vmem:[%s8] sm:$0x1]
  %v95 = vld [vmem:[%s9] sm:$0x1]
  %v96 = vld [vmem:[%s11] sm:$0x1]
  %v97 = vld [vmem:[%s12] sm:$0x1]
  %v98 = vld [vmem:[%s13] sm:$0x1]
  %v99 = vld [vmem:[%s15] sm:$0x1]
  %v100 = vld [vmem:[%s16] sm:$0x1]
  %v101 = vld [vmem:[%s17] sm:$0x1]
  %v102 = vld [vmem:[%s0] sm:$0xff]
  %v103 = vld [vmem:[%s0 + $0x8] sm:$0xff]
  %v104 = vld [vmem:[%s0 + $0x10] sm:$0xff]
  %v105 = vld [vmem:[%s0 + $0x18] sm:$0xff]
  %v106 = vld [vmem:[%s0 + $0x20] sm:$0xff]
  %v107 = vld [vmem:[%s0 + $0x28] sm:$0xff]
  %v108 = vld [vmem:[%s0 + $0x30] sm:$0xff]
  %v109 = vld [vmem:[%s0 + $0x38] sm:$0xff]
  %v110 = vld [vmem:[%s0 + $0x40] sm:$0xff]
  %v111 = vld [vmem:[%s0 + $0x48] sm:$0xff]
  %v112 = vld [vmem:[%s0 + $0x50] sm:$0xff]
  %v113 = vld [vmem:[%s0 + $0x58] sm:$0xff]
  %v114 = vld [vmem:[%s0 + $0x60] sm:$0xff]
  %v115 = vld [vmem:[%s0 + $0x68] sm:$0xff]
  %v116 = vld [vmem:[%s0 + $0x70] sm:$0xff]
  %v117 = vld [vmem:[%s0 + $0x78] sm:$0x7f]
  %v118 = vld [vmem:[%s1] sm:$0x1f]
  %v119 = vld [vmem:[%s0 + $0x1] sm:$0xff]
  %v120 = vld [vmem:[%s0 + $0x9] sm:$0xff]
  %v121 = vld [vmem:[%s0 + $0x11] sm:$0xff]
  %v122 = vld [vmem:[%s0 + $0x19] sm:$0xff]
  %v123 = vld [vmem:[%s0 + $0x21] sm:$0xff]
  %v124 = vld [vmem:[%s0 + $0x29] sm:$0xff]
  %v125 = vld [vmem:[%s0 + $0x31] sm:$0xff]
  %v126 = vld [vmem:[%s0 + $0x39] sm:$0xff]
  %v127 = vld [vmem:[%s0 + $0x41] sm:$0xff]
  %v128 = vld [vmem:[%s0 + $0x49] sm:$0xff]
  %v129 = vld [vmem:[%s0 + $0x51] sm:$0xff]
  %v130 = vld [vmem:[%s0 + $0x59] sm:$0xff]
  %v131 = vld [vmem:[%s0 + $0x61] sm:$0xff]
  %v132 = vld [vmem:[%s0 + $0x69] sm:$0xff]
  %v133 = vld [vmem:[%s0 + $0x71] sm:$0xff]
  %v134 = vld [vmem:[%s0 + $0x79] sm:$0x7f]
  %s135 = scalar_lea.vmem %s1, 8
  %v136 = vld [vmem:[%s135] sm:$0x1f]
  %vm137 = vcmask 39936
  %v139 = vsel %vm137, %v119, 0
  %v142 = vsel %vm137, %v120, 0
  %v145 = vsel %vm137, %v121, 0
  %v148 = vsel %vm137, %v122, 0
  %v151 = vsel %vm137, %v123, 0
  %v154 = vsel %vm137, %v124, 0
  %v157 = vsel %vm137, %v125, 0
  %v160 = vsel %vm137, %v126, 0
  %v163 = vsel %vm137, %v127, 0
  %v166 = vsel %vm137, %v128, 0
  %v169 = vsel %vm137, %v129, 0
  %v172 = vsel %vm137, %v130, 0
  %v175 = vsel %vm137, %v131, 0
  %v178 = vsel %vm137, %v132, 0
  %v181 = vsel %vm137, %v133, 0
  %v184 = vsel %vm137, %v134, 0
  %vm186 = vcmask 1044480
  %v188 = vsel %vm186, %v136, 0
  %190 = vmatpush.msra.mxu0 0.0
  %191 = vmatpush.msra.mxu0 0.0
  %192 = vmatpush.msra.mxu0 0.0
  %193 = vmatpush.msra.mxu0 0.0
  %194 = vmatpush.msra.mxu0 0.0
  %195 = vmatpush.msra.mxu0 0.0
  %196 = vmatpush.msra.mxu0 0.0
  %197 = vmatpush.msra.mxu0 0.0
  %198 = vmatpush.msra.mxu0 0.0
  %199 = vmatpush.msra.mxu0 0.0
  %200 = vmatpush.msra.mxu0 0.0
  %201 = vmatpush.msra.mxu0 0.0
  %202 = vmatpush.msra.mxu0 0.0
  %203 = vmatpush.msra.mxu0 0.0
  %204 = vmatpush.msra.mxu0 0.0
  %205 = vmatpush.msra.mxu0 %v188
  %206 = vmatmul.f32.gmra.mxu0 %v139
  %v207 = vpop.f32.mrf.mxu0
  %v208 = vadd.f32 0.0, %v207
  %209 = vmatmul.f32.gmra.mxu0 %v142
  %v210 = vpop.f32.mrf.mxu0
  %v211 = vadd.f32 0.0, %v210
  %212 = vmatmul.f32.gmra.mxu0 %v145
  %v213 = vpop.f32.mrf.mxu0
  %v214 = vadd.f32 0.0, %v213
  %215 = vmatmul.f32.gmra.mxu0 %v148
  %v216 = vpop.f32.mrf.mxu0
  %v217 = vadd.f32 0.0, %v216
  %218 = vmatmul.f32.gmra.mxu0 %v151
  %v219 = vpop.f32.mrf.mxu0
  %v220 = vadd.f32 0.0, %v219
  %221 = vmatmul.f32.gmra.mxu0 %v154
  %v222 = vpop.f32.mrf.mxu0
  %v223 = vadd.f32 0.0, %v222
  %224 = vmatmul.f32.gmra.mxu0 %v157
  %v225 = vpop.f32.mrf.mxu0
  %v226 = vadd.f32 0.0, %v225
  %227 = vmatmul.f32.gmra.mxu0 %v160
  %v228 = vpop.f32.mrf.mxu0
  %v229 = vadd.f32 0.0, %v228
  %230 = vmatmul.f32.gmra.mxu0 %v163
  %v231 = vpop.f32.mrf.mxu0
  %v232 = vadd.f32 0.0, %v231
  %233 = vmatmul.f32.gmra.mxu0 %v166
  %v234 = vpop.f32.mrf.mxu0
  %v235 = vadd.f32 0.0, %v234
  %236 = vmatmul.f32.gmra.mxu0 %v169
  %v237 = vpop.f32.mrf.mxu0
  %v238 = vadd.f32 0.0, %v237
  %239 = vmatmul.f32.gmra.mxu0 %v172
  %v240 = vpop.f32.mrf.mxu0
  %v241 = vadd.f32 0.0, %v240
  %242 = vmatmul.f32.gmra.mxu0 %v175
  %v243 = vpop.f32.mrf.mxu0
  %v244 = vadd.f32 0.0, %v243
  %245 = vmatmul.f32.gmra.mxu0 %v178
  %v246 = vpop.f32.mrf.mxu0
  %v247 = vadd.f32 0.0, %v246
  %248 = vmatmul.f32.gmra.mxu0 %v181
  %v249 = vpop.f32.mrf.mxu0
  %v250 = vadd.f32 0.0, %v249
  %251 = vmatmul.f32.gmra.mxu0 %v184
  %v252 = vpop.f32.mrf.mxu0
  %v253 = vadd.f32 0.0, %v252
  %254 = vdwg.mxu0
  %v256 = vsel %vm137, %v102, 0
  %v259 = vsel %vm137, %v103, 0
  %v262 = vsel %vm137, %v104, 0
  %v265 = vsel %vm137, %v105, 0
  %v268 = vsel %vm137, %v106, 0
  %v271 = vsel %vm137, %v107, 0
  %v274 = vsel %vm137, %v108, 0
  %v277 = vsel %vm137, %v109, 0
  %v280 = vsel %vm137, %v110, 0
  %v283 = vsel %vm137, %v111, 0
  %v286 = vsel %vm137, %v112, 0
  %v289 = vsel %vm137, %v113, 0
  %v292 = vsel %vm137, %v114, 0
  %v295 = vsel %vm137, %v115, 0
  %v298 = vsel %vm137, %v116, 0
  %v301 = vsel %vm137, %v117, 0
  %v304 = vsel %vm186, %v118, 0
  %306 = vmatpush.msra.mxu0 0.0
  %307 = vmatpush.msra.mxu0 0.0
  %308 = vmatpush.msra.mxu0 0.0
  %309 = vmatpush.msra.mxu0 0.0
  %310 = vmatpush.msra.mxu0 0.0
  %311 = vmatpush.msra.mxu0 0.0
  %312 = vmatpush.msra.mxu0 0.0
  %313 = vmatpush.msra.mxu0 0.0
  %314 = vmatpush.msra.mxu0 0.0
  %315 = vmatpush.msra.mxu0 0.0
  %316 = vmatpush.msra.mxu0 0.0
  %317 = vmatpush.msra.mxu0 0.0
  %318 = vmatpush.msra.mxu0 0.0
  %319 = vmatpush.msra.mxu0 0.0
  %320 = vmatpush.msra.mxu0 0.0
  %321 = vmatpush.msra.mxu0 %v304
  %322 = vmatmul.f32.gmra.mxu0 %v256
  %v323 = vpop.f32.mrf.mxu0
  %v324 = vadd.f32 %v208, %v323
  %325 = vmatmul.f32.gmra.mxu0 %v259
  %v326 = vpop.f32.mrf.mxu0
  %v327 = vadd.f32 %v211, %v326
  %328 = vmatmul.f32.gmra.mxu0 %v262
  %v329 = vpop.f32.mrf.mxu0
  %v330 = vadd.f32 %v214, %v329
  %331 = vmatmul.f32.gmra.mxu0 %v265
  %v332 = vpop.f32.mrf.mxu0
  %v333 = vadd.f32 %v217, %v332
  %334 = vmatmul.f32.gmra.mxu0 %v268
  %v335 = vpop.f32.mrf.mxu0
  %v336 = vadd.f32 %v220, %v335
  %337 = vmatmul.f32.gmra.mxu0 %v271
  %v338 = vpop.f32.mrf.mxu0
  %v339 = vadd.f32 %v223, %v338
  %340 = vmatmul.f32.gmra.mxu0 %v274
  %v341 = vpop.f32.mrf.mxu0
  %v342 = vadd.f32 %v226, %v341
  %343 = vmatmul.f32.gmra.mxu0 %v277
  %v344 = vpop.f32.mrf.mxu0
  %v345 = vadd.f32 %v229, %v344
  %346 = vmatmul.f32.gmra.mxu0 %v280
  %v347 = vpop.f32.mrf.mxu0
  %v348 = vadd.f32 %v232, %v347
  %349 = vmatmul.f32.gmra.mxu0 %v283
  %v350 = vpop.f32.mrf.mxu0
  %v351 = vadd.f32 %v235, %v350
  %352 = vmatmul.f32.gmra.mxu0 %v286
  %v353 = vpop.f32.mrf.mxu0
  %v354 = vadd.f32 %v238, %v353
  %355 = vmatmul.f32.gmra.mxu0 %v289
  %v356 = vpop.f32.mrf.mxu0
  %v357 = vadd.f32 %v241, %v356
  %358 = vmatmul.f32.gmra.mxu0 %v292
  %v359 = vpop.f32.mrf.mxu0
  %v360 = vadd.f32 %v244, %v359
  %361 = vmatmul.f32.gmra.mxu0 %v295
  %v362 = vpop.f32.mrf.mxu0
  %v363 = vadd.f32 %v247, %v362
  %364 = vmatmul.f32.gmra.mxu0 %v298
  %v365 = vpop.f32.mrf.mxu0
  %v366 = vadd.f32 %v250, %v365
  %367 = vmatmul.f32.gmra.mxu0 %v301
  %v368 = vpop.f32.mrf.mxu0
  %v369 = vadd.f32 %v253, %v368
  %370 = vdwg.mxu0
  %vm371 = vcmask 261120
  %v372 = vsel %vm371, %v324, 0.0
  %v373 = vsel %vm371, %v327, 0.0
  %v374 = vadd.f32 %v372, %v373
  %v375 = vsel %vm371, %v330, 0.0
  %v376 = vadd.f32 %v374, %v375
  %v377 = vsel %vm371, %v333, 0.0
  %v378 = vadd.f32 %v376, %v377
  %v379 = vsel %vm371, %v336, 0.0
  %v380 = vadd.f32 %v378, %v379
  %v381 = vsel %vm371, %v339, 0.0
  %v382 = vadd.f32 %v380, %v381
  %v383 = vsel %vm371, %v342, 0.0
  %v384 = vadd.f32 %v382, %v383
  %v385 = vsel %vm371, %v345, 0.0
  %v386 = vadd.f32 %v384, %v385
  %v387 = vsel %vm371, %v348, 0.0
  %v388 = vadd.f32 %v386, %v387
  %v389 = vsel %vm371, %v351, 0.0
  %v390 = vadd.f32 %v388, %v389
  %v391 = vsel %vm371, %v354, 0.0
  %v392 = vadd.f32 %v390, %v391
  %v393 = vsel %vm371, %v357, 0.0
  %v394 = vadd.f32 %v392, %v393
  %v395 = vsel %vm371, %v360, 0.0
  %v396 = vadd.f32 %v394, %v395
  %v397 = vsel %vm371, %v363, 0.0
  %v398 = vadd.f32 %v396, %v397
  %v399 = vsel %vm371, %v366, 0.0
  %v400 = vadd.f32 %v398, %v399
  %vm401 = vcmask 260096
  %v402 = vsel %vm401, %v369, 0.0
  %v403 = vadd.f32 %v400, %v402
  %404 = vadd.xlane.f32.xlu0 %v403
  %v405 = vpop.xlane.xlu0 %404
  %v406 = vrot.slane %v405, 4
  %v407 = vadd.f32 %v405, %v406
  %v408 = vrot.slane %v407, 2
  %v409 = vadd.f32 %v407, %v408
  %v410 = vrot.slane %v409, 1
  %v411 = vadd.f32 %v409, %v410
  %s412 = vtos %v411
  %v413 = vmul.f32 %v324, %v324
  %v414 = vmul.f32 %v327, %v327
  %v415 = vmul.f32 %v330, %v330
  %v416 = vmul.f32 %v333, %v333
  %v417 = vmul.f32 %v336, %v336
  %v418 = vmul.f32 %v339, %v339
  %v419 = vmul.f32 %v342, %v342
  %v420 = vmul.f32 %v345, %v345
  %v421 = vmul.f32 %v348, %v348
  %v422 = vmul.f32 %v351, %v351
  %v423 = vmul.f32 %v354, %v354
  %v424 = vmul.f32 %v357, %v357
  %v425 = vmul.f32 %v360, %v360
  %v426 = vmul.f32 %v363, %v363
  %v427 = vmul.f32 %v366, %v366
  %v428 = vmul.f32 %v369, %v369
  %v429 = vsel %vm371, %v413, 0.0
  %v430 = vsel %vm371, %v414, 0.0
  %v431 = vadd.f32 %v429, %v430
  %v432 = vsel %vm371, %v415, 0.0
  %v433 = vadd.f32 %v431, %v432
  %v434 = vsel %vm371, %v416, 0.0
  %v435 = vadd.f32 %v433, %v434
  %v436 = vsel %vm371, %v417, 0.0
  %v437 = vadd.f32 %v435, %v436
  %v438 = vsel %vm371, %v418, 0.0
  %v439 = vadd.f32 %v437, %v438
  %v440 = vsel %vm371, %v419, 0.0
  %v441 = vadd.f32 %v439, %v440
  %v442 = vsel %vm371, %v420, 0.0
  %v443 = vadd.f32 %v441, %v442
  %v444 = vsel %vm371, %v421, 0.0
  %v445 = vadd.f32 %v443, %v444
  %v446 = vsel %vm371, %v422, 0.0
  %v447 = vadd.f32 %v445, %v446
  %v448 = vsel %vm371, %v423, 0.0
  %v449 = vadd.f32 %v447, %v448
  %v450 = vsel %vm371, %v424, 0.0
  %v451 = vadd.f32 %v449, %v450
  %v452 = vsel %vm371, %v425, 0.0
  %v453 = vadd.f32 %v451, %v452
  %v454 = vsel %vm371, %v426, 0.0
  %v455 = vadd.f32 %v453, %v454
  %v456 = vsel %vm371, %v427, 0.0
  %v457 = vadd.f32 %v455, %v456
  %v458 = vsel %vm401, %v428, 0.0
  %v459 = vadd.f32 %v457, %v458
  %460 = vadd.xlane.f32.xlu0 %v459
  %v461 = vpop.xlane.xlu0 %460
  %v462 = vrot.slane %v461, 4
  %v463 = vadd.f32 %v461, %v462
  %v464 = vrot.slane %v463, 2
  %v465 = vadd.f32 %v463, %v464
  %v466 = vrot.slane %v465, 1
  %v467 = vadd.f32 %v465, %v466
  %s468 = vtos %v467
  %s469 = smul.f32 %s412, 0.000246063
  %s470 = smul.f32 %s468, 0.000246063
  %s471 = smul.f32 %s469, %s469
  %s472 = ssub.f32 %s470, %s471
  %s473 = sadd.f32 %s472, 1e-05
  %v474 = vstv %s473
  %v475 = vrsqrt.pop %v474
  %v476 = vmul.f32 %v475, %v474
  %v477 = vmul.f32 %v476, %v475
  %v478 = vmul.f32 0.5, %v477
  %v479 = vsub.f32 1.5, %v478
  %v480 = vmul.f32 %v475, %v479
  %vm481 = vweird.f32 %v474
  %vm482 = vweird.f32 %v475
  %vm483 = vmor %vm481, %vm482
  %v484 = vsel %vm483, %v475, %v480
  %s485 = vtos %v484
  %v486 = vstv %s485
  %v487 = vmul.f32 %v90, %v486
  %v488 = vstv %s469
  %v489 = vmul.f32 %v488, %v487
  %v490 = vsub.f32 %v91, %v489
  %v492 = vperm.slane %v487, 0
  %v494 = vmul.f32 %v324, %v492
  %v495 = vmul.f32 %v327, %v492
  %v496 = vmul.f32 %v330, %v492
  %v497 = vmul.f32 %v333, %v492
  %v498 = vmul.f32 %v336, %v492
  %v499 = vmul.f32 %v339, %v492
  %v500 = vmul.f32 %v342, %v492
  %v501 = vmul.f32 %v345, %v492
  %v502 = vmul.f32 %v348, %v492
  %v503 = vmul.f32 %v351, %v492
  %v504 = vmul.f32 %v354, %v492
  %v505 = vmul.f32 %v357, %v492
  %v506 = vmul.f32 %v360, %v492
  %v507 = vmul.f32 %v363, %v492
  %v508 = vmul.f32 %v366, %v492
  %v509 = vmul.f32 %v369, %v492
  %v511 = vperm.slane %v490, 0
  %v513 = vadd.f32 %v494, %v511
  %v514 = vadd.f32 %v495, %v511
  %v515 = vadd.f32 %v496, %v511
  %v516 = vadd.f32 %v497, %v511
  %v517 = vadd.f32 %v498, %v511
  %v518 = vadd.f32 %v499, %v511
  %v519 = vadd.f32 %v500, %v511
  %v520 = vadd.f32 %v501, %v511
  %v521 = vadd.f32 %v502, %v511
  %v522 = vadd.f32 %v503, %v511
  %v523 = vadd.f32 %v504, %v511
  %v524 = vadd.f32 %v505, %v511
  %v525 = vadd.f32 %v506, %v511
  %v526 = vadd.f32 %v507, %v511
  %v527 = vadd.f32 %v508, %v511
  %v528 = vadd.f32 %v509, %v511
  %v529 = vmax.f32 %v513, 0.0
  %v530 = vmax.f32 %v514, 0.0
  %v531 = vmax.f32 %v515, 0.0
  %v532 = vmax.f32 %v516, 0.0
  %v533 = vmax.f32 %v517, 0.0
  %v534 = vmax.f32 %v518, 0.0
  %v535 = vmax.f32 %v519, 0.0
  %v536 = vmax.f32 %v520, 0.0
  %v537 = vmax.f32 %v521, 0.0
  %v538 = vmax.f32 %v522, 0.0
  %v539 = vmax.f32 %v523, 0.0
  %v540 = vmax.f32 %v524, 0.0
  %v541 = vmax.f32 %v525, 0.0
  %v542 = vmax.f32 %v526, 0.0
  %v543 = vmax.f32 %v527, 0.0
  %v544 = vmax.f32 %v528, 0.0
  %545 = vst.msk [vmem:[#allocation2] sm:$0xff] %vm371, %v529
  %546 = vst.msk [vmem:[#allocation2 + $0x8] sm:$0xff] %vm371, %v530
  %547 = vst.msk [vmem:[#allocation2 + $0x10] sm:$0xff] %vm371, %v531
  %548 = vst.msk [vmem:[#allocation2 + $0x18] sm:$0xff] %vm371, %v532
  %549 = vst.msk [vmem:[#allocation2 + $0x20] sm:$0xff] %vm371, %v533
  %550 = vst.msk [vmem:[#allocation2 + $0x28] sm:$0xff] %vm371, %v534
  %551 = vst.msk [vmem:[#allocation2 + $0x30] sm:$0xff] %vm371, %v535
  %552 = vst.msk [vmem:[#allocation2 + $0x38] sm:$0xff] %vm371, %v536
  %553 = vst.msk [vmem:[#allocation2 + $0x40] sm:$0xff] %vm371, %v537
  %554 = vst.msk [vmem:[#allocation2 + $0x48] sm:$0xff] %vm371, %v538
  %555 = vst.msk [vmem:[#allocation2 + $0x50] sm:$0xff] %vm371, %v539
  %556 = vst.msk [vmem:[#allocation2 + $0x58] sm:$0xff] %vm371, %v540
  %557 = vst.msk [vmem:[#allocation2 + $0x60] sm:$0xff] %vm371, %v541
  %558 = vst.msk [vmem:[#allocation2 + $0x68] sm:$0xff] %vm371, %v542
  %559 = vst.msk [vmem:[#allocation2 + $0x70] sm:$0xff] %vm371, %v543
  %560 = vst.msk [vmem:[#allocation2 + $0x78] sm:$0x7f] %vm401, %v544
  %v561 = vld [vmem:[#allocation2] sm:$0xff]
  %v562 = vld [vmem:[#allocation2 + $0x8] sm:$0xff]
  %v563 = vld [vmem:[#allocation2 + $0x10] sm:$0xff]
  %v564 = vld [vmem:[#allocation2 + $0x18] sm:$0xff]
  %v565 = vld [vmem:[#allocation2 + $0x20] sm:$0xff]
  %v566 = vld [vmem:[#allocation2 + $0x28] sm:$0xff]
  %v567 = vld [vmem:[#allocation2 + $0x30] sm:$0xff]
  %v568 = vld [vmem:[#allocation2 + $0x38] sm:$0xff]
  %v569 = vld [vmem:[#allocation2 + $0x40] sm:$0xff]
  %v570 = vld [vmem:[#allocation2 + $0x48] sm:$0xff]
  %v571 = vld [vmem:[#allocation2 + $0x50] sm:$0xff]
  %v572 = vld [vmem:[#allocation2 + $0x58] sm:$0xff]
  %v573 = vld [vmem:[#allocation2 + $0x60] sm:$0xff]
  %v574 = vld [vmem:[#allocation2 + $0x68] sm:$0xff]
  %v575 = vld [vmem:[#allocation2 + $0x70] sm:$0xff]
  %v576 = vld [vmem:[%s4] sm:$0xff]
  %v577 = vld [vmem:[%s4 + $0x8] sm:$0xff]
  %v578 = vld [vmem:[%s4 + $0x10] sm:$0xff]
  %v579 = vld [vmem:[%s4 + $0x18] sm:$0xff]
  %v580 = vld [vmem:[#allocation2 + $0x1] sm:$0xff]
  %v581 = vld [vmem:[#allocation2 + $0x9] sm:$0xff]
  %v582 = vld [vmem:[#allocation2 + $0x11] sm:$0xff]
  %v583 = vld [vmem:[#allocation2 + $0x19] sm:$0xff]
  %v584 = vld [vmem:[#allocation2 + $0x21] sm:$0xff]
  %v585 = vld [vmem:[#allocation2 + $0x29] sm:$0xff]
  %v586 = vld [vmem:[#allocation2 + $0x31] sm:$0xff]
  %v587 = vld [vmem:[#allocation2 + $0x39] sm:$0xff]
  %v588 = vld [vmem:[#allocation2 + $0x41] sm:$0xff]
  %v589 = vld [vmem:[#allocation2 + $0x49] sm:$0xff]
  %v590 = vld [vmem:[#allocation2 + $0x51] sm:$0xff]
  %v591 = vld [vmem:[#allocation2 + $0x59] sm:$0xff]
  %v592 = vld [vmem:[#allocation2 + $0x61] sm:$0xff]
  %v593 = vld [vmem:[#allocation2 + $0x69] sm:$0xff]
  %v594 = vld [vmem:[#allocation2 + $0x71] sm:$0xff]
  %s595 = scalar_lea.vmem %s4, 32
  %v596 = vld [vmem:[%s595] sm:$0xff]
  %v597 = vld [vmem:[%s595 + $0x8] sm:$0xff]
  %v598 = vld [vmem:[%s595 + $0x10] sm:$0xff]
  %v599 = vld [vmem:[%s595 + $0x18] sm:$0xff]
  %v601 = vsel %vm371, %v580, 0
  %v604 = vsel %vm371, %v581, 0
  %v607 = vsel %vm371, %v582, 0
  %v610 = vsel %vm371, %v583, 0
  %v613 = vsel %vm371, %v584, 0
  %v616 = vsel %vm371, %v585, 0
  %v619 = vsel %vm371, %v586, 0
  %v622 = vsel %vm371, %v587, 0
  %v625 = vsel %vm371, %v588, 0
  %v628 = vsel %vm371, %v589, 0
  %v631 = vsel %vm371, %v590, 0
  %v634 = vsel %vm371, %v591, 0
  %v637 = vsel %vm371, %v592, 0
  %v640 = vsel %vm371, %v593, 0
  %v643 = vsel %vm371, %v594, 0
  %645 = vmatpush.msra.mxu0 0.0
  %646 = vmatpush.msra.mxu0 0.0
  %647 = vmatpush.msra.mxu0 0.0
  %648 = vmatpush.msra.mxu0 0.0
  %649 = vmatpush.msra.mxu0 0.0
  %650 = vmatpush.msra.mxu0 0.0
  %651 = vmatpush.msra.mxu0 0.0
  %652 = vmatpush.msra.mxu0 0.0
  %653 = vmatpush.msra.mxu0 0.0
  %654 = vmatpush.msra.mxu0 0.0
  %655 = vmatpush.msra.mxu0 0.0
  %656 = vmatpush.msra.mxu0 0.0
  %657 = vmatpush.msra.mxu0 %v599
  %658 = vmatpush.msra.mxu0 %v598
  %659 = vmatpush.msra.mxu0 %v597
  %660 = vmatpush.msra.mxu0 %v596
  %661 = vmatmul.f32.gmra.mxu0 %v601
  %v662 = vpop.f32.mrf.mxu0
  %v663 = vadd.f32 0.0, %v662
  %664 = vmatmul.f32.gmra.mxu0 %v604
  %v665 = vpop.f32.mrf.mxu0
  %v666 = vadd.f32 0.0, %v665
  %667 = vmatmul.f32.gmra.mxu0 %v607
  %v668 = vpop.f32.mrf.mxu0
  %v669 = vadd.f32 0.0, %v668
  %670 = vmatmul.f32.gmra.mxu0 %v610
  %v671 = vpop.f32.mrf.mxu0
  %v672 = vadd.f32 0.0, %v671
  %673 = vmatmul.f32.gmra.mxu0 %v613
  %v674 = vpop.f32.mrf.mxu0
  %v675 = vadd.f32 0.0, %v674
  %676 = vmatmul.f32.gmra.mxu0 %v616
  %v677 = vpop.f32.mrf.mxu0
  %v678 = vadd.f32 0.0, %v677
  %679 = vmatmul.f32.gmra.mxu0 %v619
  %v680 = vpop.f32.mrf.mxu0
  %v681 = vadd.f32 0.0, %v680
  %682 = vmatmul.f32.gmra.mxu0 %v622
  %v683 = vpop.f32.mrf.mxu0
  %v684 = vadd.f32 0.0, %v683
  %685 = vmatmul.f32.gmra.mxu0 %v625
  %v686 = vpop.f32.mrf.mxu0
  %v687 = vadd.f32 0.0, %v686
  %688 = vmatmul.f32.gmra.mxu0 %v628
  %v689 = vpop.f32.mrf.mxu0
  %v690 = vadd.f32 0.0, %v689
  %691 = vmatmul.f32.gmra.mxu0 %v631
  %v692 = vpop.f32.mrf.mxu0
  %v693 = vadd.f32 0.0, %v692
  %694 = vmatmul.f32.gmra.mxu0 %v634
  %v695 = vpop.f32.mrf.mxu0
  %v696 = vadd.f32 0.0, %v695
  %697 = vmatmul.f32.gmra.mxu0 %v637
  %v698 = vpop.f32.mrf.mxu0
  %v699 = vadd.f32 0.0, %v698
  %700 = vmatmul.f32.gmra.mxu0 %v640
  %v701 = vpop.f32.mrf.mxu0
  %v702 = vadd.f32 0.0, %v701
  %703 = vmatmul.f32.gmra.mxu0 %v643
  %v704 = vpop.f32.mrf.mxu0
  %v705 = vadd.f32 0.0, %v704
  %706 = vdwg.mxu0
  %v708 = vsel %vm371, %v561, 0
  %v711 = vsel %vm371, %v562, 0
  %v714 = vsel %vm371, %v563, 0
  %v717 = vsel %vm371, %v564, 0
  %v720 = vsel %vm371, %v565, 0
  %v723 = vsel %vm371, %v566, 0
  %v726 = vsel %vm371, %v567, 0
  %v729 = vsel %vm371, %v568, 0
  %v732 = vsel %vm371, %v569, 0
  %v735 = vsel %vm371, %v570, 0
  %v738 = vsel %vm371, %v571, 0
  %v741 = vsel %vm371, %v572, 0
  %v744 = vsel %vm371, %v573, 0
  %v747 = vsel %vm371, %v574, 0
  %v750 = vsel %vm371, %v575, 0
  %752 = vmatpush.msra.mxu0 0.0
  %753 = vmatpush.msra.mxu0 0.0
  %754 = vmatpush.msra.mxu0 0.0
  %755 = vmatpush.msra.mxu0 0.0
  %756 = vmatpush.msra.mxu0 0.0
  %757 = vmatpush.msra.mxu0 0.0
  %758 = vmatpush.msra.mxu0 0.0
  %759 = vmatpush.msra.mxu0 0.0
  %760 = vmatpush.msra.mxu0 0.0
  %761 = vmatpush.msra.mxu0 0.0
  %762 = vmatpush.msra.mxu0 0.0
  %763 = vmatpush.msra.mxu0 0.0
  %764 = vmatpush.msra.mxu0 %v579
  %765 = vmatpush.msra.mxu0 %v578
  %766 = vmatpush.msra.mxu0 %v577
  %767 = vmatpush.msra.mxu0 %v576
  %768 = vmatmul.f32.gmra.mxu0 %v708
  %v769 = vpop.f32.mrf.mxu0
  %v770 = vadd.f32 %v663, %v769
  %771 = vmatmul.f32.gmra.mxu0 %v711
  %v772 = vpop.f32.mrf.mxu0
  %v773 = vadd.f32 %v666, %v772
  %774 = vmatmul.f32.gmra.mxu0 %v714
  %v775 = vpop.f32.mrf.mxu0
  %v776 = vadd.f32 %v669, %v775
  %777 = vmatmul.f32.gmra.mxu0 %v717
  %v778 = vpop.f32.mrf.mxu0
  %v779 = vadd.f32 %v672, %v778
  %780 = vmatmul.f32.gmra.mxu0 %v720
  %v781 = vpop.f32.mrf.mxu0
  %v782 = vadd.f32 %v675, %v781
  %783 = vmatmul.f32.gmra.mxu0 %v723
  %v784 = vpop.f32.mrf.mxu0
  %v785 = vadd.f32 %v678, %v784
  %786 = vmatmul.f32.gmra.mxu0 %v726
  %v787 = vpop.f32.mrf.mxu0
  %v788 = vadd.f32 %v681, %v787
  %789 = vmatmul.f32.gmra.mxu0 %v729
  %v790 = vpop.f32.mrf.mxu0
  %v791 = vadd.f32 %v684, %v790
  %792 = vmatmul.f32.gmra.mxu0 %v732
  %v793 = vpop.f32.mrf.mxu0
  %v794 = vadd.f32 %v687, %v793
  %795 = vmatmul.f32.gmra.mxu0 %v735
  %v796 = vpop.f32.mrf.mxu0
  %v797 = vadd.f32 %v690, %v796
  %798 = vmatmul.f32.gmra.mxu0 %v738
  %v799 = vpop.f32.mrf.mxu0
  %v800 = vadd.f32 %v693, %v799
  %801 = vmatmul.f32.gmra.mxu0 %v741
  %v802 = vpop.f32.mrf.mxu0
  %v803 = vadd.f32 %v696, %v802
  %804 = vmatmul.f32.gmra.mxu0 %v744
  %v805 = vpop.f32.mrf.mxu0
  %v806 = vadd.f32 %v699, %v805
  %807 = vmatmul.f32.gmra.mxu0 %v747
  %v808 = vpop.f32.mrf.mxu0
  %v809 = vadd.f32 %v702, %v808
  %810 = vmatmul.f32.gmra.mxu0 %v750
  %v811 = vpop.f32.mrf.mxu0
  %v812 = vadd.f32 %v705, %v811
  %813 = vdwg.mxu0
  %v814 = vld [vmem:[#allocation2 + $0x2] sm:$0xff]
  %v815 = vld [vmem:[#allocation2 + $0xa] sm:$0xff]
  %v816 = vld [vmem:[#allocation2 + $0x12] sm:$0xff]
  %v817 = vld [vmem:[#allocation2 + $0x1a] sm:$0xff]
  %v818 = vld [vmem:[#allocation2 + $0x22] sm:$0xff]
  %v819 = vld [vmem:[#allocation2 + $0x2a] sm:$0xff]
  %v820 = vld [vmem:[#allocation2 + $0x32] sm:$0xff]
  %v821 = vld [vmem:[#allocation2 + $0x3a] sm:$0xff]
  %v822 = vld [vmem:[#allocation2 + $0x42] sm:$0xff]
  %v823 = vld [vmem:[#allocation2 + $0x4a] sm:$0xff]
  %v824 = vld [vmem:[#allocation2 + $0x52] sm:$0xff]
  %v825 = vld [vmem:[#allocation2 + $0x5a] sm:$0xff]
  %v826 = vld [vmem:[#allocation2 + $0x62] sm:$0xff]
  %v827 = vld [vmem:[#allocation2 + $0x6a] sm:$0xff]
  %v828 = vld [vmem:[#allocation2 + $0x72] sm:$0xff]
  %s829 = scalar_lea.vmem %s4, 64
  %v830 = vld [vmem:[%s829] sm:$0xff]
  %v831 = vld [vmem:[%s829 + $0x8] sm:$0xff]
  %v832 = vld [vmem:[%s829 + $0x10] sm:$0xff]
  %v833 = vld [vmem:[%s829 + $0x18] sm:$0xff]
  %v835 = vsel %vm371, %v814, 0
  %v838 = vsel %vm371, %v815, 0
  %v841 = vsel %vm371, %v816, 0
  %v844 = vsel %vm371, %v817, 0
  %v847 = vsel %vm371, %v818, 0
  %v850 = vsel %vm371, %v819, 0
  %v853 = vsel %vm371, %v820, 0
  %v856 = vsel %vm371, %v821, 0
  %v859 = vsel %vm371, %v822, 0
  %v862 = vsel %vm371, %v823, 0
  %v865 = vsel %vm371, %v824, 0
  %v868 = vsel %vm371, %v825, 0
  %v871 = vsel %vm371, %v826, 0
  %v874 = vsel %vm371, %v827, 0
  %v877 = vsel %vm371, %v828, 0
  %879 = vmatpush.msra.mxu0 0.0
  %880 = vmatpush.msra.mxu0 0.0
  %881 = vmatpush.msra.mxu0 0.0
  %882 = vmatpush.msra.mxu0 0.0
  %883 = vmatpush.msra.mxu0 0.0
  %884 = vmatpush.msra.mxu0 0.0
  %885 = vmatpush.msra.mxu0 0.0
  %886 = vmatpush.msra.mxu0 0.0
  %887 = vmatpush.msra.mxu0 0.0
  %888 = vmatpush.msra.mxu0 0.0
  %889 = vmatpush.msra.mxu0 0.0
  %890 = vmatpush.msra.mxu0 0.0
  %891 = vmatpush.msra.mxu0 %v833
  %892 = vmatpush.msra.mxu0 %v832
  %893 = vmatpush.msra.mxu0 %v831
  %894 = vmatpush.msra.mxu0 %v830
  %895 = vmatmul.f32.gmra.mxu0 %v835
  %v896 = vpop.f32.mrf.mxu0
  %v897 = vadd.f32 0.0, %v896
  %898 = vmatmul.f32.gmra.mxu0 %v838
  %v899 = vpop.f32.mrf.mxu0
  %v900 = vadd.f32 0.0, %v899
  %901 = vmatmul.f32.gmra.mxu0 %v841
  %v902 = vpop.f32.mrf.mxu0
  %v903 = vadd.f32 0.0, %v902
  %904 = vmatmul.f32.gmra.mxu0 %v844
  %v905 = vpop.f32.mrf.mxu0
  %v906 = vadd.f32 0.0, %v905
  %907 = vmatmul.f32.gmra.mxu0 %v847
  %v908 = vpop.f32.mrf.mxu0
  %v909 = vadd.f32 0.0, %v908
  %910 = vmatmul.f32.gmra.mxu0 %v850
  %v911 = vpop.f32.mrf.mxu0
  %v912 = vadd.f32 0.0, %v911
  %913 = vmatmul.f32.gmra.mxu0 %v853
  %v914 = vpop.f32.mrf.mxu0
  %v915 = vadd.f32 0.0, %v914
  %916 = vmatmul.f32.gmra.mxu0 %v856
  %v917 = vpop.f32.mrf.mxu0
  %v918 = vadd.f32 0.0, %v917
  %919 = vmatmul.f32.gmra.mxu0 %v859
  %v920 = vpop.f32.mrf.mxu0
  %v921 = vadd.f32 0.0, %v920
  %922 = vmatmul.f32.gmra.mxu0 %v862
  %v923 = vpop.f32.mrf.mxu0
  %v924 = vadd.f32 0.0, %v923
  %925 = vmatmul.f32.gmra.mxu0 %v865
  %v926 = vpop.f32.mrf.mxu0
  %v927 = vadd.f32 0.0, %v926
  %928 = vmatmul.f32.gmra.mxu0 %v868
  %v929 = vpop.f32.mrf.mxu0
  %v930 = vadd.f32 0.0, %v929
  %931 = vmatmul.f32.gmra.mxu0 %v871
  %v932 = vpop.f32.mrf.mxu0
  %v933 = vadd.f32 0.0, %v932
  %934 = vmatmul.f32.gmra.mxu0 %v874
  %v935 = vpop.f32.mrf.mxu0
  %v936 = vadd.f32 0.0, %v935
  %937 = vmatmul.f32.gmra.mxu0 %v877
  %v938 = vpop.f32.mrf.mxu0
  %v939 = vadd.f32 0.0, %v938
  %940 = vdwg.mxu0
  %v941 = vadd.f32 %v770, %v897
  %v942 = vadd.f32 %v773, %v900
  %v943 = vadd.f32 %v776, %v903
  %v944 = vadd.f32 %v779, %v906
  %v945 = vadd.f32 %v782, %v909
  %v946 = vadd.f32 %v785, %v912
  %v947 = vadd.f32 %v788, %v915
  %v948 = vadd.f32 %v791, %v918
  %v949 = vadd.f32 %v794, %v921
  %v950 = vadd.f32 %v797, %v924
  %v951 = vadd.f32 %v800, %v927
  %v952 = vadd.f32 %v803, %v930
  %v953 = vadd.f32 %v806, %v933
  %v954 = vadd.f32 %v809, %v936
  %v955 = vadd.f32 %v812, %v939
  %v956 = vld [vmem:[#allocation2 + $0x3] sm:$0xff]
  %v957 = vld [vmem:[#allocation2 + $0xb] sm:$0xff]
  %v958 = vld [vmem:[#allocation2 + $0x13] sm:$0xff]
  %v959 = vld [vmem:[#allocation2 + $0x1b] sm:$0xff]
  %v960 = vld [vmem:[#allocation2 + $0x23] sm:$0xff]
  %v961 = vld [vmem:[#allocation2 + $0x2b] sm:$0xff]
  %v962 = vld [vmem:[#allocation2 + $0x33] sm:$0xff]
  %v963 = vld [vmem:[#allocation2 + $0x3b] sm:$0xff]
  %v964 = vld [vmem:[#allocation2 + $0x43] sm:$0xff]
  %v965 = vld [vmem:[#allocation2 + $0x4b] sm:$0xff]
  %v966 = vld [vmem:[#allocation2 + $0x53] sm:$0xff]
  %v967 = vld [vmem:[#allocation2 + $0x5b] sm:$0xff]
  %v968 = vld [vmem:[#allocation2 + $0x63] sm:$0xff]
  %v969 = vld [vmem:[#allocation2 + $0x6b] sm:$0xff]
  %v970 = vld [vmem:[#allocation2 + $0x73] sm:$0xff]
  %s971 = scalar_lea.vmem %s4, 96
  %v972 = vld [vmem:[%s971] sm:$0xff]
  %v973 = vld [vmem:[%s971 + $0x8] sm:$0xff]
  %v974 = vld [vmem:[%s971 + $0x10] sm:$0xff]
  %v975 = vld [vmem:[%s971 + $0x18] sm:$0xff]
  %v977 = vsel %vm371, %v956, 0
  %v980 = vsel %vm371, %v957, 0
  %v983 = vsel %vm371, %v958, 0
  %v986 = vsel %vm371, %v959, 0
  %v989 = vsel %vm371, %v960, 0
  %v992 = vsel %vm371, %v961, 0
  %v995 = vsel %vm371, %v962, 0
  %v998 = vsel %vm371, %v963, 0
  %v1001 = vsel %vm371, %v964, 0
  %v1004 = vsel %vm371, %v965, 0
  %v1007 = vsel %vm371, %v966, 0
  %v1010 = vsel %vm371, %v967, 0
  %v1013 = vsel %vm371, %v968, 0
  %v1016 = vsel %vm371, %v969, 0
  %v1019 = vsel %vm371, %v970, 0
  %1021 = vmatpush.msra.mxu0 0.0
  %1022 = vmatpush.msra.mxu0 0.0
  %1023 = vmatpush.msra.mxu0 0.0
  %1024 = vmatpush.msra.mxu0 0.0
  %1025 = vmatpush.msra.mxu0 0.0
  %1026 = vmatpush.msra.mxu0 0.0
  %1027 = vmatpush.msra.mxu0 0.0
  %1028 = vmatpush.msra.mxu0 0.0
  %1029 = vmatpush.msra.mxu0 0.0
  %1030 = vmatpush.msra.mxu0 0.0
  %1031 = vmatpush.msra.mxu0 0.0
  %1032 = vmatpush.msra.mxu0 0.0
  %1033 = vmatpush.msra.mxu0 %v975
  %1034 = vmatpush.msra.mxu0 %v974
  %1035 = vmatpush.msra.mxu0 %v973
  %1036 = vmatpush.msra.mxu0 %v972
  %1037 = vmatmul.f32.gmra.mxu0 %v977
  %v1038 = vpop.f32.mrf.mxu0
  %v1039 = vadd.f32 0.0, %v1038
  %1040 = vmatmul.f32.gmra.mxu0 %v980
  %v1041 = vpop.f32.mrf.mxu0
  %v1042 = vadd.f32 0.0, %v1041
  %1043 = vmatmul.f32.gmra.mxu0 %v983
  %v1044 = vpop.f32.mrf.mxu0
  %v1045 = vadd.f32 0.0, %v1044
  %1046 = vmatmul.f32.gmra.mxu0 %v986
  %v1047 = vpop.f32.mrf.mxu0
  %v1048 = vadd.f32 0.0, %v1047
  %1049 = vmatmul.f32.gmra.mxu0 %v989
  %v1050 = vpop.f32.mrf.mxu0
  %v1051 = vadd.f32 0.0, %v1050
  %1052 = vmatmul.f32.gmra.mxu0 %v992
  %v1053 = vpop.f32.mrf.mxu0
  %v1054 = vadd.f32 0.0, %v1053
  %1055 = vmatmul.f32.gmra.mxu0 %v995
  %v1056 = vpop.f32.mrf.mxu0
  %v1057 = vadd.f32 0.0, %v1056
  %1058 = vmatmul.f32.gmra.mxu0 %v998
  %v1059 = vpop.f32.mrf.mxu0
  %v1060 = vadd.f32 0.0, %v1059
  %1061 = vmatmul.f32.gmra.mxu0 %v1001
  %v1062 = vpop.f32.mrf.mxu0
  %v1063 = vadd.f32 0.0, %v1062
  %1064 = vmatmul.f32.gmra.mxu0 %v1004
  %v1065 = vpop.f32.mrf.mxu0
  %v1066 = vadd.f32 0.0, %v1065
  %1067 = vmatmul.f32.gmra.mxu0 %v1007
  %v1068 = vpop.f32.mrf.mxu0
  %v1069 = vadd.f32 0.0, %v1068
  %1070 = vmatmul.f32.gmra.mxu0 %v1010
  %v1071 = vpop.f32.mrf.mxu0
  %v1072 = vadd.f32 0.0, %v1071
  %1073 = vmatmul.f32.gmra.mxu0 %v1013
  %v1074 = vpop.f32.mrf.mxu0
  %v1075 = vadd.f32 0.0, %v1074
  %1076 = vmatmul.f32.gmra.mxu0 %v1016
  %v1077 = vpop.f32.mrf.mxu0
  %v1078 = vadd.f32 0.0, %v1077
  %1079 = vmatmul.f32.gmra.mxu0 %v1019
  %v1080 = vpop.f32.mrf.mxu0
  %v1081 = vadd.f32 0.0, %v1080
  %1082 = vdwg.mxu0
  %v1083 = vadd.f32 %v941, %v1039
  %v1084 = vadd.f32 %v942, %v1042
  %v1085 = vadd.f32 %v943, %v1045
  %v1086 = vadd.f32 %v944, %v1048
  %v1087 = vadd.f32 %v945, %v1051
  %v1088 = vadd.f32 %v946, %v1054
  %v1089 = vadd.f32 %v947, %v1057
  %v1090 = vadd.f32 %v948, %v1060
  %v1091 = vadd.f32 %v949, %v1063
  %v1092 = vadd.f32 %v950, %v1066
  %v1093 = vadd.f32 %v951, %v1069
  %v1094 = vadd.f32 %v952, %v1072
  %v1095 = vadd.f32 %v953, %v1075
  %v1096 = vadd.f32 %v954, %v1078
  %v1097 = vadd.f32 %v955, %v1081
  %v1098 = vld [vmem:[#allocation2 + $0x4] sm:$0xff]
  %v1099 = vld [vmem:[#allocation2 + $0xc] sm:$0xff]
  %v1100 = vld [vmem:[#allocation2 + $0x14] sm:$0xff]
  %v1101 = vld [vmem:[#allocation2 + $0x1c] sm:$0xff]
  %v1102 = vld [vmem:[#allocation2 + $0x24] sm:$0xff]
  %v1103 = vld [vmem:[#allocation2 + $0x2c] sm:$0xff]
  %v1104 = vld [vmem:[#allocation2 + $0x34] sm:$0xff]
  %v1105 = vld [vmem:[#allocation2 + $0x3c] sm:$0xff]
  %v1106 = vld [vmem:[#allocation2 + $0x44] sm:$0xff]
  %v1107 = vld [vmem:[#allocation2 + $0x4c] sm:$0xff]
  %v1108 = vld [vmem:[#allocation2 + $0x54] sm:$0xff]
  %v1109 = vld [vmem:[#allocation2 + $0x5c] sm:$0xff]
  %v1110 = vld [vmem:[#allocation2 + $0x64] sm:$0xff]
  %v1111 = vld [vmem:[#allocation2 + $0x6c] sm:$0xff]
  %v1112 = vld [vmem:[#allocation2 + $0x74] sm:$0xff]
  %s1113 = scalar_lea.vmem %s4, 128
  %v1114 = vld [vmem:[%s1113] sm:$0xff]
  %v1115 = vld [vmem:[%s1113 + $0x8] sm:$0xff]
  %v1116 = vld [vmem:[%s1113 + $0x10] sm:$0xff]
  %v1117 = vld [vmem:[%s1113 + $0x18] sm:$0xff]
  %v1119 = vsel %vm371, %v1098, 0
  %v1122 = vsel %vm371, %v1099, 0
  %v1125 = vsel %vm371, %v1100, 0
  %v1128 = vsel %vm371, %v1101, 0
  %v1131 = vsel %vm371, %v1102, 0
  %v1134 = vsel %vm371, %v1103, 0
  %v1137 = vsel %vm371, %v1104, 0
  %v1140 = vsel %vm371, %v1105, 0
  %v1143 = vsel %vm371, %v1106, 0
  %v1146 = vsel %vm371, %v1107, 0
  %v1149 = vsel %vm371, %v1108, 0
  %v1152 = vsel %vm371, %v1109, 0
  %v1155 = vsel %vm371, %v1110, 0
  %v1158 = vsel %vm371, %v1111, 0
  %v1161 = vsel %vm371, %v1112, 0
  %1163 = vmatpush.msra.mxu0 0.0
  %1164 = vmatpush.msra.mxu0 0.0
  %1165 = vmatpush.msra.mxu0 0.0
  %1166 = vmatpush.msra.mxu0 0.0
  %1167 = vmatpush.msra.mxu0 0.0
  %1168 = vmatpush.msra.mxu0 0.0
  %1169 = vmatpush.msra.mxu0 0.0
  %1170 = vmatpush.msra.mxu0 0.0
  %1171 = vmatpush.msra.mxu0 0.0
  %1172 = vmatpush.msra.mxu0 0.0
  %1173 = vmatpush.msra.mxu0 0.0
  %1174 = vmatpush.msra.mxu0 0.0
  %1175 = vmatpush.msra.mxu0 %v1117
  %1176 = vmatpush.msra.mxu0 %v1116
  %1177 = vmatpush.msra.mxu0 %v1115
  %1178 = vmatpush.msra.mxu0 %v1114
  %1179 = vmatmul.f32.gmra.mxu0 %v1119
  %v1180 = vpop.f32.mrf.mxu0
  %v1181 = vadd.f32 0.0, %v1180
  %1182 = vmatmul.f32.gmra.mxu0 %v1122
  %v1183 = vpop.f32.mrf.mxu0
  %v1184 = vadd.f32 0.0, %v1183
  %1185 = vmatmul.f32.gmra.mxu0 %v1125
  %v1186 = vpop.f32.mrf.mxu0
  %v1187 = vadd.f32 0.0, %v1186
  %1188 = vmatmul.f32.gmra.mxu0 %v1128
  %v1189 = vpop.f32.mrf.mxu0
  %v1190 = vadd.f32 0.0, %v1189
  %1191 = vmatmul.f32.gmra.mxu0 %v1131
  %v1192 = vpop.f32.mrf.mxu0
  %v1193 = vadd.f32 0.0, %v1192
  %1194 = vmatmul.f32.gmra.mxu0 %v1134
  %v1195 = vpop.f32.mrf.mxu0
  %v1196 = vadd.f32 0.0, %v1195
  %1197 = vmatmul.f32.gmra.mxu0 %v1137
  %v1198 = vpop.f32.mrf.mxu0
  %v1199 = vadd.f32 0.0, %v1198
  %1200 = vmatmul.f32.gmra.mxu0 %v1140
  %v1201 = vpop.f32.mrf.mxu0
  %v1202 = vadd.f32 0.0, %v1201
  %1203 = vmatmul.f32.gmra.mxu0 %v1143
  %v1204 = vpop.f32.mrf.mxu0
  %v1205 = vadd.f32 0.0, %v1204
  %1206 = vmatmul.f32.gmra.mxu0 %v1146
  %v1207 = vpop.f32.mrf.mxu0
  %v1208 = vadd.f32 0.0, %v1207
  %1209 = vmatmul.f32.gmra.mxu0 %v1149
  %v1210 = vpop.f32.mrf.mxu0
  %v1211 = vadd.f32 0.0, %v1210
  %1212 = vmatmul.f32.gmra.mxu0 %v1152
  %v1213 = vpop.f32.mrf.mxu0
  %v1214 = vadd.f32 0.0, %v1213
  %1215 = vmatmul.f32.gmra.mxu0 %v1155
  %v1216 = vpop.f32.mrf.mxu0
  %v1217 = vadd.f32 0.0, %v1216
  %1218 = vmatmul.f32.gmra.mxu0 %v1158
  %v1219 = vpop.f32.mrf.mxu0
  %v1220 = vadd.f32 0.0, %v1219
  %1221 = vmatmul.f32.gmra.mxu0 %v1161
  %v1222 = vpop.f32.mrf.mxu0
  %v1223 = vadd.f32 0.0, %v1222
  %1224 = vdwg.mxu0
  %v1225 = vadd.f32 %v1083, %v1181
  %v1226 = vadd.f32 %v1084, %v1184
  %v1227 = vadd.f32 %v1085, %v1187
  %v1228 = vadd.f32 %v1086, %v1190
  %v1229 = vadd.f32 %v1087, %v1193
  %v1230 = vadd.f32 %v1088, %v1196
  %v1231 = vadd.f32 %v1089, %v1199
  %v1232 = vadd.f32 %v1090, %v1202
  %v1233 = vadd.f32 %v1091, %v1205
  %v1234 = vadd.f32 %v1092, %v1208
  %v1235 = vadd.f32 %v1093, %v1211
  %v1236 = vadd.f32 %v1094, %v1214
  %v1237 = vadd.f32 %v1095, %v1217
  %v1238 = vadd.f32 %v1096, %v1220
  %v1239 = vadd.f32 %v1097, %v1223
  %v1240 = vld [vmem:[#allocation2 + $0x5] sm:$0xff]
  %v1241 = vld [vmem:[#allocation2 + $0xd] sm:$0xff]
  %v1242 = vld [vmem:[#allocation2 + $0x15] sm:$0xff]
  %v1243 = vld [vmem:[#allocation2 + $0x1d] sm:$0xff]
  %v1244 = vld [vmem:[#allocation2 + $0x25] sm:$0xff]
  %v1245 = vld [vmem:[#allocation2 + $0x2d] sm:$0xff]
  %v1246 = vld [vmem:[#allocation2 + $0x35] sm:$0xff]
  %v1247 = vld [vmem:[#allocation2 + $0x3d] sm:$0xff]
  %v1248 = vld [vmem:[#allocation2 + $0x45] sm:$0xff]
  %v1249 = vld [vmem:[#allocation2 + $0x4d] sm:$0xff]
  %v1250 = vld [vmem:[#allocation2 + $0x55] sm:$0xff]
  %v1251 = vld [vmem:[#allocation2 + $0x5d] sm:$0xff]
  %v1252 = vld [vmem:[#allocation2 + $0x65] sm:$0xff]
  %v1253 = vld [vmem:[#allocation2 + $0x6d] sm:$0xff]
  %v1254 = vld [vmem:[#allocation2 + $0x75] sm:$0xff]
  %s1255 = scalar_lea.vmem %s4, 160
  %v1256 = vld [vmem:[%s1255] sm:$0xff]
  %v1257 = vld [vmem:[%s1255 + $0x8] sm:$0xff]
  %v1258 = vld [vmem:[%s1255 + $0x10] sm:$0xff]
  %v1259 = vld [vmem:[%s1255 + $0x18] sm:$0xff]
  %v1261 = vsel %vm371, %v1240, 0
  %v1264 = vsel %vm371, %v1241, 0
  %v1267 = vsel %vm371, %v1242, 0
  %v1270 = vsel %vm371, %v1243, 0
  %v1273 = vsel %vm371, %v1244, 0
  %v1276 = vsel %vm371, %v1245, 0
  %v1279 = vsel %vm371, %v1246, 0
  %v1282 = vsel %vm371, %v1247, 0
  %v1285 = vsel %vm371, %v1248, 0
  %v1288 = vsel %vm371, %v1249, 0
  %v1291 = vsel %vm371, %v1250, 0
  %v1294 = vsel %vm371, %v1251, 0
  %v1297 = vsel %vm371, %v1252, 0
  %v1300 = vsel %vm371, %v1253, 0
  %v1303 = vsel %vm371, %v1254, 0
  %1305 = vmatpush.msra.mxu0 0.0
  %1306 = vmatpush.msra.mxu0 0.0
  %1307 = vmatpush.msra.mxu0 0.0
  %1308 = vmatpush.msra.mxu0 0.0
  %1309 = vmatpush.msra.mxu0 0.0
  %1310 = vmatpush.msra.mxu0 0.0
  %1311 = vmatpush.msra.mxu0 0.0
  %1312 = vmatpush.msra.mxu0 0.0
  %1313 = vmatpush.msra.mxu0 0.0
  %1314 = vmatpush.msra.mxu0 0.0
  %1315 = vmatpush.msra.mxu0 0.0
  %1316 = vmatpush.msra.mxu0 0.0
  %1317 = vmatpush.msra.mxu0 %v1259
  %1318 = vmatpush.msra.mxu0 %v1258
  %1319 = vmatpush.msra.mxu0 %v1257
  %1320 = vmatpush.msra.mxu0 %v1256
  %1321 = vmatmul.f32.gmra.mxu0 %v1261
  %v1322 = vpop.f32.mrf.mxu0
  %v1323 = vadd.f32 0.0, %v1322
  %1324 = vmatmul.f32.gmra.mxu0 %v1264
  %v1325 = vpop.f32.mrf.mxu0
  %v1326 = vadd.f32 0.0, %v1325
  %1327 = vmatmul.f32.gmra.mxu0 %v1267
  %v1328 = vpop.f32.mrf.mxu0
  %v1329 = vadd.f32 0.0, %v1328
  %1330 = vmatmul.f32.gmra.mxu0 %v1270
  %v1331 = vpop.f32.mrf.mxu0
  %v1332 = vadd.f32 0.0, %v1331
  %1333 = vmatmul.f32.gmra.mxu0 %v1273
  %v1334 = vpop.f32.mrf.mxu0
  %v1335 = vadd.f32 0.0, %v1334
  %1336 = vmatmul.f32.gmra.mxu0 %v1276
  %v1337 = vpop.f32.mrf.mxu0
  %v1338 = vadd.f32 0.0, %v1337
  %1339 = vmatmul.f32.gmra.mxu0 %v1279
  %v1340 = vpop.f32.mrf.mxu0
  %v1341 = vadd.f32 0.0, %v1340
  %1342 = vmatmul.f32.gmra.mxu0 %v1282
  %v1343 = vpop.f32.mrf.mxu0
  %v1344 = vadd.f32 0.0, %v1343
  %1345 = vmatmul.f32.gmra.mxu0 %v1285
  %v1346 = vpop.f32.mrf.mxu0
  %v1347 = vadd.f32 0.0, %v1346
  %1348 = vmatmul.f32.gmra.mxu0 %v1288
  %v1349 = vpop.f32.mrf.mxu0
  %v1350 = vadd.f32 0.0, %v1349
  %1351 = vmatmul.f32.gmra.mxu0 %v1291
  %v1352 = vpop.f32.mrf.mxu0
  %v1353 = vadd.f32 0.0, %v1352
  %1354 = vmatmul.f32.gmra.mxu0 %v1294
  %v1355 = vpop.f32.mrf.mxu0
  %v1356 = vadd.f32 0.0, %v1355
  %1357 = vmatmul.f32.gmra.mxu0 %v1297
  %v1358 = vpop.f32.mrf.mxu0
  %v1359 = vadd.f32 0.0, %v1358
  %1360 = vmatmul.f32.gmra.mxu0 %v1300
  %v1361 = vpop.f32.mrf.mxu0
  %v1362 = vadd.f32 0.0, %v1361
  %1363 = vmatmul.f32.gmra.mxu0 %v1303
  %v1364 = vpop.f32.mrf.mxu0
  %v1365 = vadd.f32 0.0, %v1364
  %1366 = vdwg.mxu0
  %v1367 = vadd.f32 %v1225, %v1323
  %v1368 = vadd.f32 %v1226, %v1326
  %v1369 = vadd.f32 %v1227, %v1329
  %v1370 = vadd.f32 %v1228, %v1332
  %v1371 = vadd.f32 %v1229, %v1335
  %v1372 = vadd.f32 %v1230, %v1338
  %v1373 = vadd.f32 %v1231, %v1341
  %v1374 = vadd.f32 %v1232, %v1344
  %v1375 = vadd.f32 %v1233, %v1347
  %v1376 = vadd.f32 %v1234, %v1350
  %v1377 = vadd.f32 %v1235, %v1353
  %v1378 = vadd.f32 %v1236, %v1356
  %v1379 = vadd.f32 %v1237, %v1359
  %v1380 = vadd.f32 %v1238, %v1362
  %v1381 = vadd.f32 %v1239, %v1365
  %v1382 = vld [vmem:[#allocation2 + $0x6] sm:$0xff]
  %v1383 = vld [vmem:[#allocation2 + $0xe] sm:$0xff]
  %v1384 = vld [vmem:[#allocation2 + $0x16] sm:$0xff]
  %v1385 = vld [vmem:[#allocation2 + $0x1e] sm:$0xff]
  %v1386 = vld [vmem:[#allocation2 + $0x26] sm:$0xff]
  %v1387 = vld [vmem:[#allocation2 + $0x2e] sm:$0xff]
  %v1388 = vld [vmem:[#allocation2 + $0x36] sm:$0xff]
  %v1389 = vld [vmem:[#allocation2 + $0x3e] sm:$0xff]
  %v1390 = vld [vmem:[#allocation2 + $0x46] sm:$0xff]
  %v1391 = vld [vmem:[#allocation2 + $0x4e] sm:$0xff]
  %v1392 = vld [vmem:[#allocation2 + $0x56] sm:$0xff]
  %v1393 = vld [vmem:[#allocation2 + $0x5e] sm:$0xff]
  %v1394 = vld [vmem:[#allocation2 + $0x66] sm:$0xff]
  %v1395 = vld [vmem:[#allocation2 + $0x6e] sm:$0xff]
  %v1396 = vld [vmem:[#allocation2 + $0x76] sm:$0xff]
  %s1397 = scalar_lea.vmem %s4, 192
  %v1398 = vld [vmem:[%s1397] sm:$0xff]
  %v1399 = vld [vmem:[%s1397 + $0x8] sm:$0xff]
  %v1400 = vld [vmem:[%s1397 + $0x10] sm:$0xff]
  %v1401 = vld [vmem:[%s1397 + $0x18] sm:$0xff]
  %v1403 = vsel %vm371, %v1382, 0
  %v1406 = vsel %vm371, %v1383, 0
  %v1409 = vsel %vm371, %v1384, 0
  %v1412 = vsel %vm371, %v1385, 0
  %v1415 = vsel %vm371, %v1386, 0
  %v1418 = vsel %vm371, %v1387, 0
  %v1421 = vsel %vm371, %v1388, 0
  %v1424 = vsel %vm371, %v1389, 0
  %v1427 = vsel %vm371, %v1390, 0
  %v1430 = vsel %vm371, %v1391, 0
  %v1433 = vsel %vm371, %v1392, 0
  %v1436 = vsel %vm371, %v1393, 0
  %v1439 = vsel %vm371, %v1394, 0
  %v1442 = vsel %vm371, %v1395, 0
  %v1445 = vsel %vm371, %v1396, 0
  %1447 = vmatpush.msra.mxu0 0.0
  %1448 = vmatpush.msra.mxu0 0.0
  %1449 = vmatpush.msra.mxu0 0.0
  %1450 = vmatpush.msra.mxu0 0.0
  %1451 = vmatpush.msra.mxu0 0.0
  %1452 = vmatpush.msra.mxu0 0.0
  %1453 = vmatpush.msra.mxu0 0.0
  %1454 = vmatpush.msra.mxu0 0.0
  %1455 = vmatpush.msra.mxu0 0.0
  %1456 = vmatpush.msra.mxu0 0.0
  %1457 = vmatpush.msra.mxu0 0.0
  %1458 = vmatpush.msra.mxu0 0.0
  %1459 = vmatpush.msra.mxu0 %v1401
  %1460 = vmatpush.msra.mxu0 %v1400
  %1461 = vmatpush.msra.mxu0 %v1399
  %1462 = vmatpush.msra.mxu0 %v1398
  %1463 = vmatmul.f32.gmra.mxu0 %v1403
  %v1464 = vpop.f32.mrf.mxu0
  %v1465 = vadd.f32 0.0, %v1464
  %1466 = vmatmul.f32.gmra.mxu0 %v1406
  %v1467 = vpop.f32.mrf.mxu0
  %v1468 = vadd.f32 0.0, %v1467
  %1469 = vmatmul.f32.gmra.mxu0 %v1409
  %v1470 = vpop.f32.mrf.mxu0
  %v1471 = vadd.f32 0.0, %v1470
  %1472 = vmatmul.f32.gmra.mxu0 %v1412
  %v1473 = vpop.f32.mrf.mxu0
  %v1474 = vadd.f32 0.0, %v1473
  %1475 = vmatmul.f32.gmra.mxu0 %v1415
  %v1476 = vpop.f32.mrf.mxu0
  %v1477 = vadd.f32 0.0, %v1476
  %1478 = vmatmul.f32.gmra.mxu0 %v1418
  %v1479 = vpop.f32.mrf.mxu0
  %v1480 = vadd.f32 0.0, %v1479
  %1481 = vmatmul.f32.gmra.mxu0 %v1421
  %v1482 = vpop.f32.mrf.mxu0
  %v1483 = vadd.f32 0.0, %v1482
  %1484 = vmatmul.f32.gmra.mxu0 %v1424
  %v1485 = vpop.f32.mrf.mxu0
  %v1486 = vadd.f32 0.0, %v1485
  %1487 = vmatmul.f32.gmra.mxu0 %v1427
  %v1488 = vpop.f32.mrf.mxu0
  %v1489 = vadd.f32 0.0, %v1488
  %1490 = vmatmul.f32.gmra.mxu0 %v1430
  %v1491 = vpop.f32.mrf.mxu0
  %v1492 = vadd.f32 0.0, %v1491
  %1493 = vmatmul.f32.gmra.mxu0 %v1433
  %v1494 = vpop.f32.mrf.mxu0
  %v1495 = vadd.f32 0.0, %v1494
  %1496 = vmatmul.f32.gmra.mxu0 %v1436
  %v1497 = vpop.f32.mrf.mxu0
  %v1498 = vadd.f32 0.0, %v1497
  %1499 = vmatmul.f32.gmra.mxu0 %v1439
  %v1500 = vpop.f32.mrf.mxu0
  %v1501 = vadd.f32 0.0, %v1500
  %1502 = vmatmul.f32.gmra.mxu0 %v1442
  %v1503 = vpop.f32.mrf.mxu0
  %v1504 = vadd.f32 0.0, %v1503
  %1505 = vmatmul.f32.gmra.mxu0 %v1445
  %v1506 = vpop.f32.mrf.mxu0
  %v1507 = vadd.f32 0.0, %v1506
  %1508 = vdwg.mxu0
  %v1509 = vadd.f32 %v1367, %v1465
  %v1510 = vadd.f32 %v1368, %v1468
  %v1511 = vadd.f32 %v1369, %v1471
  %v1512 = vadd.f32 %v1370, %v1474
  %v1513 = vadd.f32 %v1371, %v1477
  %v1514 = vadd.f32 %v1372, %v1480
  %v1515 = vadd.f32 %v1373, %v1483
  %v1516 = vadd.f32 %v1374, %v1486
  %v1517 = vadd.f32 %v1375, %v1489
  %v1518 = vadd.f32 %v1376, %v1492
  %v1519 = vadd.f32 %v1377, %v1495
  %v1520 = vadd.f32 %v1378, %v1498
  %v1521 = vadd.f32 %v1379, %v1501
  %v1522 = vadd.f32 %v1380, %v1504
  %v1523 = vadd.f32 %v1381, %v1507
  %v1524 = vld [vmem:[#allocation2 + $0x7] sm:$0xff]
  %v1525 = vld [vmem:[#allocation2 + $0xf] sm:$0xff]
  %v1526 = vld [vmem:[#allocation2 + $0x17] sm:$0xff]
  %v1527 = vld [vmem:[#allocation2 + $0x1f] sm:$0xff]
  %v1528 = vld [vmem:[#allocation2 + $0x27] sm:$0xff]
  %v1529 = vld [vmem:[#allocation2 + $0x2f] sm:$0xff]
  %v1530 = vld [vmem:[#allocation2 + $0x37] sm:$0xff]
  %v1531 = vld [vmem:[#allocation2 + $0x3f] sm:$0xff]
  %v1532 = vld [vmem:[#allocation2 + $0x47] sm:$0xff]
  %v1533 = vld [vmem:[#allocation2 + $0x4f] sm:$0xff]
  %v1534 = vld [vmem:[#allocation2 + $0x57] sm:$0xff]
  %v1535 = vld [vmem:[#allocation2 + $0x5f] sm:$0xff]
  %v1536 = vld [vmem:[#allocation2 + $0x67] sm:$0xff]
  %v1537 = vld [vmem:[#allocation2 + $0x6f] sm:$0xff]
  %v1538 = vld [vmem:[#allocation2 + $0x77] sm:$0xff]
  %s1539 = scalar_lea.vmem %s4, 224
  %v1540 = vld [vmem:[%s1539] sm:$0xff]
  %v1541 = vld [vmem:[%s1539 + $0x8] sm:$0xff]
  %v1542 = vld [vmem:[%s1539 + $0x10] sm:$0xff]
  %v1543 = vld [vmem:[%s1539 + $0x18] sm:$0xff]
  %v1545 = vsel %vm371, %v1524, 0
  %v1548 = vsel %vm371, %v1525, 0
  %v1551 = vsel %vm371, %v1526, 0
  %v1554 = vsel %vm371, %v1527, 0
  %v1557 = vsel %vm371, %v1528, 0
  %v1560 = vsel %vm371, %v1529, 0
  %v1563 = vsel %vm371, %v1530, 0
  %v1566 = vsel %vm371, %v1531, 0
  %v1569 = vsel %vm371, %v1532, 0
  %v1572 = vsel %vm371, %v1533, 0
  %v1575 = vsel %vm371, %v1534, 0
  %v1578 = vsel %vm371, %v1535, 0
  %v1581 = vsel %vm371, %v1536, 0
  %v1584 = vsel %vm371, %v1537, 0
  %v1587 = vsel %vm371, %v1538, 0
  %1589 = vmatpush.msra.mxu0 0.0
  %1590 = vmatpush.msra.mxu0 0.0
  %1591 = vmatpush.msra.mxu0 0.0
  %1592 = vmatpush.msra.mxu0 0.0
  %1593 = vmatpush.msra.mxu0 0.0
  %1594 = vmatpush.msra.mxu0 0.0
  %1595 = vmatpush.msra.mxu0 0.0
  %1596 = vmatpush.msra.mxu0 0.0
  %1597 = vmatpush.msra.mxu0 0.0
  %1598 = vmatpush.msra.mxu0 0.0
  %1599 = vmatpush.msra.mxu0 0.0
  %1600 = vmatpush.msra.mxu0 0.0
  %1601 = vmatpush.msra.mxu0 %v1543
  %1602 = vmatpush.msra.mxu0 %v1542
  %1603 = vmatpush.msra.mxu0 %v1541
  %1604 = vmatpush.msra.mxu0 %v1540
  %1605 = vmatmul.f32.gmra.mxu0 %v1545
  %v1606 = vpop.f32.mrf.mxu0
  %v1607 = vadd.f32 0.0, %v1606
  %1608 = vmatmul.f32.gmra.mxu0 %v1548
  %v1609 = vpop.f32.mrf.mxu0
  %v1610 = vadd.f32 0.0, %v1609
  %1611 = vmatmul.f32.gmra.mxu0 %v1551
  %v1612 = vpop.f32.mrf.mxu0
  %v1613 = vadd.f32 0.0, %v1612
  %1614 = vmatmul.f32.gmra.mxu0 %v1554
  %v1615 = vpop.f32.mrf.mxu0
  %v1616 = vadd.f32 0.0, %v1615
  %1617 = vmatmul.f32.gmra.mxu0 %v1557
  %v1618 = vpop.f32.mrf.mxu0
  %v1619 = vadd.f32 0.0, %v1618
  %1620 = vmatmul.f32.gmra.mxu0 %v1560
  %v1621 = vpop.f32.mrf.mxu0
  %v1622 = vadd.f32 0.0, %v1621
  %1623 = vmatmul.f32.gmra.mxu0 %v1563
  %v1624 = vpop.f32.mrf.mxu0
  %v1625 = vadd.f32 0.0, %v1624
  %1626 = vmatmul.f32.gmra.mxu0 %v1566
  %v1627 = vpop.f32.mrf.mxu0
  %v1628 = vadd.f32 0.0, %v1627
  %1629 = vmatmul.f32.gmra.mxu0 %v1569
  %v1630 = vpop.f32.mrf.mxu0
  %v1631 = vadd.f32 0.0, %v1630
  %1632 = vmatmul.f32.gmra.mxu0 %v1572
  %v1633 = vpop.f32.mrf.mxu0
  %v1634 = vadd.f32 0.0, %v1633
  %1635 = vmatmul.f32.gmra.mxu0 %v1575
  %v1636 = vpop.f32.mrf.mxu0
  %v1637 = vadd.f32 0.0, %v1636
  %1638 = vmatmul.f32.gmra.mxu0 %v1578
  %v1639 = vpop.f32.mrf.mxu0
  %v1640 = vadd.f32 0.0, %v1639
  %1641 = vmatmul.f32.gmra.mxu0 %v1581
  %v1642 = vpop.f32.mrf.mxu0
  %v1643 = vadd.f32 0.0, %v1642
  %1644 = vmatmul.f32.gmra.mxu0 %v1584
  %v1645 = vpop.f32.mrf.mxu0
  %v1646 = vadd.f32 0.0, %v1645
  %1647 = vmatmul.f32.gmra.mxu0 %v1587
  %v1648 = vpop.f32.mrf.mxu0
  %v1649 = vadd.f32 0.0, %v1648
  %1650 = vdwg.mxu0
  %v1651 = vadd.f32 %v1509, %v1607
  %v1652 = vadd.f32 %v1510, %v1610
  %v1653 = vadd.f32 %v1511, %v1613
  %v1654 = vadd.f32 %v1512, %v1616
  %v1655 = vadd.f32 %v1513, %v1619
  %v1656 = vadd.f32 %v1514, %v1622
  %v1657 = vadd.f32 %v1515, %v1625
  %v1658 = vadd.f32 %v1516, %v1628
  %v1659 = vadd.f32 %v1517, %v1631
  %v1660 = vadd.f32 %v1518, %v1634
  %v1661 = vadd.f32 %v1519, %v1637
  %v1662 = vadd.f32 %v1520, %v1640
  %v1663 = vadd.f32 %v1521, %v1643
  %v1664 = vadd.f32 %v1522, %v1646
  %v1665 = vadd.f32 %v1523, %v1649
  %vm1666 = vcmask 982016
  %v1668 = vsel %vm1666, %v78, 0
  %v1671 = vsel %vm1666, %v79, 0
  %v1674 = vsel %vm1666, %v80, 0
  %v1677 = vsel %vm1666, %v81, 0
  %1679 = vmatpush.msra.mxu0 0.0
  %1680 = vmatpush.msra.mxu0 %v1665
  %1681 = vmatpush.msra.mxu0 %v1664
  %1682 = vmatpush.msra.mxu0 %v1663
  %1683 = vmatpush.msra.mxu0 %v1662
  %1684 = vmatpush.msra.mxu0 %v1661
  %1685 = vmatpush.msra.mxu0 %v1660
  %1686 = vmatpush.msra.mxu0 %v1659
  %1687 = vmatpush.msra.mxu0 %v1658
  %1688 = vmatpush.msra.mxu0 %v1657
  %1689 = vmatpush.msra.mxu0 %v1656
  %1690 = vmatpush.msra.mxu0 %v1655
  %1691 = vmatpush.msra.mxu0 %v1654
  %1692 = vmatpush.msra.mxu0 %v1653
  %1693 = vmatpush.msra.mxu0 %v1652
  %1694 = vmatpush.msra.mxu0 %v1651
  %1695 = vmatmul.f32.gmra.mxu0 %v1668
  %v1696 = vpop.f32.mrf.mxu0
  %v1697 = vadd.f32 0.0, %v1696
  %1698 = vmatmul.f32.gmra.mxu0 %v1671
  %v1699 = vpop.f32.mrf.mxu0
  %v1700 = vadd.f32 0.0, %v1699
  %1701 = vmatmul.f32.gmra.mxu0 %v1674
  %v1702 = vpop.f32.mrf.mxu0
  %v1703 = vadd.f32 0.0, %v1702
  %1704 = vmatmul.f32.gmra.mxu0 %v1677
  %v1705 = vpop.f32.mrf.mxu0
  %v1706 = vadd.f32 0.0, %v1705
  %1707 = vdwg.mxu0
  %v1708 = vsel %vm371, %v1697, 0.0
  %v1709 = vsel %vm371, %v1700, 0.0
  %v1710 = vadd.f32 %v1708, %v1709
  %v1711 = vsel %vm371, %v1703, 0.0
  %v1712 = vadd.f32 %v1710, %v1711
  %vm1713 = vcmask 259072
  %v1714 = vsel %vm1713, %v1706, 0.0
  %v1715 = vadd.f32 %v1712, %v1714
  %1716 = vadd.xlane.f32.xlu0 %v1715
  %v1717 = vpop.xlane.xlu0 %1716
  %v1718 = vrot.slane %v1717, 4
  %v1719 = vadd.f32 %v1717, %v1718
  %v1720 = vrot.slane %v1719, 2
  %v1721 = vadd.f32 %v1719, %v1720
  %v1722 = vrot.slane %v1721, 1
  %v1723 = vadd.f32 %v1721, %v1722
  %s1724 = vtos %v1723
  %v1725 = vmul.f32 %v1697, %v1697
  %v1726 = vmul.f32 %v1700, %v1700
  %v1727 = vmul.f32 %v1703, %v1703
  %v1728 = vmul.f32 %v1706, %v1706
  %v1729 = vsel %vm371, %v1725, 0.0
  %v1730 = vsel %vm371, %v1726, 0.0
  %v1731 = vadd.f32 %v1729, %v1730
  %v1732 = vsel %vm371, %v1727, 0.0
  %v1733 = vadd.f32 %v1731, %v1732
  %v1734 = vsel %vm1713, %v1728, 0.0
  %v1735 = vadd.f32 %v1733, %v1734
  %1736 = vadd.xlane.f32.xlu0 %v1735
  %v1737 = vpop.xlane.xlu0 %1736
  %v1738 = vrot.slane %v1737, 4
  %v1739 = vadd.f32 %v1737, %v1738
  %v1740 = vrot.slane %v1739, 2
  %v1741 = vadd.f32 %v1739, %v1740
  %v1742 = vrot.slane %v1741, 1
  %v1743 = vadd.f32 %v1741, %v1742
  %s1744 = vtos %v1743
  %s1745 = smul.f32 %s1724, 0.0010416667
  %s1746 = smul.f32 %s1744, 0.0010416667
  %s1747 = smul.f32 %s1745, %s1745
  %s1748 = ssub.f32 %s1746, %s1747
  %s1749 = sadd.f32 %s1748, 1e-05
  %v1750 = vstv %s1749
  %v1751 = vrsqrt.pop %v1750
  %v1752 = vmul.f32 %v1751, %v1750
  %v1753 = vmul.f32 %v1752, %v1751
  %v1754 = vmul.f32 0.5, %v1753
  %v1755 = vsub.f32 1.5, %v1754
  %v1756 = vmul.f32 %v1751, %v1755
  %vm1757 = vweird.f32 %v1750
  %vm1758 = vweird.f32 %v1751
  %vm1759 = vmor %vm1757, %vm1758
  %v1760 = vsel %vm1759, %v1751, %v1756
  %s1761 = vtos %v1760
  %v1762 = vstv %s1761
  %v1763 = vmul.f32 %v92, %v1762
  %v1764 = vstv %s1745
  %v1765 = vmul.f32 %v1764, %v1763
  %v1766 = vsub.f32 %v93, %v1765
  %v1768 = vperm.slane %v1763, 0
  %v1770 = vmul.f32 %v1697, %v1768
  %v1771 = vmul.f32 %v1700, %v1768
  %v1772 = vmul.f32 %v1703, %v1768
  %v1773 = vmul.f32 %v1706, %v1768
  %v1775 = vperm.slane %v1766, 0
  %v1777 = vadd.f32 %v1770, %v1775
  %v1778 = vadd.f32 %v1771, %v1775
  %v1779 = vadd.f32 %v1772, %v1775
  %v1780 = vadd.f32 %v1773, %v1775
  %v1781 = vmax.f32 %v1777, 0.0
  %v1782 = vmax.f32 %v1778, 0.0
  %v1783 = vmax.f32 %v1779, 0.0
  %v1784 = vmax.f32 %v1780, 0.0
  %1785 = vst.msk [vmem:[#allocation3] sm:$0xff] %vm371, %v1781
  %1786 = vst.msk [vmem:[#allocation3 + $0x8] sm:$0xff] %vm371, %v1782
  %1787 = vst.msk [vmem:[#allocation3 + $0x10] sm:$0xff] %vm371, %v1783
  %1788 = vst.msk [vmem:[#allocation3 + $0x18] sm:$0x3f] %vm1713, %v1784
  %v1789 = vld [vmem:[#allocation3] sm:$0xff]
  %v1790 = vld [vmem:[#allocation3 + $0x8] sm:$0xff]
  %v1791 = vld [vmem:[#allocation3 + $0x10] sm:$0xff]
  %v1792 = vld [vmem:[#allocation3 + $0x18] sm:$0x7]
  %v1793 = vld [vmem:[%s7] sm:$0xff]
  %v1794 = vld [vmem:[%s7 + $0x8] sm:$0xff]
  %v1795 = vld [vmem:[%s7 + $0x10] sm:$0xff]
  %v1796 = vld [vmem:[%s7 + $0x18] sm:$0xff]
  %v1797 = vld [vmem:[#allocation3 + $0x1] sm:$0xff]
  %v1798 = vld [vmem:[#allocation3 + $0x9] sm:$0xff]
  %v1799 = vld [vmem:[#allocation3 + $0x11] sm:$0xff]
  %v1800 = vld [vmem:[#allocation3 + $0x19] sm:$0x7]
  %s1801 = scalar_lea.vmem %s7, 32
  %v1802 = vld [vmem:[%s1801] sm:$0xff]
  %v1803 = vld [vmem:[%s1801 + $0x8] sm:$0xff]
  %v1804 = vld [vmem:[%s1801 + $0x10] sm:$0xff]
  %v1805 = vld [vmem:[%s1801 + $0x18] sm:$0xff]
  %v1807 = vsel %vm371, %v1797, 0
  %v1810 = vsel %vm371, %v1798, 0
  %v1813 = vsel %vm371, %v1799, 0
  %v1816 = vsel %vm371, %v1800, 0
  %1818 = vmatpush.msra.mxu0 0.0
  %1819 = vmatpush.msra.mxu0 0.0
  %1820 = vmatpush.msra.mxu0 0.0
  %1821 = vmatpush.msra.mxu0 0.0
  %1822 = vmatpush.msra.mxu0 0.0
  %1823 = vmatpush.msra.mxu0 0.0
  %1824 = vmatpush.msra.mxu0 0.0
  %1825 = vmatpush.msra.mxu0 0.0
  %1826 = vmatpush.msra.mxu0 0.0
  %1827 = vmatpush.msra.mxu0 0.0
  %1828 = vmatpush.msra.mxu0 0.0
  %1829 = vmatpush.msra.mxu0 0.0
  %1830 = vmatpush.msra.mxu0 %v1805
  %1831 = vmatpush.msra.mxu0 %v1804
  %1832 = vmatpush.msra.mxu0 %v1803
  %1833 = vmatpush.msra.mxu0 %v1802
  %1834 = vmatmul.f32.gmra.mxu0 %v1807
  %v1835 = vpop.f32.mrf.mxu0
  %v1836 = vadd.f32 0.0, %v1835
  %1837 = vmatmul.f32.gmra.mxu0 %v1810
  %v1838 = vpop.f32.mrf.mxu0
  %v1839 = vadd.f32 0.0, %v1838
  %1840 = vmatmul.f32.gmra.mxu0 %v1813
  %v1841 = vpop.f32.mrf.mxu0
  %v1842 = vadd.f32 0.0, %v1841
  %1843 = vmatmul.f32.gmra.mxu0 %v1816
  %v1844 = vpop.f32.mrf.mxu0
  %v1845 = vadd.f32 0.0, %v1844
  %1846 = vdwg.mxu0
  %v1848 = vsel %vm371, %v1789, 0
  %v1851 = vsel %vm371, %v1790, 0
  %v1854 = vsel %vm371, %v1791, 0
  %v1857 = vsel %vm371, %v1792, 0
  %1859 = vmatpush.msra.mxu0 0.0
  %1860 = vmatpush.msra.mxu0 0.0
  %1861 = vmatpush.msra.mxu0 0.0
  %1862 = vmatpush.msra.mxu0 0.0
  %1863 = vmatpush.msra.mxu0 0.0
  %1864 = vmatpush.msra.mxu0 0.0
  %1865 = vmatpush.msra.mxu0 0.0
  %1866 = vmatpush.msra.mxu0 0.0
  %1867 = vmatpush.msra.mxu0 0.0
  %1868 = vmatpush.msra.mxu0 0.0
  %1869 = vmatpush.msra.mxu0 0.0
  %1870 = vmatpush.msra.mxu0 0.0
  %1871 = vmatpush.msra.mxu0 %v1796
  %1872 = vmatpush.msra.mxu0 %v1795
  %1873 = vmatpush.msra.mxu0 %v1794
  %1874 = vmatpush.msra.mxu0 %v1793
  %1875 = vmatmul.f32.gmra.mxu0 %v1848
  %v1876 = vpop.f32.mrf.mxu0
  %v1877 = vadd.f32 %v1836, %v1876
  %1878 = vmatmul.f32.gmra.mxu0 %v1851
  %v1879 = vpop.f32.mrf.mxu0
  %v1880 = vadd.f32 %v1839, %v1879
  %1881 = vmatmul.f32.gmra.mxu0 %v1854
  %v1882 = vpop.f32.mrf.mxu0
  %v1883 = vadd.f32 %v1842, %v1882
  %1884 = vmatmul.f32.gmra.mxu0 %v1857
  %v1885 = vpop.f32.mrf.mxu0
  %v1886 = vadd.f32 %v1845, %v1885
  %1887 = vdwg.mxu0
  %v1888 = vld [vmem:[#allocation3 + $0x2] sm:$0xff]
  %v1889 = vld [vmem:[#allocation3 + $0xa] sm:$0xff]
  %v1890 = vld [vmem:[#allocation3 + $0x12] sm:$0xff]
  %v1891 = vld [vmem:[#allocation3 + $0x1a] sm:$0x7]
  %s1892 = scalar_lea.vmem %s7, 64
  %v1893 = vld [vmem:[%s1892] sm:$0xff]
  %v1894 = vld [vmem:[%s1892 + $0x8] sm:$0xff]
  %v1895 = vld [vmem:[%s1892 + $0x10] sm:$0xff]
  %v1896 = vld [vmem:[%s1892 + $0x18] sm:$0xff]
  %v1898 = vsel %vm371, %v1888, 0
  %v1901 = vsel %vm371, %v1889, 0
  %v1904 = vsel %vm371, %v1890, 0
  %v1907 = vsel %vm371, %v1891, 0
  %1909 = vmatpush.msra.mxu0 0.0
  %1910 = vmatpush.msra.mxu0 0.0
  %1911 = vmatpush.msra.mxu0 0.0
  %1912 = vmatpush.msra.mxu0 0.0
  %1913 = vmatpush.msra.mxu0 0.0
  %1914 = vmatpush.msra.mxu0 0.0
  %1915 = vmatpush.msra.mxu0 0.0
  %1916 = vmatpush.msra.mxu0 0.0
  %1917 = vmatpush.msra.mxu0 0.0
  %1918 = vmatpush.msra.mxu0 0.0
  %1919 = vmatpush.msra.mxu0 0.0
  %1920 = vmatpush.msra.mxu0 0.0
  %1921 = vmatpush.msra.mxu0 %v1896
  %1922 = vmatpush.msra.mxu0 %v1895
  %1923 = vmatpush.msra.mxu0 %v1894
  %1924 = vmatpush.msra.mxu0 %v1893
  %1925 = vmatmul.f32.gmra.mxu0 %v1898
  %v1926 = vpop.f32.mrf.mxu0
  %v1927 = vadd.f32 0.0, %v1926
  %1928 = vmatmul.f32.gmra.mxu0 %v1901
  %v1929 = vpop.f32.mrf.mxu0
  %v1930 = vadd.f32 0.0, %v1929
  %1931 = vmatmul.f32.gmra.mxu0 %v1904
  %v1932 = vpop.f32.mrf.mxu0
  %v1933 = vadd.f32 0.0, %v1932
  %1934 = vmatmul.f32.gmra.mxu0 %v1907
  %v1935 = vpop.f32.mrf.mxu0
  %v1936 = vadd.f32 0.0, %v1935
  %1937 = vdwg.mxu0
  %v1938 = vadd.f32 %v1877, %v1927
  %v1939 = vadd.f32 %v1880, %v1930
  %v1940 = vadd.f32 %v1883, %v1933
  %v1941 = vadd.f32 %v1886, %v1936
  %v1942 = vld [vmem:[#allocation3 + $0x3] sm:$0xff]
  %v1943 = vld [vmem:[#allocation3 + $0xb] sm:$0xff]
  %v1944 = vld [vmem:[#allocation3 + $0x13] sm:$0xff]
  %v1945 = vld [vmem:[#allocation3 + $0x1b] sm:$0x7]
  %s1946 = scalar_lea.vmem %s7, 96
  %v1947 = vld [vmem:[%s1946] sm:$0xff]
  %v1948 = vld [vmem:[%s1946 + $0x8] sm:$0xff]
  %v1949 = vld [vmem:[%s1946 + $0x10] sm:$0xff]
  %v1950 = vld [vmem:[%s1946 + $0x18] sm:$0xff]
  %v1952 = vsel %vm371, %v1942, 0
  %v1955 = vsel %vm371, %v1943, 0
  %v1958 = vsel %vm371, %v1944, 0
  %v1961 = vsel %vm371, %v1945, 0
  %1963 = vmatpush.msra.mxu0 0.0
  %1964 = vmatpush.msra.mxu0 0.0
  %1965 = vmatpush.msra.mxu0 0.0
  %1966 = vmatpush.msra.mxu0 0.0
  %1967 = vmatpush.msra.mxu0 0.0
  %1968 = vmatpush.msra.mxu0 0.0
  %1969 = vmatpush.msra.mxu0 0.0
  %1970 = vmatpush.msra.mxu0 0.0
  %1971 = vmatpush.msra.mxu0 0.0
  %1972 = vmatpush.msra.mxu0 0.0
  %1973 = vmatpush.msra.mxu0 0.0
  %1974 = vmatpush.msra.mxu0 0.0
  %1975 = vmatpush.msra.mxu0 %v1950
  %1976 = vmatpush.msra.mxu0 %v1949
  %1977 = vmatpush.msra.mxu0 %v1948
  %1978 = vmatpush.msra.mxu0 %v1947
  %1979 = vmatmul.f32.gmra.mxu0 %v1952
  %v1980 = vpop.f32.mrf.mxu0
  %v1981 = vadd.f32 0.0, %v1980
  %1982 = vmatmul.f32.gmra.mxu0 %v1955
  %v1983 = vpop.f32.mrf.mxu0
  %v1984 = vadd.f32 0.0, %v1983
  %1985 = vmatmul.f32.gmra.mxu0 %v1958
  %v1986 = vpop.f32.mrf.mxu0
  %v1987 = vadd.f32 0.0, %v1986
  %1988 = vmatmul.f32.gmra.mxu0 %v1961
  %v1989 = vpop.f32.mrf.mxu0
  %v1990 = vadd.f32 0.0, %v1989
  %1991 = vdwg.mxu0
  %v1992 = vadd.f32 %v1938, %v1981
  %v1993 = vadd.f32 %v1939, %v1984
  %v1994 = vadd.f32 %v1940, %v1987
  %v1995 = vadd.f32 %v1941, %v1990
  %vm1996 = vcmask 220160
  %v1998 = vsel %vm1996, %v88, 0
  %v2001 = vsel %vm1996, %v89, 0
  %vm2003 = vcmask 1042432
  %v2005 = vsel %vm2003, %v1995, 0
  %2007 = vmatpush.msra.mxu0 0.0
  %2008 = vmatpush.msra.mxu0 0.0
  %2009 = vmatpush.msra.mxu0 0.0
  %2010 = vmatpush.msra.mxu0 0.0
  %2011 = vmatpush.msra.mxu0 0.0
  %2012 = vmatpush.msra.mxu0 0.0
  %2013 = vmatpush.msra.mxu0 0.0
  %2014 = vmatpush.msra.mxu0 0.0
  %2015 = vmatpush.msra.mxu0 0.0
  %2016 = vmatpush.msra.mxu0 0.0
  %2017 = vmatpush.msra.mxu0 0.0
  %2018 = vmatpush.msra.mxu0 0.0
  %2019 = vmatpush.msra.mxu0 %v2005
  %2020 = vmatpush.msra.mxu0 %v1994
  %2021 = vmatpush.msra.mxu0 %v1993
  %2022 = vmatpush.msra.mxu0 %v1992
  %2023 = vmatmul.f32.gmra.mxu0 %v1998
  %v2024 = vpop.f32.mrf.mxu0
  %v2025 = vadd.f32 0.0, %v2024
  %2026 = vmatmul.f32.gmra.mxu0 %v2001
  %v2027 = vpop.f32.mrf.mxu0
  %v2028 = vadd.f32 0.0, %v2027
  %2029 = vdwg.mxu0
  %v2030 = vsel %vm371, %v2025, 0.0
  %v2031 = vsel %vm1713, %v2028, 0.0
  %v2032 = vadd.f32 %v2030, %v2031
  %2033 = vadd.xlane.f32.xlu0 %v2032
  %v2034 = vpop.xlane.xlu0 %2033
  %v2035 = vrot.slane %v2034, 4
  %v2036 = vadd.f32 %v2034, %v2035
  %v2037 = vrot.slane %v2036, 2
  %v2038 = vadd.f32 %v2036, %v2037
  %v2039 = vrot.slane %v2038, 1
  %v2040 = vadd.f32 %v2038, %v2039
  %s2041 = vtos %v2040
  %v2042 = vmul.f32 %v2025, %v2025
  %v2043 = vmul.f32 %v2028, %v2028
  %v2044 = vsel %vm371, %v2042, 0.0
  %v2045 = vsel %vm1713, %v2043, 0.0
  %v2046 = vadd.f32 %v2044, %v2045
  %2047 = vadd.xlane.f32.xlu0 %v2046
  %v2048 = vpop.xlane.xlu0 %2047
  %v2049 = vrot.slane %v2048, 4
  %v2050 = vadd.f32 %v2048, %v2049
  %v2051 = vrot.slane %v2050, 2
  %v2052 = vadd.f32 %v2050, %v2051
  %v2053 = vrot.slane %v2052, 1
  %v2054 = vadd.f32 %v2052, %v2053
  %s2055 = vtos %v2054
  %s2056 = smul.f32 %s2041, 0.002232143
  %s2057 = smul.f32 %s2055, 0.002232143
  %s2058 = smul.f32 %s2056, %s2056
  %s2059 = ssub.f32 %s2057, %s2058
  %s2060 = sadd.f32 %s2059, 1e-05
  %v2061 = vstv %s2060
  %v2062 = vrsqrt.pop %v2061
  %v2063 = vmul.f32 %v2062, %v2061
  %v2064 = vmul.f32 %v2063, %v2062
  %v2065 = vmul.f32 0.5, %v2064
  %v2066 = vsub.f32 1.5, %v2065
  %v2067 = vmul.f32 %v2062, %v2066
  %vm2068 = vweird.f32 %v2061
  %vm2069 = vweird.f32 %v2062
  %vm2070 = vmor %vm2068, %vm2069
  %v2071 = vsel %vm2070, %v2062, %v2067
  %s2072 = vtos %v2071
  %v2073 = vstv %s2072
  %v2074 = vmul.f32 %v94, %v2073
  %v2075 = vstv %s2056
  %v2076 = vmul.f32 %v2075, %v2074
  %v2077 = vsub.f32 %v95, %v2076
  %v2079 = vperm.slane %v2074, 0
  %v2081 = vmul.f32 %v2025, %v2079
  %v2082 = vmul.f32 %v2028, %v2079
  %v2084 = vperm.slane %v2077, 0
  %v2086 = vadd.f32 %v2081, %v2084
  %v2087 = vadd.f32 %v2082, %v2084
  %v2088 = vmax.f32 %v2086, 0.0
  %v2089 = vmax.f32 %v2087, 0.0
  %2090 = vst.msk [vmem:[#allocation4 + $0x2] sm:$0xff] %vm371, %v2088
  %2091 = vst.msk [vmem:[#allocation4 + $0xa] sm:$0x3f] %vm1713, %v2089
  %vm2092 = vcmask 253952
  %2093 = vst.msk [vmem:[#allocation4] sm:$0x1] %vm2092, %v2088
  %2094 = vst.msk [vmem:[#allocation4 + $0x1] sm:$0x1] %vm2092, %v2088
  %v2095 = vld [vmem:[#allocation4] sm:$0xff]
  %v2096 = vld [vmem:[#allocation4 + $0x8] sm:$0x3f]
  %v2097 = vld [vmem:[%s10] sm:$0xff]
  %v2098 = vld [vmem:[%s10 + $0x8] sm:$0xff]
  %v2099 = vld [vmem:[%s10 + $0x10] sm:$0xff]
  %v2100 = vld [vmem:[%s10 + $0x18] sm:$0xff]
  %v2101 = vld [vmem:[#allocation4 + $0x1] sm:$0xff]
  %v2102 = vld [vmem:[#allocation4 + $0x9] sm:$0x3f]
  %s2103 = scalar_lea.vmem %s10, 32
  %v2104 = vld [vmem:[%s2103] sm:$0xff]
  %v2105 = vld [vmem:[%s2103 + $0x8] sm:$0xff]
  %v2106 = vld [vmem:[%s2103 + $0x10] sm:$0xff]
  %v2107 = vld [vmem:[%s2103 + $0x18] sm:$0xff]
  %v2109 = vsel %vm371, %v2101, 0
  %v2112 = vsel %vm371, %v2102, 0
  %2114 = vmatpush.msra.mxu0 0.0
  %2115 = vmatpush.msra.mxu0 0.0
  %2116 = vmatpush.msra.mxu0 0.0
  %2117 = vmatpush.msra.mxu0 0.0
  %2118 = vmatpush.msra.mxu0 0.0
  %2119 = vmatpush.msra.mxu0 0.0
  %2120 = vmatpush.msra.mxu0 0.0
  %2121 = vmatpush.msra.mxu0 0.0
  %2122 = vmatpush.msra.mxu0 0.0
  %2123 = vmatpush.msra.mxu0 0.0
  %2124 = vmatpush.msra.mxu0 0.0
  %2125 = vmatpush.msra.mxu0 0.0
  %2126 = vmatpush.msra.mxu0 %v2107
  %2127 = vmatpush.msra.mxu0 %v2106
  %2128 = vmatpush.msra.mxu0 %v2105
  %2129 = vmatpush.msra.mxu0 %v2104
  %2130 = vmatmul.f32.gmra.mxu0 %v2109
  %v2131 = vpop.f32.mrf.mxu0
  %v2132 = vadd.f32 0.0, %v2131
  %2133 = vmatmul.f32.gmra.mxu0 %v2112
  %v2134 = vpop.f32.mrf.mxu0
  %v2135 = vadd.f32 0.0, %v2134
  %2136 = vdwg.mxu0
  %v2138 = vsel %vm371, %v2095, 0
  %v2141 = vsel %vm371, %v2096, 0
  %2143 = vmatpush.msra.mxu0 0.0
  %2144 = vmatpush.msra.mxu0 0.0
  %2145 = vmatpush.msra.mxu0 0.0
  %2146 = vmatpush.msra.mxu0 0.0
  %2147 = vmatpush.msra.mxu0 0.0
  %2148 = vmatpush.msra.mxu0 0.0
  %2149 = vmatpush.msra.mxu0 0.0
  %2150 = vmatpush.msra.mxu0 0.0
  %2151 = vmatpush.msra.mxu0 0.0
  %2152 = vmatpush.msra.mxu0 0.0
  %2153 = vmatpush.msra.mxu0 0.0
  %2154 = vmatpush.msra.mxu0 0.0
  %2155 = vmatpush.msra.mxu0 %v2100
  %2156 = vmatpush.msra.mxu0 %v2099
  %2157 = vmatpush.msra.mxu0 %v2098
  %2158 = vmatpush.msra.mxu0 %v2097
  %2159 = vmatmul.f32.gmra.mxu0 %v2138
  %v2160 = vpop.f32.mrf.mxu0
  %v2161 = vadd.f32 %v2132, %v2160
  %2162 = vmatmul.f32.gmra.mxu0 %v2141
  %v2163 = vpop.f32.mrf.mxu0
  %v2164 = vadd.f32 %v2135, %v2163
  %2165 = vdwg.mxu0
  %v2166 = vld [vmem:[#allocation4 + $0x2] sm:$0xff]
  %v2167 = vld [vmem:[#allocation4 + $0xa] sm:$0x3f]
  %s2168 = scalar_lea.vmem %s10, 64
  %v2169 = vld [vmem:[%s2168] sm:$0xff]
  %v2170 = vld [vmem:[%s2168 + $0x8] sm:$0xff]
  %v2171 = vld [vmem:[%s2168 + $0x10] sm:$0xff]
  %v2172 = vld [vmem:[%s2168 + $0x18] sm:$0xff]
  %v2174 = vsel %vm371, %v2166, 0
  %v2177 = vsel %vm371, %v2167, 0
  %2179 = vmatpush.msra.mxu0 0.0
  %2180 = vmatpush.msra.mxu0 0.0
  %2181 = vmatpush.msra.mxu0 0.0
  %2182 = vmatpush.msra.mxu0 0.0
  %2183 = vmatpush.msra.mxu0 0.0
  %2184 = vmatpush.msra.mxu0 0.0
  %2185 = vmatpush.msra.mxu0 0.0
  %2186 = vmatpush.msra.mxu0 0.0
  %2187 = vmatpush.msra.mxu0 0.0
  %2188 = vmatpush.msra.mxu0 0.0
  %2189 = vmatpush.msra.mxu0 0.0
  %2190 = vmatpush.msra.mxu0 0.0
  %2191 = vmatpush.msra.mxu0 %v2172
  %2192 = vmatpush.msra.mxu0 %v2171
  %2193 = vmatpush.msra.mxu0 %v2170
  %2194 = vmatpush.msra.mxu0 %v2169
  %2195 = vmatmul.f32.gmra.mxu0 %v2174
  %v2196 = vpop.f32.mrf.mxu0
  %v2197 = vadd.f32 0.0, %v2196
  %2198 = vmatmul.f32.gmra.mxu0 %v2177
  %v2199 = vpop.f32.mrf.mxu0
  %v2200 = vadd.f32 0.0, %v2199
  %2201 = vdwg.mxu0
  %v2202 = vadd.f32 %v2161, %v2197
  %v2203 = vadd.f32 %v2164, %v2200
  %v2205 = vperm.slane %v96, 0
  %v2207 = vadd.f32 %v2202, %v2205
  %v2208 = vadd.f32 %v2203, %v2205
  %v2209 = vsel %vm371, %v2207, 0.0
  %v2210 = vsel %vm1713, %v2208, 0.0
  %v2211 = vadd.f32 %v2209, %v2210
  %2212 = vadd.xlane.f32.xlu0 %v2211
  %v2213 = vpop.xlane.xlu0 %2212
  %v2214 = vrot.slane %v2213, 4
  %v2215 = vadd.f32 %v2213, %v2214
  %v2216 = vrot.slane %v2215, 2
  %v2217 = vadd.f32 %v2215, %v2216
  %v2218 = vrot.slane %v2217, 1
  %v2219 = vadd.f32 %v2217, %v2218
  %s2220 = vtos %v2219
  %v2221 = vmul.f32 %v2207, %v2207
  %v2222 = vmul.f32 %v2208, %v2208
  %v2223 = vsel %vm371, %v2221, 0.0
  %v2224 = vsel %vm1713, %v2222, 0.0
  %v2225 = vadd.f32 %v2223, %v2224
  %2226 = vadd.xlane.f32.xlu0 %v2225
  %v2227 = vpop.xlane.xlu0 %2226
  %v2228 = vrot.slane %v2227, 4
  %v2229 = vadd.f32 %v2227, %v2228
  %v2230 = vrot.slane %v2229, 2
  %v2231 = vadd.f32 %v2229, %v2230
  %v2232 = vrot.slane %v2231, 1
  %v2233 = vadd.f32 %v2231, %v2232
  %s2234 = vtos %v2233
  %s2235 = smul.f32 %s2220, 0.002232143
  %s2236 = smul.f32 %s2234, 0.002232143
  %s2237 = smul.f32 %s2235, %s2235
  %s2238 = ssub.f32 %s2236, %s2237
  %s2239 = sadd.f32 %s2238, 1e-05
  %v2240 = vstv %s2239
  %v2241 = vrsqrt.pop %v2240
  %v2242 = vmul.f32 %v2241, %v2240
  %v2243 = vmul.f32 %v2242, %v2241
  %v2244 = vmul.f32 0.5, %v2243
  %v2245 = vsub.f32 1.5, %v2244
  %v2246 = vmul.f32 %v2241, %v2245
  %vm2247 = vweird.f32 %v2240
  %vm2248 = vweird.f32 %v2241
  %vm2249 = vmor %vm2247, %vm2248
  %v2250 = vsel %vm2249, %v2241, %v2246
  %s2251 = vtos %v2250
  %v2252 = vstv %s2251
  %v2253 = vmul.f32 %v97, %v2252
  %v2254 = vstv %s2235
  %v2255 = vmul.f32 %v2254, %v2253
  %v2256 = vsub.f32 %v98, %v2255
  %v2258 = vperm.slane %v2253, 0
  %v2260 = vmul.f32 %v2207, %v2258
  %v2261 = vmul.f32 %v2208, %v2258
  %v2263 = vperm.slane %v2256, 0
  %v2265 = vadd.f32 %v2260, %v2263
  %v2266 = vadd.f32 %v2261, %v2263
  %v2267 = vmax.f32 %v2265, 0.0
  %v2268 = vmax.f32 %v2266, 0.0
  %2269 = vst.msk [vmem:[#allocation5 + $0x2] sm:$0xff] %vm371, %v2267
  %2270 = vst.msk [vmem:[#allocation5 + $0xa] sm:$0x3f] %vm1713, %v2268
  %2271 = vst.msk [vmem:[#allocation5] sm:$0x1] %vm2092, %v2267
  %2272 = vst.msk [vmem:[#allocation5 + $0x1] sm:$0x1] %vm2092, %v2267
  %v2273 = vld [vmem:[#allocation5] sm:$0xff]
  %v2274 = vld [vmem:[#allocation5 + $0x8] sm:$0x3f]
  %v2275 = vld [vmem:[%s14] sm:$0xff]
  %v2276 = vld [vmem:[%s14 + $0x8] sm:$0xff]
  %v2277 = vld [vmem:[%s14 + $0x10] sm:$0xff]
  %v2278 = vld [vmem:[%s14 + $0x18] sm:$0xff]
  %v2279 = vld [vmem:[#allocation5 + $0x1] sm:$0xff]
  %v2280 = vld [vmem:[#allocation5 + $0x9] sm:$0x3f]
  %s2281 = scalar_lea.vmem %s14, 32
  %v2282 = vld [vmem:[%s2281] sm:$0xff]
  %v2283 = vld [vmem:[%s2281 + $0x8] sm:$0xff]
  %v2284 = vld [vmem:[%s2281 + $0x10] sm:$0xff]
  %v2285 = vld [vmem:[%s2281 + $0x18] sm:$0xff]
  %v2287 = vsel %vm371, %v2279, 0
  %v2290 = vsel %vm371, %v2280, 0
  %2292 = vmatpush.msra.mxu0 0.0
  %2293 = vmatpush.msra.mxu0 0.0
  %2294 = vmatpush.msra.mxu0 0.0
  %2295 = vmatpush.msra.mxu0 0.0
  %2296 = vmatpush.msra.mxu0 0.0
  %2297 = vmatpush.msra.mxu0 0.0
  %2298 = vmatpush.msra.mxu0 0.0
  %2299 = vmatpush.msra.mxu0 0.0
  %2300 = vmatpush.msra.mxu0 0.0
  %2301 = vmatpush.msra.mxu0 0.0
  %2302 = vmatpush.msra.mxu0 0.0
  %2303 = vmatpush.msra.mxu0 0.0
  %2304 = vmatpush.msra.mxu0 %v2285
  %2305 = vmatpush.msra.mxu0 %v2284
  %2306 = vmatpush.msra.mxu0 %v2283
  %2307 = vmatpush.msra.mxu0 %v2282
  %2308 = vmatmul.f32.gmra.mxu0 %v2287
  %v2309 = vpop.f32.mrf.mxu0
  %v2310 = vadd.f32 0.0, %v2309
  %2311 = vmatmul.f32.gmra.mxu0 %v2290
  %v2312 = vpop.f32.mrf.mxu0
  %v2313 = vadd.f32 0.0, %v2312
  %2314 = vdwg.mxu0
  %v2316 = vsel %vm371, %v2273, 0
  %v2319 = vsel %vm371, %v2274, 0
  %2321 = vmatpush.msra.mxu0 0.0
  %2322 = vmatpush.msra.mxu0 0.0
  %2323 = vmatpush.msra.mxu0 0.0
  %2324 = vmatpush.msra.mxu0 0.0
  %2325 = vmatpush.msra.mxu0 0.0
  %2326 = vmatpush.msra.mxu0 0.0
  %2327 = vmatpush.msra.mxu0 0.0
  %2328 = vmatpush.msra.mxu0 0.0
  %2329 = vmatpush.msra.mxu0 0.0
  %2330 = vmatpush.msra.mxu0 0.0
  %2331 = vmatpush.msra.mxu0 0.0
  %2332 = vmatpush.msra.mxu0 0.0
  %2333 = vmatpush.msra.mxu0 %v2278
  %2334 = vmatpush.msra.mxu0 %v2277
  %2335 = vmatpush.msra.mxu0 %v2276
  %2336 = vmatpush.msra.mxu0 %v2275
  %2337 = vmatmul.f32.gmra.mxu0 %v2316
  %v2338 = vpop.f32.mrf.mxu0
  %v2339 = vadd.f32 %v2310, %v2338
  %2340 = vmatmul.f32.gmra.mxu0 %v2319
  %v2341 = vpop.f32.mrf.mxu0
  %v2342 = vadd.f32 %v2313, %v2341
  %2343 = vdwg.mxu0
  %v2344 = vld [vmem:[#allocation5 + $0x2] sm:$0xff]
  %v2345 = vld [vmem:[#allocation5 + $0xa] sm:$0x3f]
  %s2346 = scalar_lea.vmem %s14, 64
  %v2347 = vld [vmem:[%s2346] sm:$0xff]
  %v2348 = vld [vmem:[%s2346 + $0x8] sm:$0xff]
  %v2349 = vld [vmem:[%s2346 + $0x10] sm:$0xff]
  %v2350 = vld [vmem:[%s2346 + $0x18] sm:$0xff]
  %v2352 = vsel %vm371, %v2344, 0
  %v2355 = vsel %vm371, %v2345, 0
  %2357 = vmatpush.msra.mxu0 0.0
  %2358 = vmatpush.msra.mxu0 0.0
  %2359 = vmatpush.msra.mxu0 0.0
  %2360 = vmatpush.msra.mxu0 0.0
  %2361 = vmatpush.msra.mxu0 0.0
  %2362 = vmatpush.msra.mxu0 0.0
  %2363 = vmatpush.msra.mxu0 0.0
  %2364 = vmatpush.msra.mxu0 0.0
  %2365 = vmatpush.msra.mxu0 0.0
  %2366 = vmatpush.msra.mxu0 0.0
  %2367 = vmatpush.msra.mxu0 0.0
  %2368 = vmatpush.msra.mxu0 0.0
  %2369 = vmatpush.msra.mxu0 %v2350
  %2370 = vmatpush.msra.mxu0 %v2349
  %2371 = vmatpush.msra.mxu0 %v2348
  %2372 = vmatpush.msra.mxu0 %v2347
  %2373 = vmatmul.f32.gmra.mxu0 %v2352
  %v2374 = vpop.f32.mrf.mxu0
  %v2375 = vadd.f32 0.0, %v2374
  %2376 = vmatmul.f32.gmra.mxu0 %v2355
  %v2377 = vpop.f32.mrf.mxu0
  %v2378 = vadd.f32 0.0, %v2377
  %2379 = vdwg.mxu0
  %v2380 = vadd.f32 %v2339, %v2375
  %v2381 = vadd.f32 %v2342, %v2378
  %v2383 = vperm.slane %v99, 0
  %v2385 = vadd.f32 %v2380, %v2383
  %v2386 = vadd.f32 %v2381, %v2383
  %v2387 = vsel %vm371, %v2385, 0.0
  %v2388 = vsel %vm1713, %v2386, 0.0
  %v2389 = vadd.f32 %v2387, %v2388
  %2390 = vadd.xlane.f32.xlu0 %v2389
  %v2391 = vpop.xlane.xlu0 %2390
  %v2392 = vrot.slane %v2391, 4
  %v2393 = vadd.f32 %v2391, %v2392
  %v2394 = vrot.slane %v2393, 2
  %v2395 = vadd.f32 %v2393, %v2394
  %v2396 = vrot.slane %v2395, 1
  %v2397 = vadd.f32 %v2395, %v2396
  %s2398 = vtos %v2397
  %v2399 = vmul.f32 %v2385, %v2385
  %v2400 = vmul.f32 %v2386, %v2386
  %v2401 = vsel %vm371, %v2399, 0.0
  %v2402 = vsel %vm1713, %v2400, 0.0
  %v2403 = vadd.f32 %v2401, %v2402
  %2404 = vadd.xlane.f32.xlu0 %v2403
  %v2405 = vpop.xlane.xlu0 %2404
  %v2406 = vrot.slane %v2405, 4
  %v2407 = vadd.f32 %v2405, %v2406
  %v2408 = vrot.slane %v2407, 2
  %v2409 = vadd.f32 %v2407, %v2408
  %v2410 = vrot.slane %v2409, 1
  %v2411 = vadd.f32 %v2409, %v2410
  %s2412 = vtos %v2411
  %s2413 = smul.f32 %s2398, 0.002232143
  %s2414 = smul.f32 %s2412, 0.002232143
  %s2415 = smul.f32 %s2413, %s2413
  %s2416 = ssub.f32 %s2414, %s2415
  %s2417 = sadd.f32 %s2416, 1e-05
  %v2418 = vstv %s2417
  %v2419 = vrsqrt.pop %v2418
  %v2420 = vmul.f32 %v2419, %v2418
  %v2421 = vmul.f32 %v2420, %v2419
  %v2422 = vmul.f32 0.5, %v2421
  %v2423 = vsub.f32 1.5, %v2422
  %v2424 = vmul.f32 %v2419, %v2423
  %vm2425 = vweird.f32 %v2418
  %vm2426 = vweird.f32 %v2419
  %vm2427 = vmor %vm2425, %vm2426
  %v2428 = vsel %vm2427, %v2419, %v2424
  %s2429 = vtos %v2428
  %v2430 = vstv %s2429
  %v2431 = vmul.f32 %v100, %v2430
  %v2432 = vstv %s2413
  %v2433 = vmul.f32 %v2432, %v2431
  %v2434 = vsub.f32 %v101, %v2433
  %v2436 = vperm.slane %v2431, 0
  %v2438 = vmul.f32 %v2385, %v2436
  %v2439 = vmul.f32 %v2386, %v2436
  %v2441 = vperm.slane %v2434, 0
  %v2443 = vadd.f32 %v2438, %v2441
  %v2444 = vadd.f32 %v2439, %v2441
  %v2445 = vmax.f32 %v2443, 0.0
  %v2446 = vmax.f32 %v2444, 0.0
  %2447 = vst.msk [vmem:[%s18] sm:$0xff] %vm371, %v2445
  %2448 = vst.msk [vmem:[%s18 + $0x8] sm:$0x3f] %vm1713, %v2446
  %v2449 = vsel %vm371, %v2445, 0.0
  %v2450 = vsel %vm1713, %v2446, 0.0
  %v2451 = vadd.f32 %v2449, %v2450
  %2452 = vadd.xlane.f32.xlu0 %v2451
  %v2453 = vpop.xlane.xlu0 %2452
  %v2454 = vrot.slane %v2453, 4
  %v2455 = vadd.f32 %v2453, %v2454
  %v2456 = vrot.slane %v2455, 2
  %v2457 = vadd.f32 %v2455, %v2456
  %v2458 = vrot.slane %v2457, 1
  %v2459 = vadd.f32 %v2457, %v2458
  %s2460 = vtos %v2459
  %s2461 = sadd.f32 %s2460, 0.0
  %v2462 = vmul.f32 %v2445, %v2445
  %v2463 = vmul.f32 %v2446, %v2446
  %v2464 = vsel %vm371, %v2462, 0.0
  %v2465 = vsel %vm1713, %v2463, 0.0
  %v2466 = vadd.f32 %v2464, %v2465
  %2467 = vadd.xlane.f32.xlu0 %v2466
  %v2468 = vpop.xlane.xlu0 %2467
  %v2469 = vrot.slane %v2468, 4
  %v2470 = vadd.f32 %v2468, %v2469
  %v2471 = vrot.slane %v2470, 2
  %v2472 = vadd.f32 %v2470, %v2471
  %v2473 = vrot.slane %v2472, 1
  %v2474 = vadd.f32 %v2472, %v2473
  %s2475 = vtos %v2474
  %s2476 = sadd.f32 %s2475, 0.0
  %s2477 = scalar_lea.vmem %s0, 128
  %v2478 = vld [vmem:[%s2477] sm:$0xff]
  %v2479 = vld [vmem:[%s2477 + $0x8] sm:$0xff]
  %v2480 = vld [vmem:[%s2477 + $0x10] sm:$0xff]
  %v2481 = vld [vmem:[%s2477 + $0x18] sm:$0xff]
  %v2482 = vld [vmem:[%s2477 + $0x20] sm:$0xff]
  %v2483 = vld [vmem:[%s2477 + $0x28] sm:$0xff]
  %v2484 = vld [vmem:[%s2477 + $0x30] sm:$0xff]
  %v2485 = vld [vmem:[%s2477 + $0x38] sm:$0xff]
  %v2486 = vld [vmem:[%s2477 + $0x40] sm:$0xff]
  %v2487 = vld [vmem:[%s2477 + $0x48] sm:$0xff]
  %v2488 = vld [vmem:[%s2477 + $0x50] sm:$0xff]
  %v2489 = vld [vmem:[%s2477 + $0x58] sm:$0xff]
  %v2490 = vld [vmem:[%s2477 + $0x60] sm:$0xff]
  %v2491 = vld [vmem:[%s2477 + $0x68] sm:$0xff]
  %v2492 = vld [vmem:[%s2477 + $0x70] sm:$0xff]
  %v2493 = vld [vmem:[%s2477 + $0x78] sm:$0x7f]
  %v2494 = vld [vmem:[%s1] sm:$0x1f]
  %v2495 = vld [vmem:[%s2477 + $0x1] sm:$0xff]
  %v2496 = vld [vmem:[%s2477 + $0x9] sm:$0xff]
  %v2497 = vld [vmem:[%s2477 + $0x11] sm:$0xff]
  %v2498 = vld [vmem:[%s2477 + $0x19] sm:$0xff]
  %v2499 = vld [vmem:[%s2477 + $0x21] sm:$0xff]
  %v2500 = vld [vmem:[%s2477 + $0x29] sm:$0xff]
  %v2501 = vld [vmem:[%s2477 + $0x31] sm:$0xff]
  %v2502 = vld [vmem:[%s2477 + $0x39] sm:$0xff]
  %v2503 = vld [vmem:[%s2477 + $0x41] sm:$0xff]
  %v2504 = vld [vmem:[%s2477 + $0x49] sm:$0xff]
  %v2505 = vld [vmem:[%s2477 + $0x51] sm:$0xff]
  %v2506 = vld [vmem:[%s2477 + $0x59] sm:$0xff]
  %v2507 = vld [vmem:[%s2477 + $0x61] sm:$0xff]
  %v2508 = vld [vmem:[%s2477 + $0x69] sm:$0xff]
  %v2509 = vld [vmem:[%s2477 + $0x71] sm:$0xff]
  %v2510 = vld [vmem:[%s2477 + $0x79] sm:$0x7f]
  %v2511 = vld [vmem:[%s135] sm:$0x1f]
  %v2513 = vsel %vm137, %v2495, 0
  %v2516 = vsel %vm137, %v2496, 0
  %v2519 = vsel %vm137, %v2497, 0
  %v2522 = vsel %vm137, %v2498, 0
  %v2525 = vsel %vm137, %v2499, 0
  %v2528 = vsel %vm137, %v2500, 0
  %v2531 = vsel %vm137, %v2501, 0
  %v2534 = vsel %vm137, %v2502, 0
  %v2537 = vsel %vm137, %v2503, 0
  %v2540 = vsel %vm137, %v2504, 0
  %v2543 = vsel %vm137, %v2505, 0
  %v2546 = vsel %vm137, %v2506, 0
  %v2549 = vsel %vm137, %v2507, 0
  %v2552 = vsel %vm137, %v2508, 0
  %v2555 = vsel %vm137, %v2509, 0
  %v2558 = vsel %vm137, %v2510, 0
  %v2561 = vsel %vm186, %v2511, 0
  %2563 = vmatpush.msra.mxu0 0.0
  %2564 = vmatpush.msra.mxu0 0.0
  %2565 = vmatpush.msra.mxu0 0.0
  %2566 = vmatpush.msra.mxu0 0.0
  %2567 = vmatpush.msra.mxu0 0.0
  %2568 = vmatpush.msra.mxu0 0.0
  %2569 = vmatpush.msra.mxu0 0.0
  %2570 = vmatpush.msra.mxu0 0.0
  %2571 = vmatpush.msra.mxu0 0.0
  %2572 = vmatpush.msra.mxu0 0.0
  %2573 = vmatpush.msra.mxu0 0.0
  %2574 = vmatpush.msra.mxu0 0.0
  %2575 = vmatpush.msra.mxu0 0.0
  %2576 = vmatpush.msra.mxu0 0.0
  %2577 = vmatpush.msra.mxu0 0.0
  %2578 = vmatpush.msra.mxu0 %v2561
  %2579 = vmatmul.f32.gmra.mxu0 %v2513
  %v2580 = vpop.f32.mrf.mxu0
  %v2581 = vadd.f32 0.0, %v2580
  %2582 = vmatmul.f32.gmra.mxu0 %v2516
  %v2583 = vpop.f32.mrf.mxu0
  %v2584 = vadd.f32 0.0, %v2583
  %2585 = vmatmul.f32.gmra.mxu0 %v2519
  %v2586 = vpop.f32.mrf.mxu0
  %v2587 = vadd.f32 0.0, %v2586
  %2588 = vmatmul.f32.gmra.mxu0 %v2522
  %v2589 = vpop.f32.mrf.mxu0
  %v2590 = vadd.f32 0.0, %v2589
  %2591 = vmatmul.f32.gmra.mxu0 %v2525
  %v2592 = vpop.f32.mrf.mxu0
  %v2593 = vadd.f32 0.0, %v2592
  %2594 = vmatmul.f32.gmra.mxu0 %v2528
  %v2595 = vpop.f32.mrf.mxu0
  %v2596 = vadd.f32 0.0, %v2595
  %2597 = vmatmul.f32.gmra.mxu0 %v2531
  %v2598 = vpop.f32.mrf.mxu0
  %v2599 = vadd.f32 0.0, %v2598
  %2600 = vmatmul.f32.gmra.mxu0 %v2534
  %v2601 = vpop.f32.mrf.mxu0
  %v2602 = vadd.f32 0.0, %v2601
  %2603 = vmatmul.f32.gmra.mxu0 %v2537
  %v2604 = vpop.f32.mrf.mxu0
  %v2605 = vadd.f32 0.0, %v2604
  %2606 = vmatmul.f32.gmra.mxu0 %v2540
  %v2607 = vpop.f32.mrf.mxu0
  %v2608 = vadd.f32 0.0, %v2607
  %2609 = vmatmul.f32.gmra.mxu0 %v2543
  %v2610 = vpop.f32.mrf.mxu0
  %v2611 = vadd.f32 0.0, %v2610
  %2612 = vmatmul.f32.gmra.mxu0 %v2546
  %v2613 = vpop.f32.mrf.mxu0
  %v2614 = vadd.f32 0.0, %v2613
  %2615 = vmatmul.f32.gmra.mxu0 %v2549
  %v2616 = vpop.f32.mrf.mxu0
  %v2617 = vadd.f32 0.0, %v2616
  %2618 = vmatmul.f32.gmra.mxu0 %v2552
  %v2619 = vpop.f32.mrf.mxu0
  %v2620 = vadd.f32 0.0, %v2619
  %2621 = vmatmul.f32.gmra.mxu0 %v2555
  %v2622 = vpop.f32.mrf.mxu0
  %v2623 = vadd.f32 0.0, %v2622
  %2624 = vmatmul.f32.gmra.mxu0 %v2558
  %v2625 = vpop.f32.mrf.mxu0
  %v2626 = vadd.f32 0.0, %v2625
  %2627 = vdwg.mxu0
  %v2629 = vsel %vm137, %v2478, 0
  %v2632 = vsel %vm137, %v2479, 0
  %v2635 = vsel %vm137, %v2480, 0
  %v2638 = vsel %vm137, %v2481, 0
  %v2641 = vsel %vm137, %v2482, 0
  %v2644 = vsel %vm137, %v2483, 0
  %v2647 = vsel %vm137, %v2484, 0
  %v2650 = vsel %vm137, %v2485, 0
  %v2653 = vsel %vm137, %v2486, 0
  %v2656 = vsel %vm137, %v2487, 0
  %v2659 = vsel %vm137, %v2488, 0
  %v2662 = vsel %vm137, %v2489, 0
  %v2665 = vsel %vm137, %v2490, 0
  %v2668 = vsel %vm137, %v2491, 0
  %v2671 = vsel %vm137, %v2492, 0
  %v2674 = vsel %vm137, %v2493, 0
  %v2677 = vsel %vm186, %v2494, 0
  %2679 = vmatpush.msra.mxu0 0.0
  %2680 = vmatpush.msra.mxu0 0.0
  %2681 = vmatpush.msra.mxu0 0.0
  %2682 = vmatpush.msra.mxu0 0.0
  %2683 = vmatpush.msra.mxu0 0.0
  %2684 = vmatpush.msra.mxu0 0.0
  %2685 = vmatpush.msra.mxu0 0.0
  %2686 = vmatpush.msra.mxu0 0.0
  %2687 = vmatpush.msra.mxu0 0.0
  %2688 = vmatpush.msra.mxu0 0.0
  %2689 = vmatpush.msra.mxu0 0.0
  %2690 = vmatpush.msra.mxu0 0.0
  %2691 = vmatpush.msra.mxu0 0.0
  %2692 = vmatpush.msra.mxu0 0.0
  %2693 = vmatpush.msra.mxu0 0.0
  %2694 = vmatpush.msra.mxu0 %v2677
  %2695 = vmatmul.f32.gmra.mxu0 %v2629
  %v2696 = vpop.f32.mrf.mxu0
  %v2697 = vadd.f32 %v2581, %v2696
  %2698 = vmatmul.f32.gmra.mxu0 %v2632
  %v2699 = vpop.f32.mrf.mxu0
  %v2700 = vadd.f32 %v2584, %v2699
  %2701 = vmatmul.f32.gmra.mxu0 %v2635
  %v2702 = vpop.f32.mrf.mxu0
  %v2703 = vadd.f32 %v2587, %v2702
  %2704 = vmatmul.f32.gmra.mxu0 %v2638
  %v2705 = vpop.f32.mrf.mxu0
  %v2706 = vadd.f32 %v2590, %v2705
  %2707 = vmatmul.f32.gmra.mxu0 %v2641
  %v2708 = vpop.f32.mrf.mxu0
  %v2709 = vadd.f32 %v2593, %v2708
  %2710 = vmatmul.f32.gmra.mxu0 %v2644
  %v2711 = vpop.f32.mrf.mxu0
  %v2712 = vadd.f32 %v2596, %v2711
  %2713 = vmatmul.f32.gmra.mxu0 %v2647
  %v2714 = vpop.f32.mrf.mxu0
  %v2715 = vadd.f32 %v2599, %v2714
  %2716 = vmatmul.f32.gmra.mxu0 %v2650
  %v2717 = vpop.f32.mrf.mxu0
  %v2718 = vadd.f32 %v2602, %v2717
  %2719 = vmatmul.f32.gmra.mxu0 %v2653
  %v2720 = vpop.f32.mrf.mxu0
  %v2721 = vadd.f32 %v2605, %v2720
  %2722 = vmatmul.f32.gmra.mxu0 %v2656
  %v2723 = vpop.f32.mrf.mxu0
  %v2724 = vadd.f32 %v2608, %v2723
  %2725 = vmatmul.f32.gmra.mxu0 %v2659
  %v2726 = vpop.f32.mrf.mxu0
  %v2727 = vadd.f32 %v2611, %v2726
  %2728 = vmatmul.f32.gmra.mxu0 %v2662
  %v2729 = vpop.f32.mrf.mxu0
  %v2730 = vadd.f32 %v2614, %v2729
  %2731 = vmatmul.f32.gmra.mxu0 %v2665
  %v2732 = vpop.f32.mrf.mxu0
  %v2733 = vadd.f32 %v2617, %v2732
  %2734 = vmatmul.f32.gmra.mxu0 %v2668
  %v2735 = vpop.f32.mrf.mxu0
  %v2736 = vadd.f32 %v2620, %v2735
  %2737 = vmatmul.f32.gmra.mxu0 %v2671
  %v2738 = vpop.f32.mrf.mxu0
  %v2739 = vadd.f32 %v2623, %v2738
  %2740 = vmatmul.f32.gmra.mxu0 %v2674
  %v2741 = vpop.f32.mrf.mxu0
  %v2742 = vadd.f32 %v2626, %v2741
  %2743 = vdwg.mxu0
  %v2744 = vsel %vm371, %v2697, 0.0
  %v2745 = vsel %vm371, %v2700, 0.0
  %v2746 = vadd.f32 %v2744, %v2745
  %v2747 = vsel %vm371, %v2703, 0.0
  %v2748 = vadd.f32 %v2746, %v2747
  %v2749 = vsel %vm371, %v2706, 0.0
  %v2750 = vadd.f32 %v2748, %v2749
  %v2751 = vsel %vm371, %v2709, 0.0
  %v2752 = vadd.f32 %v2750, %v2751
  %v2753 = vsel %vm371, %v2712, 0.0
  %v2754 = vadd.f32 %v2752, %v2753
  %v2755 = vsel %vm371, %v2715, 0.0
  %v2756 = vadd.f32 %v2754, %v2755
  %v2757 = vsel %vm371, %v2718, 0.0
  %v2758 = vadd.f32 %v2756, %v2757
  %v2759 = vsel %vm371, %v2721, 0.0
  %v2760 = vadd.f32 %v2758, %v2759
  %v2761 = vsel %vm371, %v2724, 0.0
  %v2762 = vadd.f32 %v2760, %v2761
  %v2763 = vsel %vm371, %v2727, 0.0
  %v2764 = vadd.f32 %v2762, %v2763
  %v2765 = vsel %vm371, %v2730, 0.0
  %v2766 = vadd.f32 %v2764, %v2765
  %v2767 = vsel %vm371, %v2733, 0.0
  %v2768 = vadd.f32 %v2766, %v2767
  %v2769 = vsel %vm371, %v2736, 0.0
  %v2770 = vadd.f32 %v2768, %v2769
  %v2771 = vsel %vm371, %v2739, 0.0
  %v2772 = vadd.f32 %v2770, %v2771
  %v2773 = vsel %vm401, %v2742, 0.0
  %v2774 = vadd.f32 %v2772, %v2773
  %2775 = vadd.xlane.f32.xlu0 %v2774
  %v2776 = vpop.xlane.xlu0 %2775
  %v2777 = vrot.slane %v2776, 4
  %v2778 = vadd.f32 %v2776, %v2777
  %v2779 = vrot.slane %v2778, 2
  %v2780 = vadd.f32 %v2778, %v2779
  %v2781 = vrot.slane %v2780, 1
  %v2782 = vadd.f32 %v2780, %v2781
  %s2783 = vtos %v2782
  %v2784 = vmul.f32 %v2697, %v2697
  %v2785 = vmul.f32 %v2700, %v2700
  %v2786 = vmul.f32 %v2703, %v2703
  %v2787 = vmul.f32 %v2706, %v2706
  %v2788 = vmul.f32 %v2709, %v2709
  %v2789 = vmul.f32 %v2712, %v2712
  %v2790 = vmul.f32 %v2715, %v2715
  %v2791 = vmul.f32 %v2718, %v2718
  %v2792 = vmul.f32 %v2721, %v2721
  %v2793 = vmul.f32 %v2724, %v2724
  %v2794 = vmul.f32 %v2727, %v2727
  %v2795 = vmul.f32 %v2730, %v2730
  %v2796 = vmul.f32 %v2733, %v2733
  %v2797 = vmul.f32 %v2736, %v2736
  %v2798 = vmul.f32 %v2739, %v2739
  %v2799 = vmul.f32 %v2742, %v2742
  %v2800 = vsel %vm371, %v2784, 0.0
  %v2801 = vsel %vm371, %v2785, 0.0
  %v2802 = vadd.f32 %v2800, %v2801
  %v2803 = vsel %vm371, %v2786, 0.0
  %v2804 = vadd.f32 %v2802, %v2803
  %v2805 = vsel %vm371, %v2787, 0.0
  %v2806 = vadd.f32 %v2804, %v2805
  %v2807 = vsel %vm371, %v2788, 0.0
  %v2808 = vadd.f32 %v2806, %v2807
  %v2809 = vsel %vm371, %v2789, 0.0
  %v2810 = vadd.f32 %v2808, %v2809
  %v2811 = vsel %vm371, %v2790, 0.0
  %v2812 = vadd.f32 %v2810, %v2811
  %v2813 = vsel %vm371, %v2791, 0.0
  %v2814 = vadd.f32 %v2812, %v2813
  %v2815 = vsel %vm371, %v2792, 0.0
  %v2816 = vadd.f32 %v2814, %v2815
  %v2817 = vsel %vm371, %v2793, 0.0
  %v2818 = vadd.f32 %v2816, %v2817
  %v2819 = vsel %vm371, %v2794, 0.0
  %v2820 = vadd.f32 %v2818, %v2819
  %v2821 = vsel %vm371, %v2795, 0.0
  %v2822 = vadd.f32 %v2820, %v2821
  %v2823 = vsel %vm371, %v2796, 0.0
  %v2824 = vadd.f32 %v2822, %v2823
  %v2825 = vsel %vm371, %v2797, 0.0
  %v2826 = vadd.f32 %v2824, %v2825
  %v2827 = vsel %vm371, %v2798, 0.0
  %v2828 = vadd.f32 %v2826, %v2827
  %v2829 = vsel %vm401, %v2799, 0.0
  %v2830 = vadd.f32 %v2828, %v2829
  %2831 = vadd.xlane.f32.xlu0 %v2830
  %v2832 = vpop.xlane.xlu0 %2831
  %v2833 = vrot.slane %v2832, 4
  %v2834 = vadd.f32 %v2832, %v2833
  %v2835 = vrot.slane %v2834, 2
  %v2836 = vadd.f32 %v2834, %v2835
  %v2837 = vrot.slane %v2836, 1
  %v2838 = vadd.f32 %v2836, %v2837
  %s2839 = vtos %v2838
  %s2840 = smul.f32 %s2783, 0.000246063
  %s2841 = smul.f32 %s2839, 0.000246063
  %s2842 = smul.f32 %s2840, %s2840
  %s2843 = ssub.f32 %s2841, %s2842
  %s2844 = sadd.f32 %s2843, 1e-05
  %v2845 = vstv %s2844
  %v2846 = vrsqrt.pop %v2845
  %v2847 = vmul.f32 %v2846, %v2845
  %v2848 = vmul.f32 %v2847, %v2846
  %v2849 = vmul.f32 0.5, %v2848
  %v2850 = vsub.f32 1.5, %v2849
  %v2851 = vmul.f32 %v2846, %v2850
  %vm2852 = vweird.f32 %v2845
  %vm2853 = vweird.f32 %v2846
  %vm2854 = vmor %vm2852, %vm2853
  %v2855 = vsel %vm2854, %v2846, %v2851
  %s2856 = vtos %v2855
  %v2857 = vstv %s2856
  %v2858 = vmul.f32 %v90, %v2857
  %v2859 = vstv %s2840
  %v2860 = vmul.f32 %v2859, %v2858
  %v2861 = vsub.f32 %v91, %v2860
  %v2863 = vperm.slane %v2858, 0
  %v2865 = vmul.f32 %v2697, %v2863
  %v2866 = vmul.f32 %v2700, %v2863
  %v2867 = vmul.f32 %v2703, %v2863
  %v2868 = vmul.f32 %v2706, %v2863
  %v2869 = vmul.f32 %v2709, %v2863
  %v2870 = vmul.f32 %v2712, %v2863
  %v2871 = vmul.f32 %v2715, %v2863
  %v2872 = vmul.f32 %v2718, %v2863
  %v2873 = vmul.f32 %v2721, %v2863
  %v2874 = vmul.f32 %v2724, %v2863
  %v2875 = vmul.f32 %v2727, %v2863
  %v2876 = vmul.f32 %v2730, %v2863
  %v2877 = vmul.f32 %v2733, %v2863
  %v2878 = vmul.f32 %v2736, %v2863
  %v2879 = vmul.f32 %v2739, %v2863
  %v2880 = vmul.f32 %v2742, %v2863
  %v2882 = vperm.slane %v2861, 0
  %v2884 = vadd.f32 %v2865, %v2882
  %v2885 = vadd.f32 %v2866, %v2882
  %v2886 = vadd.f32 %v2867, %v2882
  %v2887 = vadd.f32 %v2868, %v2882
  %v2888 = vadd.f32 %v2869, %v2882
  %v2889 = vadd.f32 %v2870, %v2882
  %v2890 = vadd.f32 %v2871, %v2882
  %v2891 = vadd.f32 %v2872, %v2882
  %v2892 = vadd.f32 %v2873, %v2882
  %v2893 = vadd.f32 %v2874, %v2882
  %v2894 = vadd.f32 %v2875, %v2882
  %v2895 = vadd.f32 %v2876, %v2882
  %v2896 = vadd.f32 %v2877, %v2882
  %v2897 = vadd.f32 %v2878, %v2882
  %v2898 = vadd.f32 %v2879, %v2882
  %v2899 = vadd.f32 %v2880, %v2882
  %v2900 = vmax.f32 %v2884, 0.0
  %v2901 = vmax.f32 %v2885, 0.0
  %v2902 = vmax.f32 %v2886, 0.0
  %v2903 = vmax.f32 %v2887, 0.0
  %v2904 = vmax.f32 %v2888, 0.0
  %v2905 = vmax.f32 %v2889, 0.0
  %v2906 = vmax.f32 %v2890, 0.0
  %v2907 = vmax.f32 %v2891, 0.0
  %v2908 = vmax.f32 %v2892, 0.0
  %v2909 = vmax.f32 %v2893, 0.0
  %v2910 = vmax.f32 %v2894, 0.0
  %v2911 = vmax.f32 %v2895, 0.0
  %v2912 = vmax.f32 %v2896, 0.0
  %v2913 = vmax.f32 %v2897, 0.0
  %v2914 = vmax.f32 %v2898, 0.0
  %v2915 = vmax.f32 %v2899, 0.0
  %s2916 = scalar_lea.vmem [#allocation2], 128
  %2917 = vst.msk [vmem:[%s2916] sm:$0xff] %vm371, %v2900
  %2918 = vst.msk [vmem:[%s2916 + $0x8] sm:$0xff] %vm371, %v2901
  %2919 = vst.msk [vmem:[%s2916 + $0x10] sm:$0xff] %vm371, %v2902
  %2920 = vst.msk [vmem:[%s2916 + $0x18] sm:$0xff] %vm371, %v2903
  %2921 = vst.msk [vmem:[%s2916 + $0x20] sm:$0xff] %vm371, %v2904
  %2922 = vst.msk [vmem:[%s2916 + $0x28] sm:$0xff] %vm371, %v2905
  %2923 = vst.msk [vmem:[%s2916 + $0x30] sm:$0xff] %vm371, %v2906
  %2924 = vst.msk [vmem:[%s2916 + $0x38] sm:$0xff] %vm371, %v2907
  %2925 = vst.msk [vmem:[%s2916 + $0x40] sm:$0xff] %vm371, %v2908
  %2926 = vst.msk [vmem:[%s2916 + $0x48] sm:$0xff] %vm371, %v2909
  %2927 = vst.msk [vmem:[%s2916 + $0x50] sm:$0xff] %vm371, %v2910
  %2928 = vst.msk [vmem:[%s2916 + $0x58] sm:$0xff] %vm371, %v2911
  %2929 = vst.msk [vmem:[%s2916 + $0x60] sm:$0xff] %vm371, %v2912
  %2930 = vst.msk [vmem:[%s2916 + $0x68] sm:$0xff] %vm371, %v2913
  %2931 = vst.msk [vmem:[%s2916 + $0x70] sm:$0xff] %vm371, %v2914
  %2932 = vst.msk [vmem:[%s2916 + $0x78] sm:$0x7f] %vm401, %v2915
  %v2933 = vld [vmem:[%s2916] sm:$0xff]
  %v2934 = vld [vmem:[%s2916 + $0x8] sm:$0xff]
  %v2935 = vld [vmem:[%s2916 + $0x10] sm:$0xff]
  %v2936 = vld [vmem:[%s2916 + $0x18] sm:$0xff]
  %v2937 = vld [vmem:[%s2916 + $0x20] sm:$0xff]
  %v2938 = vld [vmem:[%s2916 + $0x28] sm:$0xff]
  %v2939 = vld [vmem:[%s2916 + $0x30] sm:$0xff]
  %v2940 = vld [vmem:[%s2916 + $0x38] sm:$0xff]
  %v2941 = vld [vmem:[%s2916 + $0x40] sm:$0xff]
  %v2942 = vld [vmem:[%s2916 + $0x48] sm:$0xff]
  %v2943 = vld [vmem:[%s2916 + $0x50] sm:$0xff]
  %v2944 = vld [vmem:[%s2916 + $0x58] sm:$0xff]
  %v2945 = vld [vmem:[%s2916 + $0x60] sm:$0xff]
  %v2946 = vld [vmem:[%s2916 + $0x68] sm:$0xff]
  %v2947 = vld [vmem:[%s2916 + $0x70] sm:$0xff]
  %v2948 = vld [vmem:[%s4] sm:$0xff]
  %v2949 = vld [vmem:[%s4 + $0x8] sm:$0xff]
  %v2950 = vld [vmem:[%s4 + $0x10] sm:$0xff]
  %v2951 = vld [vmem:[%s4 + $0x18] sm:$0xff]
  %v2952 = vld [vmem:[%s2916 + $0x1] sm:$0xff]
  %v2953 = vld [vmem:[%s2916 + $0x9] sm:$0xff]
  %v2954 = vld [vmem:[%s2916 + $0x11] sm:$0xff]
  %v2955 = vld [vmem:[%s2916 + $0x19] sm:$0xff]
  %v2956 = vld [vmem:[%s2916 + $0x21] sm:$0xff]
  %v2957 = vld [vmem:[%s2916 + $0x29] sm:$0xff]
  %v2958 = vld [vmem:[%s2916 + $0x31] sm:$0xff]
  %v2959 = vld [vmem:[%s2916 + $0x39] sm:$0xff]
  %v2960 = vld [vmem:[%s2916 + $0x41] sm:$0xff]
  %v2961 = vld [vmem:[%s2916 + $0x49] sm:$0xff]
  %v2962 = vld [vmem:[%s2916 + $0x51] sm:$0xff]
  %v2963 = vld [vmem:[%s2916 + $0x59] sm:$0xff]
  %v2964 = vld [vmem:[%s2916 + $0x61] sm:$0xff]
  %v2965 = vld [vmem:[%s2916 + $0x69] sm:$0xff]
  %v2966 = vld [vmem:[%s2916 + $0x71] sm:$0xff]
  %v2967 = vld [vmem:[%s595] sm:$0xff]
  %v2968 = vld [vmem:[%s595 + $0x8] sm:$0xff]
  %v2969 = vld [vmem:[%s595 + $0x10] sm:$0xff]
  %v2970 = vld [vmem:[%s595 + $0x18] sm:$0xff]
  %v2972 = vsel %vm371, %v2952, 0
  %v2975 = vsel %vm371, %v2953, 0
  %v2978 = vsel %vm371, %v2954, 0
  %v2981 = vsel %vm371, %v2955, 0
  %v2984 = vsel %vm371, %v2956, 0
  %v2987 = vsel %vm371, %v2957, 0
  %v2990 = vsel %vm371, %v2958, 0
  %v2993 = vsel %vm371, %v2959, 0
  %v2996 = vsel %vm371, %v2960, 0
  %v2999 = vsel %vm371, %v2961, 0
  %v3002 = vsel %vm371, %v2962, 0
  %v3005 = vsel %vm371, %v2963, 0
  %v3008 = vsel %vm371, %v2964, 0
  %v3011 = vsel %vm371, %v2965, 0
  %v3014 = vsel %vm371, %v2966, 0
  %3016 = vmatpush.msra.mxu0 0.0
  %3017 = vmatpush.msra.mxu0 0.0
  %3018 = vmatpush.msra.mxu0 0.0
  %3019 = vmatpush.msra.mxu0 0.0
  %3020 = vmatpush.msra.mxu0 0.0
  %3021 = vmatpush.msra.mxu0 0.0
  %3022 = vmatpush.msra.mxu0 0.0
  %3023 = vmatpush.msra.mxu0 0.0
  %3024 = vmatpush.msra.mxu0 0.0
  %3025 = vmatpush.msra.mxu0 0.0
  %3026 = vmatpush.msra.mxu0 0.0
  %3027 = vmatpush.msra.mxu0 0.0
  %3028 = vmatpush.msra.mxu0 %v2970
  %3029 = vmatpush.msra.mxu0 %v2969
  %3030 = vmatpush.msra.mxu0 %v2968
  %3031 = vmatpush.msra.mxu0 %v2967
  %3032 = vmatmul.f32.gmra.mxu0 %v2972
  %v3033 = vpop.f32.mrf.mxu0
  %v3034 = vadd.f32 0.0, %v3033
  %3035 = vmatmul.f32.gmra.mxu0 %v2975
  %v3036 = vpop.f32.mrf.mxu0
  %v3037 = vadd.f32 0.0, %v3036
  %3038 = vmatmul.f32.gmra.mxu0 %v2978
  %v3039 = vpop.f32.mrf.mxu0
  %v3040 = vadd.f32 0.0, %v3039
  %3041 = vmatmul.f32.gmra.mxu0 %v2981
  %v3042 = vpop.f32.mrf.mxu0
  %v3043 = vadd.f32 0.0, %v3042
  %3044 = vmatmul.f32.gmra.mxu0 %v2984
  %v3045 = vpop.f32.mrf.mxu0
  %v3046 = vadd.f32 0.0, %v3045
  %3047 = vmatmul.f32.gmra.mxu0 %v2987
  %v3048 = vpop.f32.mrf.mxu0
  %v3049 = vadd.f32 0.0, %v3048
  %3050 = vmatmul.f32.gmra.mxu0 %v2990
  %v3051 = vpop.f32.mrf.mxu0
  %v3052 = vadd.f32 0.0, %v3051
  %3053 = vmatmul.f32.gmra.mxu0 %v2993
  %v3054 = vpop.f32.mrf.mxu0
  %v3055 = vadd.f32 0.0, %v3054
  %3056 = vmatmul.f32.gmra.mxu0 %v2996
  %v3057 = vpop.f32.mrf.mxu0
  %v3058 = vadd.f32 0.0, %v3057
  %3059 = vmatmul.f32.gmra.mxu0 %v2999
  %v3060 = vpop.f32.mrf.mxu0
  %v3061 = vadd.f32 0.0, %v3060
  %3062 = vmatmul.f32.gmra.mxu0 %v3002
  %v3063 = vpop.f32.mrf.mxu0
  %v3064 = vadd.f32 0.0, %v3063
  %3065 = vmatmul.f32.gmra.mxu0 %v3005
  %v3066 = vpop.f32.mrf.mxu0
  %v3067 = vadd.f32 0.0, %v3066
  %3068 = vmatmul.f32.gmra.mxu0 %v3008
  %v3069 = vpop.f32.mrf.mxu0
  %v3070 = vadd.f32 0.0, %v3069
  %3071 = vmatmul.f32.gmra.mxu0 %v3011
  %v3072 = vpop.f32.mrf.mxu0
  %v3073 = vadd.f32 0.0, %v3072
  %3074 = vmatmul.f32.gmra.mxu0 %v3014
  %v3075 = vpop.f32.mrf.mxu0
  %v3076 = vadd.f32 0.0, %v3075
  %3077 = vdwg.mxu0
  %v3079 = vsel %vm371, %v2933, 0
  %v3082 = vsel %vm371, %v2934, 0
  %v3085 = vsel %vm371, %v2935, 0
  %v3088 = vsel %vm371, %v2936, 0
  %v3091 = vsel %vm371, %v2937, 0
  %v3094 = vsel %vm371, %v2938, 0
  %v3097 = vsel %vm371, %v2939, 0
  %v3100 = vsel %vm371, %v2940, 0
  %v3103 = vsel %vm371, %v2941, 0
  %v3106 = vsel %vm371, %v2942, 0
  %v3109 = vsel %vm371, %v2943, 0
  %v3112 = vsel %vm371, %v2944, 0
  %v3115 = vsel %vm371, %v2945, 0
  %v3118 = vsel %vm371, %v2946, 0
  %v3121 = vsel %vm371, %v2947, 0
  %3123 = vmatpush.msra.mxu0 0.0
  %3124 = vmatpush.msra.mxu0 0.0
  %3125 = vmatpush.msra.mxu0 0.0
  %3126 = vmatpush.msra.mxu0 0.0
  %3127 = vmatpush.msra.mxu0 0.0
  %3128 = vmatpush.msra.mxu0 0.0
  %3129 = vmatpush.msra.mxu0 0.0
  %3130 = vmatpush.msra.mxu0 0.0
  %3131 = vmatpush.msra.mxu0 0.0
  %3132 = vmatpush.msra.mxu0 0.0
  %3133 = vmatpush.msra.mxu0 0.0
  %3134 = vmatpush.msra.mxu0 0.0
  %3135 = vmatpush.msra.mxu0 %v2951
  %3136 = vmatpush.msra.mxu0 %v2950
  %3137 = vmatpush.msra.mxu0 %v2949
  %3138 = vmatpush.msra.mxu0 %v2948
  %3139 = vmatmul.f32.gmra.mxu0 %v3079
  %v3140 = vpop.f32.mrf.mxu0
  %v3141 = vadd.f32 %v3034, %v3140
  %3142 = vmatmul.f32.gmra.mxu0 %v3082
  %v3143 = vpop.f32.mrf.mxu0
  %v3144 = vadd.f32 %v3037, %v3143
  %3145 = vmatmul.f32.gmra.mxu0 %v3085
  %v3146 = vpop.f32.mrf.mxu0
  %v3147 = vadd.f32 %v3040, %v3146
  %3148 = vmatmul.f32.gmra.mxu0 %v3088
  %v3149 = vpop.f32.mrf.mxu0
  %v3150 = vadd.f32 %v3043, %v3149
  %3151 = vmatmul.f32.gmra.mxu0 %v3091
  %v3152 = vpop.f32.mrf.mxu0
  %v3153 = vadd.f32 %v3046, %v3152
  %3154 = vmatmul.f32.gmra.mxu0 %v3094
  %v3155 = vpop.f32.mrf.mxu0
  %v3156 = vadd.f32 %v3049, %v3155
  %3157 = vmatmul.f32.gmra.mxu0 %v3097
  %v3158 = vpop.f32.mrf.mxu0
  %v3159 = vadd.f32 %v3052, %v3158
  %3160 = vmatmul.f32.gmra.mxu0 %v3100
  %v3161 = vpop.f32.mrf.mxu0
  %v3162 = vadd.f32 %v3055, %v3161
  %3163 = vmatmul.f32.gmra.mxu0 %v3103
  %v3164 = vpop.f32.mrf.mxu0
  %v3165 = vadd.f32 %v3058, %v3164
  %3166 = vmatmul.f32.gmra.mxu0 %v3106
  %v3167 = vpop.f32.mrf.mxu0
  %v3168 = vadd.f32 %v3061, %v3167
  %3169 = vmatmul.f32.gmra.mxu0 %v3109
  %v3170 = vpop.f32.mrf.mxu0
  %v3171 = vadd.f32 %v3064, %v3170
  %3172 = vmatmul.f32.gmra.mxu0 %v3112
  %v3173 = vpop.f32.mrf.mxu0
  %v3174 = vadd.f32 %v3067, %v3173
  %3175 = vmatmul.f32.gmra.mxu0 %v3115
  %v3176 = vpop.f32.mrf.mxu0
  %v3177 = vadd.f32 %v3070, %v3176
  %3178 = vmatmul.f32.gmra.mxu0 %v3118
  %v3179 = vpop.f32.mrf.mxu0
  %v3180 = vadd.f32 %v3073, %v3179
  %3181 = vmatmul.f32.gmra.mxu0 %v3121
  %v3182 = vpop.f32.mrf.mxu0
  %v3183 = vadd.f32 %v3076, %v3182
  %3184 = vdwg.mxu0
  %v3185 = vld [vmem:[%s2916 + $0x2] sm:$0xff]
  %v3186 = vld [vmem:[%s2916 + $0xa] sm:$0xff]
  %v3187 = vld [vmem:[%s2916 + $0x12] sm:$0xff]
  %v3188 = vld [vmem:[%s2916 + $0x1a] sm:$0xff]
  %v3189 = vld [vmem:[%s2916 + $0x22] sm:$0xff]
  %v3190 = vld [vmem:[%s2916 + $0x2a] sm:$0xff]
  %v3191 = vld [vmem:[%s2916 + $0x32] sm:$0xff]
  %v3192 = vld [vmem:[%s2916 + $0x3a] sm:$0xff]
  %v3193 = vld [vmem:[%s2916 + $0x42] sm:$0xff]
  %v3194 = vld [vmem:[%s2916 + $0x4a] sm:$0xff]
  %v3195 = vld [vmem:[%s2916 + $0x52] sm:$0xff]
  %v3196 = vld [vmem:[%s2916 + $0x5a] sm:$0xff]
  %v3197 = vld [vmem:[%s2916 + $0x62] sm:$0xff]
  %v3198 = vld [vmem:[%s2916 + $0x6a] sm:$0xff]
  %v3199 = vld [vmem:[%s2916 + $0x72] sm:$0xff]
  %v3200 = vld [vmem:[%s829] sm:$0xff]
  %v3201 = vld [vmem:[%s829 + $0x8] sm:$0xff]
  %v3202 = vld [vmem:[%s829 + $0x10] sm:$0xff]
  %v3203 = vld [vmem:[%s829 + $0x18] sm:$0xff]
  %v3205 = vsel %vm371, %v3185, 0
  %v3208 = vsel %vm371, %v3186, 0
  %v3211 = vsel %vm371, %v3187, 0
  %v3214 = vsel %vm371, %v3188, 0
  %v3217 = vsel %vm371, %v3189, 0
  %v3220 = vsel %vm371, %v3190, 0
  %v3223 = vsel %vm371, %v3191, 0
  %v3226 = vsel %vm371, %v3192, 0
  %v3229 = vsel %vm371, %v3193, 0
  %v3232 = vsel %vm371, %v3194, 0
  %v3235 = vsel %vm371, %v3195, 0
  %v3238 = vsel %vm371, %v3196, 0
  %v3241 = vsel %vm371, %v3197, 0
  %v3244 = vsel %vm371, %v3198, 0
  %v3247 = vsel %vm371, %v3199, 0
  %3249 = vmatpush.msra.mxu0 0.0
  %3250 = vmatpush.msra.mxu0 0.0
  %3251 = vmatpush.msra.mxu0 0.0
  %3252 = vmatpush.msra.mxu0 0.0
  %3253 = vmatpush.msra.mxu0 0.0
  %3254 = vmatpush.msra.mxu0 0.0
  %3255 = vmatpush.msra.mxu0 0.0
  %3256 = vmatpush.msra.mxu0 0.0
  %3257 = vmatpush.msra.mxu0 0.0
  %3258 = vmatpush.msra.mxu0 0.0
  %3259 = vmatpush.msra.mxu0 0.0
  %3260 = vmatpush.msra.mxu0 0.0
  %3261 = vmatpush.msra.mxu0 %v3203
  %3262 = vmatpush.msra.mxu0 %v3202
  %3263 = vmatpush.msra.mxu0 %v3201
  %3264 = vmatpush.msra.mxu0 %v3200
  %3265 = vmatmul.f32.gmra.mxu0 %v3205
  %v3266 = vpop.f32.mrf.mxu0
  %v3267 = vadd.f32 0.0, %v3266
  %3268 = vmatmul.f32.gmra.mxu0 %v3208
  %v3269 = vpop.f32.mrf.mxu0
  %v3270 = vadd.f32 0.0, %v3269
  %3271 = vmatmul.f32.gmra.mxu0 %v3211
  %v3272 = vpop.f32.mrf.mxu0
  %v3273 = vadd.f32 0.0, %v3272
  %3274 = vmatmul.f32.gmra.mxu0 %v3214
  %v3275 = vpop.f32.mrf.mxu0
  %v3276 = vadd.f32 0.0, %v3275
  %3277 = vmatmul.f32.gmra.mxu0 %v3217
  %v3278 = vpop.f32.mrf.mxu0
  %v3279 = vadd.f32 0.0, %v3278
  %3280 = vmatmul.f32.gmra.mxu0 %v3220
  %v3281 = vpop.f32.mrf.mxu0
  %v3282 = vadd.f32 0.0, %v3281
  %3283 = vmatmul.f32.gmra.mxu0 %v3223
  %v3284 = vpop.f32.mrf.mxu0
  %v3285 = vadd.f32 0.0, %v3284
  %3286 = vmatmul.f32.gmra.mxu0 %v3226
  %v3287 = vpop.f32.mrf.mxu0
  %v3288 = vadd.f32 0.0, %v3287
  %3289 = vmatmul.f32.gmra.mxu0 %v3229
  %v3290 = vpop.f32.mrf.mxu0
  %v3291 = vadd.f32 0.0, %v3290
  %3292 = vmatmul.f32.gmra.mxu0 %v3232
  %v3293 = vpop.f32.mrf.mxu0
  %v3294 = vadd.f32 0.0, %v3293
  %3295 = vmatmul.f32.gmra.mxu0 %v3235
  %v3296 = vpop.f32.mrf.mxu0
  %v3297 = vadd.f32 0.0, %v3296
  %3298 = vmatmul.f32.gmra.mxu0 %v3238
  %v3299 = vpop.f32.mrf.mxu0
  %v3300 = vadd.f32 0.0, %v3299
  %3301 = vmatmul.f32.gmra.mxu0 %v3241
  %v3302 = vpop.f32.mrf.mxu0
  %v3303 = vadd.f32 0.0, %v3302
  %3304 = vmatmul.f32.gmra.mxu0 %v3244
  %v3305 = vpop.f32.mrf.mxu0
  %v3306 = vadd.f32 0.0, %v3305
  %3307 = vmatmul.f32.gmra.mxu0 %v3247
  %v3308 = vpop.f32.mrf.mxu0
  %v3309 = vadd.f32 0.0, %v3308
  %3310 = vdwg.mxu0
  %v3311 = vadd.f32 %v3141, %v3267
  %v3312 = vadd.f32 %v3144, %v3270
  %v3313 = vadd.f32 %v3147, %v3273
  %v3314 = vadd.f32 %v3150, %v3276
  %v3315 = vadd.f32 %v3153, %v3279
  %v3316 = vadd.f32 %v3156, %v3282
  %v3317 = vadd.f32 %v3159, %v3285
  %v3318 = vadd.f32 %v3162, %v3288
  %v3319 = vadd.f32 %v3165, %v3291
  %v3320 = vadd.f32 %v3168, %v3294
  %v3321 = vadd.f32 %v3171, %v3297
  %v3322 = vadd.f32 %v3174, %v3300
  %v3323 = vadd.f32 %v3177, %v3303
  %v3324 = vadd.f32 %v3180, %v3306
  %v3325 = vadd.f32 %v3183, %v3309
  %v3326 = vld [vmem:[%s2916 + $0x3] sm:$0xff]
  %v3327 = vld [vmem:[%s2916 + $0xb] sm:$0xff]
  %v3328 = vld [vmem:[%s2916 + $0x13] sm:$0xff]
  %v3329 = vld [vmem:[%s2916 + $0x1b] sm:$0xff]
  %v3330 = vld [vmem:[%s2916 + $0x23] sm:$0xff]
  %v3331 = vld [vmem:[%s2916 + $0x2b] sm:$0xff]
  %v3332 = vld [vmem:[%s2916 + $0x33] sm:$0xff]
  %v3333 = vld [vmem:[%s2916 + $0x3b] sm:$0xff]
  %v3334 = vld [vmem:[%s2916 + $0x43] sm:$0xff]
  %v3335 = vld [vmem:[%s2916 + $0x4b] sm:$0xff]
  %v3336 = vld [vmem:[%s2916 + $0x53] sm:$0xff]
  %v3337 = vld [vmem:[%s2916 + $0x5b] sm:$0xff]
  %v3338 = vld [vmem:[%s2916 + $0x63] sm:$0xff]
  %v3339 = vld [vmem:[%s2916 + $0x6b] sm:$0xff]
  %v3340 = vld [vmem:[%s2916 + $0x73] sm:$0xff]
  %v3341 = vld [vmem:[%s971] sm:$0xff]
  %v3342 = vld [vmem:[%s971 + $0x8] sm:$0xff]
  %v3343 = vld [vmem:[%s971 + $0x10] sm:$0xff]
  %v3344 = vld [vmem:[%s971 + $0x18] sm:$0xff]
  %v3346 = vsel %vm371, %v3326, 0
  %v3349 = vsel %vm371, %v3327, 0
  %v3352 = vsel %vm371, %v3328, 0
  %v3355 = vsel %vm371, %v3329, 0
  %v3358 = vsel %vm371, %v3330, 0
  %v3361 = vsel %vm371, %v3331, 0
  %v3364 = vsel %vm371, %v3332, 0
  %v3367 = vsel %vm371, %v3333, 0
  %v3370 = vsel %vm371, %v3334, 0
  %v3373 = vsel %vm371, %v3335, 0
  %v3376 = vsel %vm371, %v3336, 0
  %v3379 = vsel %vm371, %v3337, 0
  %v3382 = vsel %vm371, %v3338, 0
  %v3385 = vsel %vm371, %v3339, 0
  %v3388 = vsel %vm371, %v3340, 0
  %3390 = vmatpush.msra.mxu0 0.0
  %3391 = vmatpush.msra.mxu0 0.0
  %3392 = vmatpush.msra.mxu0 0.0
  %3393 = vmatpush.msra.mxu0 0.0
  %3394 = vmatpush.msra.mxu0 0.0
  %3395 = vmatpush.msra.mxu0 0.0
  %3396 = vmatpush.msra.mxu0 0.0
  %3397 = vmatpush.msra.mxu0 0.0
  %3398 = vmatpush.msra.mxu0 0.0
  %3399 = vmatpush.msra.mxu0 0.0
  %3400 = vmatpush.msra.mxu0 0.0
  %3401 = vmatpush.msra.mxu0 0.0
  %3402 = vmatpush.msra.mxu0 %v3344
  %3403 = vmatpush.msra.mxu0 %v3343
  %3404 = vmatpush.msra.mxu0 %v3342
  %3405 = vmatpush.msra.mxu0 %v3341
  %3406 = vmatmul.f32.gmra.mxu0 %v3346
  %v3407 = vpop.f32.mrf.mxu0
  %v3408 = vadd.f32 0.0, %v3407
  %3409 = vmatmul.f32.gmra.mxu0 %v3349
  %v3410 = vpop.f32.mrf.mxu0
  %v3411 = vadd.f32 0.0, %v3410
  %3412 = vmatmul.f32.gmra.mxu0 %v3352
  %v3413 = vpop.f32.mrf.mxu0
  %v3414 = vadd.f32 0.0, %v3413
  %3415 = vmatmul.f32.gmra.mxu0 %v3355
  %v3416 = vpop.f32.mrf.mxu0
  %v3417 = vadd.f32 0.0, %v3416
  %3418 = vmatmul.f32.gmra.mxu0 %v3358
  %v3419 = vpop.f32.mrf.mxu0
  %v3420 = vadd.f32 0.0, %v3419
  %3421 = vmatmul.f32.gmra.mxu0 %v3361
  %v3422 = vpop.f32.mrf.mxu0
  %v3423 = vadd.f32 0.0, %v3422
  %3424 = vmatmul.f32.gmra.mxu0 %v3364
  %v3425 = vpop.f32.mrf.mxu0
  %v3426 = vadd.f32 0.0, %v3425
  %3427 = vmatmul.f32.gmra.mxu0 %v3367
  %v3428 = vpop.f32.mrf.mxu0
  %v3429 = vadd.f32 0.0, %v3428
  %3430 = vmatmul.f32.gmra.mxu0 %v3370
  %v3431 = vpop.f32.mrf.mxu0
  %v3432 = vadd.f32 0.0, %v3431
  %3433 = vmatmul.f32.gmra.mxu0 %v3373
  %v3434 = vpop.f32.mrf.mxu0
  %v3435 = vadd.f32 0.0, %v3434
  %3436 = vmatmul.f32.gmra.mxu0 %v3376
  %v3437 = vpop.f32.mrf.mxu0
  %v3438 = vadd.f32 0.0, %v3437
  %3439 = vmatmul.f32.gmra.mxu0 %v3379
  %v3440 = vpop.f32.mrf.mxu0
  %v3441 = vadd.f32 0.0, %v3440
  %3442 = vmatmul.f32.gmra.mxu0 %v3382
  %v3443 = vpop.f32.mrf.mxu0
  %v3444 = vadd.f32 0.0, %v3443
  %3445 = vmatmul.f32.gmra.mxu0 %v3385
  %v3446 = vpop.f32.mrf.mxu0
  %v3447 = vadd.f32 0.0, %v3446
  %3448 = vmatmul.f32.gmra.mxu0 %v3388
  %v3449 = vpop.f32.mrf.mxu0
  %v3450 = vadd.f32 0.0, %v3449
  %3451 = vdwg.mxu0
  %v3452 = vadd.f32 %v3311, %v3408
  %v3453 = vadd.f32 %v3312, %v3411
  %v3454 = vadd.f32 %v3313, %v3414
  %v3455 = vadd.f32 %v3314, %v3417
  %v3456 = vadd.f32 %v3315, %v3420
  %v3457 = vadd.f32 %v3316, %v3423
  %v3458 = vadd.f32 %v3317, %v3426
  %v3459 = vadd.f32 %v3318, %v3429
  %v3460 = vadd.f32 %v3319, %v3432
  %v3461 = vadd.f32 %v3320, %v3435
  %v3462 = vadd.f32 %v3321, %v3438
  %v3463 = vadd.f32 %v3322, %v3441
  %v3464 = vadd.f32 %v3323, %v3444
  %v3465 = vadd.f32 %v3324, %v3447
  %v3466 = vadd.f32 %v3325, %v3450
  %v3467 = vld [vmem:[%s2916 + $0x4] sm:$0xff]
  %v3468 = vld [vmem:[%s2916 + $0xc] sm:$0xff]
  %v3469 = vld [vmem:[%s2916 + $0x14] sm:$0xff]
  %v3470 = vld [vmem:[%s2916 + $0x1c] sm:$0xff]
  %v3471 = vld [vmem:[%s2916 + $0x24] sm:$0xff]
  %v3472 = vld [vmem:[%s2916 + $0x2c] sm:$0xff]
  %v3473 = vld [vmem:[%s2916 + $0x34] sm:$0xff]
  %v3474 = vld [vmem:[%s2916 + $0x3c] sm:$0xff]
  %v3475 = vld [vmem:[%s2916 + $0x44] sm:$0xff]
  %v3476 = vld [vmem:[%s2916 + $0x4c] sm:$0xff]
  %v3477 = vld [vmem:[%s2916 + $0x54] sm:$0xff]
  %v3478 = vld [vmem:[%s2916 + $0x5c] sm:$0xff]
  %v3479 = vld [vmem:[%s2916 + $0x64] sm:$0xff]
  %v3480 = vld [vmem:[%s2916 + $0x6c] sm:$0xff]
  %v3481 = vld [vmem:[%s2916 + $0x74] sm:$0xff]
  %v3482 = vld [vmem:[%s1113] sm:$0xff]
  %v3483 = vld [vmem:[%s1113 + $0x8] sm:$0xff]
  %v3484 = vld [vmem:[%s1113 + $0x10] sm:$0xff]
  %v3485 = vld [vmem:[%s1113 + $0x18] sm:$0xff]
  %v3487 = vsel %vm371, %v3467, 0
  %v3490 = vsel %vm371, %v3468, 0
  %v3493 = vsel %vm371, %v3469, 0
  %v3496 = vsel %vm371, %v3470, 0
  %v3499 = vsel %vm371, %v3471, 0
  %v3502 = vsel %vm371, %v3472, 0
  %v3505 = vsel %vm371, %v3473, 0
  %v3508 = vsel %vm371, %v3474, 0
  %v3511 = vsel %vm371, %v3475, 0
  %v3514 = vsel %vm371, %v3476, 0
  %v3517 = vsel %vm371, %v3477, 0
  %v3520 = vsel %vm371, %v3478, 0
  %v3523 = vsel %vm371, %v3479, 0
  %v3526 = vsel %vm371, %v3480, 0
  %v3529 = vsel %vm371, %v3481, 0
  %3531 = vmatpush.msra.mxu0 0.0
  %3532 = vmatpush.msra.mxu0 0.0
  %3533 = vmatpush.msra.mxu0 0.0
  %3534 = vmatpush.msra.mxu0 0.0
  %3535 = vmatpush.msra.mxu0 0.0
  %3536 = vmatpush.msra.mxu0 0.0
  %3537 = vmatpush.msra.mxu0 0.0
  %3538 = vmatpush.msra.mxu0 0.0
  %3539 = vmatpush.msra.mxu0 0.0
  %3540 = vmatpush.msra.mxu0 0.0
  %3541 = vmatpush.msra.mxu0 0.0
  %3542 = vmatpush.msra.mxu0 0.0
  %3543 = vmatpush.msra.mxu0 %v3485
  %3544 = vmatpush.msra.mxu0 %v3484
  %3545 = vmatpush.msra.mxu0 %v3483
  %3546 = vmatpush.msra.mxu0 %v3482
  %3547 = vmatmul.f32.gmra.mxu0 %v3487
  %v3548 = vpop.f32.mrf.mxu0
  %v3549 = vadd.f32 0.0, %v3548
  %3550 = vmatmul.f32.gmra.mxu0 %v3490
  %v3551 = vpop.f32.mrf.mxu0
  %v3552 = vadd.f32 0.0, %v3551
  %3553 = vmatmul.f32.gmra.mxu0 %v3493
  %v3554 = vpop.f32.mrf.mxu0
  %v3555 = vadd.f32 0.0, %v3554
  %3556 = vmatmul.f32.gmra.mxu0 %v3496
  %v3557 = vpop.f32.mrf.mxu0
  %v3558 = vadd.f32 0.0, %v3557
  %3559 = vmatmul.f32.gmra.mxu0 %v3499
  %v3560 = vpop.f32.mrf.mxu0
  %v3561 = vadd.f32 0.0, %v3560
  %3562 = vmatmul.f32.gmra.mxu0 %v3502
  %v3563 = vpop.f32.mrf.mxu0
  %v3564 = vadd.f32 0.0, %v3563
  %3565 = vmatmul.f32.gmra.mxu0 %v3505
  %v3566 = vpop.f32.mrf.mxu0
  %v3567 = vadd.f32 0.0, %v3566
  %3568 = vmatmul.f32.gmra.mxu0 %v3508
  %v3569 = vpop.f32.mrf.mxu0
  %v3570 = vadd.f32 0.0, %v3569
  %3571 = vmatmul.f32.gmra.mxu0 %v3511
  %v3572 = vpop.f32.mrf.mxu0
  %v3573 = vadd.f32 0.0, %v3572
  %3574 = vmatmul.f32.gmra.mxu0 %v3514
  %v3575 = vpop.f32.mrf.mxu0
  %v3576 = vadd.f32 0.0, %v3575
  %3577 = vmatmul.f32.gmra.mxu0 %v3517
  %v3578 = vpop.f32.mrf.mxu0
  %v3579 = vadd.f32 0.0, %v3578
  %3580 = vmatmul.f32.gmra.mxu0 %v3520
  %v3581 = vpop.f32.mrf.mxu0
  %v3582 = vadd.f32 0.0, %v3581
  %3583 = vmatmul.f32.gmra.mxu0 %v3523
  %v3584 = vpop.f32.mrf.mxu0
  %v3585 = vadd.f32 0.0, %v3584
  %3586 = vmatmul.f32.gmra.mxu0 %v3526
  %v3587 = vpop.f32.mrf.mxu0
  %v3588 = vadd.f32 0.0, %v3587
  %3589 = vmatmul.f32.gmra.mxu0 %v3529
  %v3590 = vpop.f32.mrf.mxu0
  %v3591 = vadd.f32 0.0, %v3590
  %3592 = vdwg.mxu0
  %v3593 = vadd.f32 %v3452, %v3549
  %v3594 = vadd.f32 %v3453, %v3552
  %v3595 = vadd.f32 %v3454, %v3555
  %v3596 = vadd.f32 %v3455, %v3558
  %v3597 = vadd.f32 %v3456, %v3561
  %v3598 = vadd.f32 %v3457, %v3564
  %v3599 = vadd.f32 %v3458, %v3567
  %v3600 = vadd.f32 %v3459, %v3570
  %v3601 = vadd.f32 %v3460, %v3573
  %v3602 = vadd.f32 %v3461, %v3576
  %v3603 = vadd.f32 %v3462, %v3579
  %v3604 = vadd.f32 %v3463, %v3582
  %v3605 = vadd.f32 %v3464, %v3585
  %v3606 = vadd.f32 %v3465, %v3588
  %v3607 = vadd.f32 %v3466, %v3591
  %v3608 = vld [vmem:[%s2916 + $0x5] sm:$0xff]
  %v3609 = vld [vmem:[%s2916 + $0xd] sm:$0xff]
  %v3610 = vld [vmem:[%s2916 + $0x15] sm:$0xff]
  %v3611 = vld [vmem:[%s2916 + $0x1d] sm:$0xff]
  %v3612 = vld [vmem:[%s2916 + $0x25] sm:$0xff]
  %v3613 = vld [vmem:[%s2916 + $0x2d] sm:$0xff]
  %v3614 = vld [vmem:[%s2916 + $0x35] sm:$0xff]
  %v3615 = vld [vmem:[%s2916 + $0x3d] sm:$0xff]
  %v3616 = vld [vmem:[%s2916 + $0x45] sm:$0xff]
  %v3617 = vld [vmem:[%s2916 + $0x4d] sm:$0xff]
  %v3618 = vld [vmem:[%s2916 + $0x55] sm:$0xff]
  %v3619 = vld [vmem:[%s2916 + $0x5d] sm:$0xff]
  %v3620 = vld [vmem:[%s2916 + $0x65] sm:$0xff]
  %v3621 = vld [vmem:[%s2916 + $0x6d] sm:$0xff]
  %v3622 = vld [vmem:[%s2916 + $0x75] sm:$0xff]
  %v3623 = vld [vmem:[%s1255] sm:$0xff]
  %v3624 = vld [vmem:[%s1255 + $0x8] sm:$0xff]
  %v3625 = vld [vmem:[%s1255 + $0x10] sm:$0xff]
  %v3626 = vld [vmem:[%s1255 + $0x18] sm:$0xff]
  %v3628 = vsel %vm371, %v3608, 0
  %v3631 = vsel %vm371, %v3609, 0
  %v3634 = vsel %vm371, %v3610, 0
  %v3637 = vsel %vm371, %v3611, 0
  %v3640 = vsel %vm371, %v3612, 0
  %v3643 = vsel %vm371, %v3613, 0
  %v3646 = vsel %vm371, %v3614, 0
  %v3649 = vsel %vm371, %v3615, 0
  %v3652 = vsel %vm371, %v3616, 0
  %v3655 = vsel %vm371, %v3617, 0
  %v3658 = vsel %vm371, %v3618, 0
  %v3661 = vsel %vm371, %v3619, 0
  %v3664 = vsel %vm371, %v3620, 0
  %v3667 = vsel %vm371, %v3621, 0
  %v3670 = vsel %vm371, %v3622, 0
  %3672 = vmatpush.msra.mxu0 0.0
  %3673 = vmatpush.msra.mxu0 0.0
  %3674 = vmatpush.msra.mxu0 0.0
  %3675 = vmatpush.msra.mxu0 0.0
  %3676 = vmatpush.msra.mxu0 0.0
  %3677 = vmatpush.msra.mxu0 0.0
  %3678 = vmatpush.msra.mxu0 0.0
  %3679 = vmatpush.msra.mxu0 0.0
  %3680 = vmatpush.msra.mxu0 0.0
  %3681 = vmatpush.msra.mxu0 0.0
  %3682 = vmatpush.msra.mxu0 0.0
  %3683 = vmatpush.msra.mxu0 0.0
  %3684 = vmatpush.msra.mxu0 %v3626
  %3685 = vmatpush.msra.mxu0 %v3625
  %3686 = vmatpush.msra.mxu0 %v3624
  %3687 = vmatpush.msra.mxu0 %v3623
  %3688 = vmatmul.f32.gmra.mxu0 %v3628
  %v3689 = vpop.f32.mrf.mxu0
  %v3690 = vadd.f32 0.0, %v3689
  %3691 = vmatmul.f32.gmra.mxu0 %v3631
  %v3692 = vpop.f32.mrf.mxu0
  %v3693 = vadd.f32 0.0, %v3692
  %3694 = vmatmul.f32.gmra.mxu0 %v3634
  %v3695 = vpop.f32.mrf.mxu0
  %v3696 = vadd.f32 0.0, %v3695
  %3697 = vmatmul.f32.gmra.mxu0 %v3637
  %v3698 = vpop.f32.mrf.mxu0
  %v3699 = vadd.f32 0.0, %v3698
  %3700 = vmatmul.f32.gmra.mxu0 %v3640
  %v3701 = vpop.f32.mrf.mxu0
  %v3702 = vadd.f32 0.0, %v3701
  %3703 = vmatmul.f32.gmra.mxu0 %v3643
  %v3704 = vpop.f32.mrf.mxu0
  %v3705 = vadd.f32 0.0, %v3704
  %3706 = vmatmul.f32.gmra.mxu0 %v3646
  %v3707 = vpop.f32.mrf.mxu0
  %v3708 = vadd.f32 0.0, %v3707
  %3709 = vmatmul.f32.gmra.mxu0 %v3649
  %v3710 = vpop.f32.mrf.mxu0
  %v3711 = vadd.f32 0.0, %v3710
  %3712 = vmatmul.f32.gmra.mxu0 %v3652
  %v3713 = vpop.f32.mrf.mxu0
  %v3714 = vadd.f32 0.0, %v3713
  %3715 = vmatmul.f32.gmra.mxu0 %v3655
  %v3716 = vpop.f32.mrf.mxu0
  %v3717 = vadd.f32 0.0, %v3716
  %3718 = vmatmul.f32.gmra.mxu0 %v3658
  %v3719 = vpop.f32.mrf.mxu0
  %v3720 = vadd.f32 0.0, %v3719
  %3721 = vmatmul.f32.gmra.mxu0 %v3661
  %v3722 = vpop.f32.mrf.mxu0
  %v3723 = vadd.f32 0.0, %v3722
  %3724 = vmatmul.f32.gmra.mxu0 %v3664
  %v3725 = vpop.f32.mrf.mxu0
  %v3726 = vadd.f32 0.0, %v3725
  %3727 = vmatmul.f32.gmra.mxu0 %v3667
  %v3728 = vpop.f32.mrf.mxu0
  %v3729 = vadd.f32 0.0, %v3728
  %3730 = vmatmul.f32.gmra.mxu0 %v3670
  %v3731 = vpop.f32.mrf.mxu0
  %v3732 = vadd.f32 0.0, %v3731
  %3733 = vdwg.mxu0
  %v3734 = vadd.f32 %v3593, %v3690
  %v3735 = vadd.f32 %v3594, %v3693
  %v3736 = vadd.f32 %v3595, %v3696
  %v3737 = vadd.f32 %v3596, %v3699
  %v3738 = vadd.f32 %v3597, %v3702
  %v3739 = vadd.f32 %v3598, %v3705
  %v3740 = vadd.f32 %v3599, %v3708
  %v3741 = vadd.f32 %v3600, %v3711
  %v3742 = vadd.f32 %v3601, %v3714
  %v3743 = vadd.f32 %v3602, %v3717
  %v3744 = vadd.f32 %v3603, %v3720
  %v3745 = vadd.f32 %v3604, %v3723
  %v3746 = vadd.f32 %v3605, %v3726
  %v3747 = vadd.f32 %v3606, %v3729
  %v3748 = vadd.f32 %v3607, %v3732
  %v3749 = vld [vmem:[%s2916 + $0x6] sm:$0xff]
  %v3750 = vld [vmem:[%s2916 + $0xe] sm:$0xff]
  %v3751 = vld [vmem:[%s2916 + $0x16] sm:$0xff]
  %v3752 = vld [vmem:[%s2916 + $0x1e] sm:$0xff]
  %v3753 = vld [vmem:[%s2916 + $0x26] sm:$0xff]
  %v3754 = vld [vmem:[%s2916 + $0x2e] sm:$0xff]
  %v3755 = vld [vmem:[%s2916 + $0x36] sm:$0xff]
  %v3756 = vld [vmem:[%s2916 + $0x3e] sm:$0xff]
  %v3757 = vld [vmem:[%s2916 + $0x46] sm:$0xff]
  %v3758 = vld [vmem:[%s2916 + $0x4e] sm:$0xff]
  %v3759 = vld [vmem:[%s2916 + $0x56] sm:$0xff]
  %v3760 = vld [vmem:[%s2916 + $0x5e] sm:$0xff]
  %v3761 = vld [vmem:[%s2916 + $0x66] sm:$0xff]
  %v3762 = vld [vmem:[%s2916 + $0x6e] sm:$0xff]
  %v3763 = vld [vmem:[%s2916 + $0x76] sm:$0xff]
  %v3764 = vld [vmem:[%s1397] sm:$0xff]
  %v3765 = vld [vmem:[%s1397 + $0x8] sm:$0xff]
  %v3766 = vld [vmem:[%s1397 + $0x10] sm:$0xff]
  %v3767 = vld [vmem:[%s1397 + $0x18] sm:$0xff]
  %v3769 = vsel %vm371, %v3749, 0
  %v3772 = vsel %vm371, %v3750, 0
  %v3775 = vsel %vm371, %v3751, 0
  %v3778 = vsel %vm371, %v3752, 0
  %v3781 = vsel %vm371, %v3753, 0
  %v3784 = vsel %vm371, %v3754, 0
  %v3787 = vsel %vm371, %v3755, 0
  %v3790 = vsel %vm371, %v3756, 0
  %v3793 = vsel %vm371, %v3757, 0
  %v3796 = vsel %vm371, %v3758, 0
  %v3799 = vsel %vm371, %v3759, 0
  %v3802 = vsel %vm371, %v3760, 0
  %v3805 = vsel %vm371, %v3761, 0
  %v3808 = vsel %vm371, %v3762, 0
  %v3811 = vsel %vm371, %v3763, 0
  %3813 = vmatpush.msra.mxu0 0.0
  %3814 = vmatpush.msra.mxu0 0.0
  %3815 = vmatpush.msra.mxu0 0.0
  %3816 = vmatpush.msra.mxu0 0.0
  %3817 = vmatpush.msra.mxu0 0.0
  %3818 = vmatpush.msra.mxu0 0.0
  %3819 = vmatpush.msra.mxu0 0.0
  %3820 = vmatpush.msra.mxu0 0.0
  %3821 = vmatpush.msra.mxu0 0.0
  %3822 = vmatpush.msra.mxu0 0.0
  %3823 = vmatpush.msra.mxu0 0.0
  %3824 = vmatpush.msra.mxu0 0.0
  %3825 = vmatpush.msra.mxu0 %v3767
  %3826 = vmatpush.msra.mxu0 %v3766
  %3827 = vmatpush.msra.mxu0 %v3765
  %3828 = vmatpush.msra.mxu0 %v3764
  %3829 = vmatmul.f32.gmra.mxu0 %v3769
  %v3830 = vpop.f32.mrf.mxu0
  %v3831 = vadd.f32 0.0, %v3830
  %3832 = vmatmul.f32.gmra.mxu0 %v3772
  %v3833 = vpop.f32.mrf.mxu0
  %v3834 = vadd.f32 0.0, %v3833
  %3835 = vmatmul.f32.gmra.mxu0 %v3775
  %v3836 = vpop.f32.mrf.mxu0
  %v3837 = vadd.f32 0.0, %v3836
  %3838 = vmatmul.f32.gmra.mxu0 %v3778
  %v3839 = vpop.f32.mrf.mxu0
  %v3840 = vadd.f32 0.0, %v3839
  %3841 = vmatmul.f32.gmra.mxu0 %v3781
  %v3842 = vpop.f32.mrf.mxu0
  %v3843 = vadd.f32 0.0, %v3842
  %3844 = vmatmul.f32.gmra.mxu0 %v3784
  %v3845 = vpop.f32.mrf.mxu0
  %v3846 = vadd.f32 0.0, %v3845
  %3847 = vmatmul.f32.gmra.mxu0 %v3787
  %v3848 = vpop.f32.mrf.mxu0
  %v3849 = vadd.f32 0.0, %v3848
  %3850 = vmatmul.f32.gmra.mxu0 %v3790
  %v3851 = vpop.f32.mrf.mxu0
  %v3852 = vadd.f32 0.0, %v3851
  %3853 = vmatmul.f32.gmra.mxu0 %v3793
  %v3854 = vpop.f32.mrf.mxu0
  %v3855 = vadd.f32 0.0, %v3854
  %3856 = vmatmul.f32.gmra.mxu0 %v3796
  %v3857 = vpop.f32.mrf.mxu0
  %v3858 = vadd.f32 0.0, %v3857
  %3859 = vmatmul.f32.gmra.mxu0 %v3799
  %v3860 = vpop.f32.mrf.mxu0
  %v3861 = vadd.f32 0.0, %v3860
  %3862 = vmatmul.f32.gmra.mxu0 %v3802
  %v3863 = vpop.f32.mrf.mxu0
  %v3864 = vadd.f32 0.0, %v3863
  %3865 = vmatmul.f32.gmra.mxu0 %v3805
  %v3866 = vpop.f32.mrf.mxu0
  %v3867 = vadd.f32 0.0, %v3866
  %3868 = vmatmul.f32.gmra.mxu0 %v3808
  %v3869 = vpop.f32.mrf.mxu0
  %v3870 = vadd.f32 0.0, %v3869
  %3871 = vmatmul.f32.gmra.mxu0 %v3811
  %v3872 = vpop.f32.mrf.mxu0
  %v3873 = vadd.f32 0.0, %v3872
  %3874 = vdwg.mxu0
  %v3875 = vadd.f32 %v3734, %v3831
  %v3876 = vadd.f32 %v3735, %v3834
  %v3877 = vadd.f32 %v3736, %v3837
  %v3878 = vadd.f32 %v3737, %v3840
  %v3879 = vadd.f32 %v3738, %v3843
  %v3880 = vadd.f32 %v3739, %v3846
  %v3881 = vadd.f32 %v3740, %v3849
  %v3882 = vadd.f32 %v3741, %v3852
  %v3883 = vadd.f32 %v3742, %v3855
  %v3884 = vadd.f32 %v3743, %v3858
  %v3885 = vadd.f32 %v3744, %v3861
  %v3886 = vadd.f32 %v3745, %v3864
  %v3887 = vadd.f32 %v3746, %v3867
  %v3888 = vadd.f32 %v3747, %v3870
  %v3889 = vadd.f32 %v3748, %v3873
  %v3890 = vld [vmem:[%s2916 + $0x7] sm:$0xff]
  %v3891 = vld [vmem:[%s2916 + $0xf] sm:$0xff]
  %v3892 = vld [vmem:[%s2916 + $0x17] sm:$0xff]
  %v3893 = vld [vmem:[%s2916 + $0x1f] sm:$0xff]
  %v3894 = vld [vmem:[%s2916 + $0x27] sm:$0xff]
  %v3895 = vld [vmem:[%s2916 + $0x2f] sm:$0xff]
  %v3896 = vld [vmem:[%s2916 + $0x37] sm:$0xff]
  %v3897 = vld [vmem:[%s2916 + $0x3f] sm:$0xff]
  %v3898 = vld [vmem:[%s2916 + $0x47] sm:$0xff]
  %v3899 = vld [vmem:[%s2916 + $0x4f] sm:$0xff]
  %v3900 = vld [vmem:[%s2916 + $0x57] sm:$0xff]
  %v3901 = vld [vmem:[%s2916 + $0x5f] sm:$0xff]
  %v3902 = vld [vmem:[%s2916 + $0x67] sm:$0xff]
  %v3903 = vld [vmem:[%s2916 + $0x6f] sm:$0xff]
  %v3904 = vld [vmem:[%s2916 + $0x77] sm:$0xff]
  %v3905 = vld [vmem:[%s1539] sm:$0xff]
  %v3906 = vld [vmem:[%s1539 + $0x8] sm:$0xff]
  %v3907 = vld [vmem:[%s1539 + $0x10] sm:$0xff]
  %v3908 = vld [vmem:[%s1539 + $0x18] sm:$0xff]
  %v3910 = vsel %vm371, %v3890, 0
  %v3913 = vsel %vm371, %v3891, 0
  %v3916 = vsel %vm371, %v3892, 0
  %v3919 = vsel %vm371, %v3893, 0
  %v3922 = vsel %vm371, %v3894, 0
  %v3925 = vsel %vm371, %v3895, 0
  %v3928 = vsel %vm371, %v3896, 0
  %v3931 = vsel %vm371, %v3897, 0
  %v3934 = vsel %vm371, %v3898, 0
  %v3937 = vsel %vm371, %v3899, 0
  %v3940 = vsel %vm371, %v3900, 0
  %v3943 = vsel %vm371, %v3901, 0
  %v3946 = vsel %vm371, %v3902, 0
  %v3949 = vsel %vm371, %v3903, 0
  %v3952 = vsel %vm371, %v3904, 0
  %3954 = vmatpush.msra.mxu0 0.0
  %3955 = vmatpush.msra.mxu0 0.0
  %3956 = vmatpush.msra.mxu0 0.0
  %3957 = vmatpush.msra.mxu0 0.0
  %3958 = vmatpush.msra.mxu0 0.0
  %3959 = vmatpush.msra.mxu0 0.0
  %3960 = vmatpush.msra.mxu0 0.0
  %3961 = vmatpush.msra.mxu0 0.0
  %3962 = vmatpush.msra.mxu0 0.0
  %3963 = vmatpush.msra.mxu0 0.0
  %3964 = vmatpush.msra.mxu0 0.0
  %3965 = vmatpush.msra.mxu0 0.0
  %3966 = vmatpush.msra.mxu0 %v3908
  %3967 = vmatpush.msra.mxu0 %v3907
  %3968 = vmatpush.msra.mxu0 %v3906
  %3969 = vmatpush.msra.mxu0 %v3905
  %3970 = vmatmul.f32.gmra.mxu0 %v3910
  %v3971 = vpop.f32.mrf.mxu0
  %v3972 = vadd.f32 0.0, %v3971
  %3973 = vmatmul.f32.gmra.mxu0 %v3913
  %v3974 = vpop.f32.mrf.mxu0
  %v3975 = vadd.f32 0.0, %v3974
  %3976 = vmatmul.f32.gmra.mxu0 %v3916
  %v3977 = vpop.f32.mrf.mxu0
  %v3978 = vadd.f32 0.0, %v3977
  %3979 = vmatmul.f32.gmra.mxu0 %v3919
  %v3980 = vpop.f32.mrf.mxu0
  %v3981 = vadd.f32 0.0, %v3980
  %3982 = vmatmul.f32.gmra.mxu0 %v3922
  %v3983 = vpop.f32.mrf.mxu0
  %v3984 = vadd.f32 0.0, %v3983
  %3985 = vmatmul.f32.gmra.mxu0 %v3925
  %v3986 = vpop.f32.mrf.mxu0
  %v3987 = vadd.f32 0.0, %v3986
  %3988 = vmatmul.f32.gmra.mxu0 %v3928
  %v3989 = vpop.f32.mrf.mxu0
  %v3990 = vadd.f32 0.0, %v3989
  %3991 = vmatmul.f32.gmra.mxu0 %v3931
  %v3992 = vpop.f32.mrf.mxu0
  %v3993 = vadd.f32 0.0, %v3992
  %3994 = vmatmul.f32.gmra.mxu0 %v3934
  %v3995 = vpop.f32.mrf.mxu0
  %v3996 = vadd.f32 0.0, %v3995
  %3997 = vmatmul.f32.gmra.mxu0 %v3937
  %v3998 = vpop.f32.mrf.mxu0
  %v3999 = vadd.f32 0.0, %v3998
  %4000 = vmatmul.f32.gmra.mxu0 %v3940
  %v4001 = vpop.f32.mrf.mxu0
  %v4002 = vadd.f32 0.0, %v4001
  %4003 = vmatmul.f32.gmra.mxu0 %v3943
  %v4004 = vpop.f32.mrf.mxu0
  %v4005 = vadd.f32 0.0, %v4004
  %4006 = vmatmul.f32.gmra.mxu0 %v3946
  %v4007 = vpop.f32.mrf.mxu0
  %v4008 = vadd.f32 0.0, %v4007
  %4009 = vmatmul.f32.gmra.mxu0 %v3949
  %v4010 = vpop.f32.mrf.mxu0
  %v4011 = vadd.f32 0.0, %v4010
  %4012 = vmatmul.f32.gmra.mxu0 %v3952
  %v4013 = vpop.f32.mrf.mxu0
  %v4014 = vadd.f32 0.0, %v4013
  %4015 = vdwg.mxu0
  %v4016 = vadd.f32 %v3875, %v3972
  %v4017 = vadd.f32 %v3876, %v3975
  %v4018 = vadd.f32 %v3877, %v3978
  %v4019 = vadd.f32 %v3878, %v3981
  %v4020 = vadd.f32 %v3879, %v3984
  %v4021 = vadd.f32 %v3880, %v3987
  %v4022 = vadd.f32 %v3881, %v3990
  %v4023 = vadd.f32 %v3882, %v3993
  %v4024 = vadd.f32 %v3883, %v3996
  %v4025 = vadd.f32 %v3884, %v3999
  %v4026 = vadd.f32 %v3885, %v4002
  %v4027 = vadd.f32 %v3886, %v4005
  %v4028 = vadd.f32 %v3887, %v4008
  %v4029 = vadd.f32 %v3888, %v4011
  %v4030 = vadd.f32 %v3889, %v4014
  %4031 = vmatpush.msra.mxu0 0.0
  %4032 = vmatpush.msra.mxu0 %v4030
  %4033 = vmatpush.msra.mxu0 %v4029
  %4034 = vmatpush.msra.mxu0 %v4028
  %4035 = vmatpush.msra.mxu0 %v4027
  %4036 = vmatpush.msra.mxu0 %v4026
  %4037 = vmatpush.msra.mxu0 %v4025
  %4038 = vmatpush.msra.mxu0 %v4024
  %4039 = vmatpush.msra.mxu0 %v4023
  %4040 = vmatpush.msra.mxu0 %v4022
  %4041 = vmatpush.msra.mxu0 %v4021
  %4042 = vmatpush.msra.mxu0 %v4020
  %4043 = vmatpush.msra.mxu0 %v4019
  %4044 = vmatpush.msra.mxu0 %v4018
  %4045 = vmatpush.msra.mxu0 %v4017
  %4046 = vmatpush.msra.mxu0 %v4016
  %4047 = vmatmul.f32.gmra.mxu0 %v1668
  %v4048 = vpop.f32.mrf.mxu0
  %v4049 = vadd.f32 0.0, %v4048
  %4050 = vmatmul.f32.gmra.mxu0 %v1671
  %v4051 = vpop.f32.mrf.mxu0
  %v4052 = vadd.f32 0.0, %v4051
  %4053 = vmatmul.f32.gmra.mxu0 %v1674
  %v4054 = vpop.f32.mrf.mxu0
  %v4055 = vadd.f32 0.0, %v4054
  %4056 = vmatmul.f32.gmra.mxu0 %v1677
  %v4057 = vpop.f32.mrf.mxu0
  %v4058 = vadd.f32 0.0, %v4057
  %4059 = vdwg.mxu0
  %v4060 = vsel %vm371, %v4049, 0.0
  %v4061 = vsel %vm371, %v4052, 0.0
  %v4062 = vadd.f32 %v4060, %v4061
  %v4063 = vsel %vm371, %v4055, 0.0
  %v4064 = vadd.f32 %v4062, %v4063
  %v4065 = vsel %vm1713, %v4058, 0.0
  %v4066 = vadd.f32 %v4064, %v4065
  %4067 = vadd.xlane.f32.xlu0 %v4066
  %v4068 = vpop.xlane.xlu0 %4067
  %v4069 = vrot.slane %v4068, 4
  %v4070 = vadd.f32 %v4068, %v4069
  %v4071 = vrot.slane %v4070, 2
  %v4072 = vadd.f32 %v4070, %v4071
  %v4073 = vrot.slane %v4072, 1
  %v4074 = vadd.f32 %v4072, %v4073
  %s4075 = vtos %v4074
  %v4076 = vmul.f32 %v4049, %v4049
  %v4077 = vmul.f32 %v4052, %v4052
  %v4078 = vmul.f32 %v4055, %v4055
  %v4079 = vmul.f32 %v4058, %v4058
  %v4080 = vsel %vm371, %v4076, 0.0
  %v4081 = vsel %vm371, %v4077, 0.0
  %v4082 = vadd.f32 %v4080, %v4081
  %v4083 = vsel %vm371, %v4078, 0.0
  %v4084 = vadd.f32 %v4082, %v4083
  %v4085 = vsel %vm1713, %v4079, 0.0
  %v4086 = vadd.f32 %v4084, %v4085
  %4087 = vadd.xlane.f32.xlu0 %v4086
  %v4088 = vpop.xlane.xlu0 %4087
  %v4089 = vrot.slane %v4088, 4
  %v4090 = vadd.f32 %v4088, %v4089
  %v4091 = vrot.slane %v4090, 2
  %v4092 = vadd.f32 %v4090, %v4091
  %v4093 = vrot.slane %v4092, 1
  %v4094 = vadd.f32 %v4092, %v4093
  %s4095 = vtos %v4094
  %s4096 = smul.f32 %s4075, 0.0010416667
  %s4097 = smul.f32 %s4095, 0.0010416667
  %s4098 = smul.f32 %s4096, %s4096
  %s4099 = ssub.f32 %s4097, %s4098
  %s4100 = sadd.f32 %s4099, 1e-05
  %v4101 = vstv %s4100
  %v4102 = vrsqrt.pop %v4101
  %v4103 = vmul.f32 %v4102, %v4101
  %v4104 = vmul.f32 %v4103, %v4102
  %v4105 = vmul.f32 0.5, %v4104
  %v4106 = vsub.f32 1.5, %v4105
  %v4107 = vmul.f32 %v4102, %v4106
  %vm4108 = vweird.f32 %v4101
  %vm4109 = vweird.f32 %v4102
  %vm4110 = vmor %vm4108, %vm4109
  %v4111 = vsel %vm4110, %v4102, %v4107
  %s4112 = vtos %v4111
  %v4113 = vstv %s4112
  %v4114 = vmul.f32 %v92, %v4113
  %v4115 = vstv %s4096
  %v4116 = vmul.f32 %v4115, %v4114
  %v4117 = vsub.f32 %v93, %v4116
  %v4119 = vperm.slane %v4114, 0
  %v4121 = vmul.f32 %v4049, %v4119
  %v4122 = vmul.f32 %v4052, %v4119
  %v4123 = vmul.f32 %v4055, %v4119
  %v4124 = vmul.f32 %v4058, %v4119
  %v4126 = vperm.slane %v4117, 0
  %v4128 = vadd.f32 %v4121, %v4126
  %v4129 = vadd.f32 %v4122, %v4126
  %v4130 = vadd.f32 %v4123, %v4126
  %v4131 = vadd.f32 %v4124, %v4126
  %v4132 = vmax.f32 %v4128, 0.0
  %v4133 = vmax.f32 %v4129, 0.0
  %v4134 = vmax.f32 %v4130, 0.0
  %v4135 = vmax.f32 %v4131, 0.0
  %s4136 = scalar_lea.vmem [#allocation3], 32
  %4137 = vst.msk [vmem:[%s4136] sm:$0xff] %vm371, %v4132
  %4138 = vst.msk [vmem:[%s4136 + $0x8] sm:$0xff] %vm371, %v4133
  %4139 = vst.msk [vmem:[%s4136 + $0x10] sm:$0xff] %vm371, %v4134
  %4140 = vst.msk [vmem:[%s4136 + $0x18] sm:$0x3f] %vm1713, %v4135
  %v4141 = vld [vmem:[%s4136] sm:$0xff]
  %v4142 = vld [vmem:[%s4136 + $0x8] sm:$0xff]
  %v4143 = vld [vmem:[%s4136 + $0x10] sm:$0xff]
  %v4144 = vld [vmem:[%s4136 + $0x18] sm:$0x7]
  %v4145 = vld [vmem:[%s7] sm:$0xff]
  %v4146 = vld [vmem:[%s7 + $0x8] sm:$0xff]
  %v4147 = vld [vmem:[%s7 + $0x10] sm:$0xff]
  %v4148 = vld [vmem:[%s7 + $0x18] sm:$0xff]
  %v4149 = vld [vmem:[%s4136 + $0x1] sm:$0xff]
  %v4150 = vld [vmem:[%s4136 + $0x9] sm:$0xff]
  %v4151 = vld [vmem:[%s4136 + $0x11] sm:$0xff]
  %v4152 = vld [vmem:[%s4136 + $0x19] sm:$0x7]
  %v4153 = vld [vmem:[%s1801] sm:$0xff]
  %v4154 = vld [vmem:[%s1801 + $0x8] sm:$0xff]
  %v4155 = vld [vmem:[%s1801 + $0x10] sm:$0xff]
  %v4156 = vld [vmem:[%s1801 + $0x18] sm:$0xff]
  %v4158 = vsel %vm371, %v4149, 0
  %v4161 = vsel %vm371, %v4150, 0
  %v4164 = vsel %vm371, %v4151, 0
  %v4167 = vsel %vm371, %v4152, 0
  %4169 = vmatpush.msra.mxu0 0.0
  %4170 = vmatpush.msra.mxu0 0.0
  %4171 = vmatpush.msra.mxu0 0.0
  %4172 = vmatpush.msra.mxu0 0.0
  %4173 = vmatpush.msra.mxu0 0.0
  %4174 = vmatpush.msra.mxu0 0.0
  %4175 = vmatpush.msra.mxu0 0.0
  %4176 = vmatpush.msra.mxu0 0.0
  %4177 = vmatpush.msra.mxu0 0.0
  %4178 = vmatpush.msra.mxu0 0.0
  %4179 = vmatpush.msra.mxu0 0.0
  %4180 = vmatpush.msra.mxu0 0.0
  %4181 = vmatpush.msra.mxu0 %v4156
  %4182 = vmatpush.msra.mxu0 %v4155
  %4183 = vmatpush.msra.mxu0 %v4154
  %4184 = vmatpush.msra.mxu0 %v4153
  %4185 = vmatmul.f32.gmra.mxu0 %v4158
  %v4186 = vpop.f32.mrf.mxu0
  %v4187 = vadd.f32 0.0, %v4186
  %4188 = vmatmul.f32.gmra.mxu0 %v4161
  %v4189 = vpop.f32.mrf.mxu0
  %v4190 = vadd.f32 0.0, %v4189
  %4191 = vmatmul.f32.gmra.mxu0 %v4164
  %v4192 = vpop.f32.mrf.mxu0
  %v4193 = vadd.f32 0.0, %v4192
  %4194 = vmatmul.f32.gmra.mxu0 %v4167
  %v4195 = vpop.f32.mrf.mxu0
  %v4196 = vadd.f32 0.0, %v4195
  %4197 = vdwg.mxu0
  %v4199 = vsel %vm371, %v4141, 0
  %v4202 = vsel %vm371, %v4142, 0
  %v4205 = vsel %vm371, %v4143, 0
  %v4208 = vsel %vm371, %v4144, 0
  %4210 = vmatpush.msra.mxu0 0.0
  %4211 = vmatpush.msra.mxu0 0.0
  %4212 = vmatpush.msra.mxu0 0.0
  %4213 = vmatpush.msra.mxu0 0.0
  %4214 = vmatpush.msra.mxu0 0.0
  %4215 = vmatpush.msra.mxu0 0.0
  %4216 = vmatpush.msra.mxu0 0.0
  %4217 = vmatpush.msra.mxu0 0.0
  %4218 = vmatpush.msra.mxu0 0.0
  %4219 = vmatpush.msra.mxu0 0.0
  %4220 = vmatpush.msra.mxu0 0.0
  %4221 = vmatpush.msra.mxu0 0.0
  %4222 = vmatpush.msra.mxu0 %v4148
  %4223 = vmatpush.msra.mxu0 %v4147
  %4224 = vmatpush.msra.mxu0 %v4146
  %4225 = vmatpush.msra.mxu0 %v4145
  %4226 = vmatmul.f32.gmra.mxu0 %v4199
  %v4227 = vpop.f32.mrf.mxu0
  %v4228 = vadd.f32 %v4187, %v4227
  %4229 = vmatmul.f32.gmra.mxu0 %v4202
  %v4230 = vpop.f32.mrf.mxu0
  %v4231 = vadd.f32 %v4190, %v4230
  %4232 = vmatmul.f32.gmra.mxu0 %v4205
  %v4233 = vpop.f32.mrf.mxu0
  %v4234 = vadd.f32 %v4193, %v4233
  %4235 = vmatmul.f32.gmra.mxu0 %v4208
  %v4236 = vpop.f32.mrf.mxu0
  %v4237 = vadd.f32 %v4196, %v4236
  %4238 = vdwg.mxu0
  %v4239 = vld [vmem:[%s4136 + $0x2] sm:$0xff]
  %v4240 = vld [vmem:[%s4136 + $0xa] sm:$0xff]
  %v4241 = vld [vmem:[%s4136 + $0x12] sm:$0xff]
  %v4242 = vld [vmem:[%s4136 + $0x1a] sm:$0x7]
  %v4243 = vld [vmem:[%s1892] sm:$0xff]
  %v4244 = vld [vmem:[%s1892 + $0x8] sm:$0xff]
  %v4245 = vld [vmem:[%s1892 + $0x10] sm:$0xff]
  %v4246 = vld [vmem:[%s1892 + $0x18] sm:$0xff]
  %v4248 = vsel %vm371, %v4239, 0
  %v4251 = vsel %vm371, %v4240, 0
  %v4254 = vsel %vm371, %v4241, 0
  %v4257 = vsel %vm371, %v4242, 0
  %4259 = vmatpush.msra.mxu0 0.0
  %4260 = vmatpush.msra.mxu0 0.0
  %4261 = vmatpush.msra.mxu0 0.0
  %4262 = vmatpush.msra.mxu0 0.0
  %4263 = vmatpush.msra.mxu0 0.0
  %4264 = vmatpush.msra.mxu0 0.0
  %4265 = vmatpush.msra.mxu0 0.0
  %4266 = vmatpush.msra.mxu0 0.0
  %4267 = vmatpush.msra.mxu0 0.0
  %4268 = vmatpush.msra.mxu0 0.0
  %4269 = vmatpush.msra.mxu0 0.0
  %4270 = vmatpush.msra.mxu0 0.0
  %4271 = vmatpush.msra.mxu0 %v4246
  %4272 = vmatpush.msra.mxu0 %v4245
  %4273 = vmatpush.msra.mxu0 %v4244
  %4274 = vmatpush.msra.mxu0 %v4243
  %4275 = vmatmul.f32.gmra.mxu0 %v4248
  %v4276 = vpop.f32.mrf.mxu0
  %v4277 = vadd.f32 0.0, %v4276
  %4278 = vmatmul.f32.gmra.mxu0 %v4251
  %v4279 = vpop.f32.mrf.mxu0
  %v4280 = vadd.f32 0.0, %v4279
  %4281 = vmatmul.f32.gmra.mxu0 %v4254
  %v4282 = vpop.f32.mrf.mxu0
  %v4283 = vadd.f32 0.0, %v4282
  %4284 = vmatmul.f32.gmra.mxu0 %v4257
  %v4285 = vpop.f32.mrf.mxu0
  %v4286 = vadd.f32 0.0, %v4285
  %4287 = vdwg.mxu0
  %v4288 = vadd.f32 %v4228, %v4277
  %v4289 = vadd.f32 %v4231, %v4280
  %v4290 = vadd.f32 %v4234, %v4283
  %v4291 = vadd.f32 %v4237, %v4286
  %v4292 = vld [vmem:[%s4136 + $0x3] sm:$0xff]
  %v4293 = vld [vmem:[%s4136 + $0xb] sm:$0xff]
  %v4294 = vld [vmem:[%s4136 + $0x13] sm:$0xff]
  %v4295 = vld [vmem:[%s4136 + $0x1b] sm:$0x7]
  %v4296 = vld [vmem:[%s1946] sm:$0xff]
  %v4297 = vld [vmem:[%s1946 + $0x8] sm:$0xff]
  %v4298 = vld [vmem:[%s1946 + $0x10] sm:$0xff]
  %v4299 = vld [vmem:[%s1946 + $0x18] sm:$0xff]
  %v4301 = vsel %vm371, %v4292, 0
  %v4304 = vsel %vm371, %v4293, 0
  %v4307 = vsel %vm371, %v4294, 0
  %v4310 = vsel %vm371, %v4295, 0
  %4312 = vmatpush.msra.mxu0 0.0
  %4313 = vmatpush.msra.mxu0 0.0
  %4314 = vmatpush.msra.mxu0 0.0
  %4315 = vmatpush.msra.mxu0 0.0
  %4316 = vmatpush.msra.mxu0 0.0
  %4317 = vmatpush.msra.mxu0 0.0
  %4318 = vmatpush.msra.mxu0 0.0
  %4319 = vmatpush.msra.mxu0 0.0
  %4320 = vmatpush.msra.mxu0 0.0
  %4321 = vmatpush.msra.mxu0 0.0
  %4322 = vmatpush.msra.mxu0 0.0
  %4323 = vmatpush.msra.mxu0 0.0
  %4324 = vmatpush.msra.mxu0 %v4299
  %4325 = vmatpush.msra.mxu0 %v4298
  %4326 = vmatpush.msra.mxu0 %v4297
  %4327 = vmatpush.msra.mxu0 %v4296
  %4328 = vmatmul.f32.gmra.mxu0 %v4301
  %v4329 = vpop.f32.mrf.mxu0
  %v4330 = vadd.f32 0.0, %v4329
  %4331 = vmatmul.f32.gmra.mxu0 %v4304
  %v4332 = vpop.f32.mrf.mxu0
  %v4333 = vadd.f32 0.0, %v4332
  %4334 = vmatmul.f32.gmra.mxu0 %v4307
  %v4335 = vpop.f32.mrf.mxu0
  %v4336 = vadd.f32 0.0, %v4335
  %4337 = vmatmul.f32.gmra.mxu0 %v4310
  %v4338 = vpop.f32.mrf.mxu0
  %v4339 = vadd.f32 0.0, %v4338
  %4340 = vdwg.mxu0
  %v4341 = vadd.f32 %v4288, %v4330
  %v4342 = vadd.f32 %v4289, %v4333
  %v4343 = vadd.f32 %v4290, %v4336
  %v4344 = vadd.f32 %v4291, %v4339
  %v4346 = vsel %vm2003, %v4344, 0
  %4348 = vmatpush.msra.mxu0 0.0
  %4349 = vmatpush.msra.mxu0 0.0
  %4350 = vmatpush.msra.mxu0 0.0
  %4351 = vmatpush.msra.mxu0 0.0
  %4352 = vmatpush.msra.mxu0 0.0
  %4353 = vmatpush.msra.mxu0 0.0
  %4354 = vmatpush.msra.mxu0 0.0
  %4355 = vmatpush.msra.mxu0 0.0
  %4356 = vmatpush.msra.mxu0 0.0
  %4357 = vmatpush.msra.mxu0 0.0
  %4358 = vmatpush.msra.mxu0 0.0
  %4359 = vmatpush.msra.mxu0 0.0
  %4360 = vmatpush.msra.mxu0 %v4346
  %4361 = vmatpush.msra.mxu0 %v4343
  %4362 = vmatpush.msra.mxu0 %v4342
  %4363 = vmatpush.msra.mxu0 %v4341
  %4364 = vmatmul.f32.gmra.mxu0 %v1998
  %v4365 = vpop.f32.mrf.mxu0
  %v4366 = vadd.f32 0.0, %v4365
  %4367 = vmatmul.f32.gmra.mxu0 %v2001
  %v4368 = vpop.f32.mrf.mxu0
  %v4369 = vadd.f32 0.0, %v4368
  %4370 = vdwg.mxu0
  %v4371 = vsel %vm371, %v4366, 0.0
  %v4372 = vsel %vm1713, %v4369, 0.0
  %v4373 = vadd.f32 %v4371, %v4372
  %4374 = vadd.xlane.f32.xlu0 %v4373
  %v4375 = vpop.xlane.xlu0 %4374
  %v4376 = vrot.slane %v4375, 4
  %v4377 = vadd.f32 %v4375, %v4376
  %v4378 = vrot.slane %v4377, 2
  %v4379 = vadd.f32 %v4377, %v4378
  %v4380 = vrot.slane %v4379, 1
  %v4381 = vadd.f32 %v4379, %v4380
  %s4382 = vtos %v4381
  %v4383 = vmul.f32 %v4366, %v4366
  %v4384 = vmul.f32 %v4369, %v4369
  %v4385 = vsel %vm371, %v4383, 0.0
  %v4386 = vsel %vm1713, %v4384, 0.0
  %v4387 = vadd.f32 %v4385, %v4386
  %4388 = vadd.xlane.f32.xlu0 %v4387
  %v4389 = vpop.xlane.xlu0 %4388
  %v4390 = vrot.slane %v4389, 4
  %v4391 = vadd.f32 %v4389, %v4390
  %v4392 = vrot.slane %v4391, 2
  %v4393 = vadd.f32 %v4391, %v4392
  %v4394 = vrot.slane %v4393, 1
  %v4395 = vadd.f32 %v4393, %v4394
  %s4396 = vtos %v4395
  %s4397 = smul.f32 %s4382, 0.002232143
  %s4398 = smul.f32 %s4396, 0.002232143
  %s4399 = smul.f32 %s4397, %s4397
  %s4400 = ssub.f32 %s4398, %s4399
  %s4401 = sadd.f32 %s4400, 1e-05
  %v4402 = vstv %s4401
  %v4403 = vrsqrt.pop %v4402
  %v4404 = vmul.f32 %v4403, %v4402
  %v4405 = vmul.f32 %v4404, %v4403
  %v4406 = vmul.f32 0.5, %v4405
  %v4407 = vsub.f32 1.5, %v4406
  %v4408 = vmul.f32 %v4403, %v4407
  %vm4409 = vweird.f32 %v4402
  %vm4410 = vweird.f32 %v4403
  %vm4411 = vmor %vm4409, %vm4410
  %v4412 = vsel %vm4411, %v4403, %v4408
  %s4413 = vtos %v4412
  %v4414 = vstv %s4413
  %v4415 = vmul.f32 %v94, %v4414
  %v4416 = vstv %s4397
  %v4417 = vmul.f32 %v4416, %v4415
  %v4418 = vsub.f32 %v95, %v4417
  %v4420 = vperm.slane %v4415, 0
  %v4422 = vmul.f32 %v4366, %v4420
  %v4423 = vmul.f32 %v4369, %v4420
  %v4425 = vperm.slane %v4418, 0
  %v4427 = vadd.f32 %v4422, %v4425
  %v4428 = vadd.f32 %v4423, %v4425
  %v4429 = vmax.f32 %v4427, 0.0
  %v4430 = vmax.f32 %v4428, 0.0
  %s4431 = scalar_lea.vmem [#allocation4], 16
  %4432 = vst.msk [vmem:[%s4431 + $0x2] sm:$0xff] %vm371, %v4429
  %4433 = vst.msk [vmem:[%s4431 + $0xa] sm:$0x3f] %vm1713, %v4430
  %4434 = vst.msk [vmem:[%s4431] sm:$0x1] %vm2092, %v4429
  %4435 = vst.msk [vmem:[%s4431 + $0x1] sm:$0x1] %vm2092, %v4429
  %v4436 = vld [vmem:[%s4431] sm:$0xff]
  %v4437 = vld [vmem:[%s4431 + $0x8] sm:$0x3f]
  %v4438 = vld [vmem:[%s10] sm:$0xff]
  %v4439 = vld [vmem:[%s10 + $0x8] sm:$0xff]
  %v4440 = vld [vmem:[%s10 + $0x10] sm:$0xff]
  %v4441 = vld [vmem:[%s10 + $0x18] sm:$0xff]
  %v4442 = vld [vmem:[%s4431 + $0x1] sm:$0xff]
  %v4443 = vld [vmem:[%s4431 + $0x9] sm:$0x3f]
  %v4444 = vld [vmem:[%s2103] sm:$0xff]
  %v4445 = vld [vmem:[%s2103 + $0x8] sm:$0xff]
  %v4446 = vld [vmem:[%s2103 + $0x10] sm:$0xff]
  %v4447 = vld [vmem:[%s2103 + $0x18] sm:$0xff]
  %v4449 = vsel %vm371, %v4442, 0
  %v4452 = vsel %vm371, %v4443, 0
  %4454 = vmatpush.msra.mxu0 0.0
  %4455 = vmatpush.msra.mxu0 0.0
  %4456 = vmatpush.msra.mxu0 0.0
  %4457 = vmatpush.msra.mxu0 0.0
  %4458 = vmatpush.msra.mxu0 0.0
  %4459 = vmatpush.msra.mxu0 0.0
  %4460 = vmatpush.msra.mxu0 0.0
  %4461 = vmatpush.msra.mxu0 0.0
  %4462 = vmatpush.msra.mxu0 0.0
  %4463 = vmatpush.msra.mxu0 0.0
  %4464 = vmatpush.msra.mxu0 0.0
  %4465 = vmatpush.msra.mxu0 0.0
  %4466 = vmatpush.msra.mxu0 %v4447
  %4467 = vmatpush.msra.mxu0 %v4446
  %4468 = vmatpush.msra.mxu0 %v4445
  %4469 = vmatpush.msra.mxu0 %v4444
  %4470 = vmatmul.f32.gmra.mxu0 %v4449
  %v4471 = vpop.f32.mrf.mxu0
  %v4472 = vadd.f32 0.0, %v4471
  %4473 = vmatmul.f32.gmra.mxu0 %v4452
  %v4474 = vpop.f32.mrf.mxu0
  %v4475 = vadd.f32 0.0, %v4474
  %4476 = vdwg.mxu0
  %v4478 = vsel %vm371, %v4436, 0
  %v4481 = vsel %vm371, %v4437, 0
  %4483 = vmatpush.msra.mxu0 0.0
  %4484 = vmatpush.msra.mxu0 0.0
  %4485 = vmatpush.msra.mxu0 0.0
  %4486 = vmatpush.msra.mxu0 0.0
  %4487 = vmatpush.msra.mxu0 0.0
  %4488 = vmatpush.msra.mxu0 0.0
  %4489 = vmatpush.msra.mxu0 0.0
  %4490 = vmatpush.msra.mxu0 0.0
  %4491 = vmatpush.msra.mxu0 0.0
  %4492 = vmatpush.msra.mxu0 0.0
  %4493 = vmatpush.msra.mxu0 0.0
  %4494 = vmatpush.msra.mxu0 0.0
  %4495 = vmatpush.msra.mxu0 %v4441
  %4496 = vmatpush.msra.mxu0 %v4440
  %4497 = vmatpush.msra.mxu0 %v4439
  %4498 = vmatpush.msra.mxu0 %v4438
  %4499 = vmatmul.f32.gmra.mxu0 %v4478
  %v4500 = vpop.f32.mrf.mxu0
  %v4501 = vadd.f32 %v4472, %v4500
  %4502 = vmatmul.f32.gmra.mxu0 %v4481
  %v4503 = vpop.f32.mrf.mxu0
  %v4504 = vadd.f32 %v4475, %v4503
  %4505 = vdwg.mxu0
  %v4506 = vld [vmem:[%s4431 + $0x2] sm:$0xff]
  %v4507 = vld [vmem:[%s4431 + $0xa] sm:$0x3f]
  %v4508 = vld [vmem:[%s2168] sm:$0xff]
  %v4509 = vld [vmem:[%s2168 + $0x8] sm:$0xff]
  %v4510 = vld [vmem:[%s2168 + $0x10] sm:$0xff]
  %v4511 = vld [vmem:[%s2168 + $0x18] sm:$0xff]
  %v4513 = vsel %vm371, %v4506, 0
  %v4516 = vsel %vm371, %v4507, 0
  %4518 = vmatpush.msra.mxu0 0.0
  %4519 = vmatpush.msra.mxu0 0.0
  %4520 = vmatpush.msra.mxu0 0.0
  %4521 = vmatpush.msra.mxu0 0.0
  %4522 = vmatpush.msra.mxu0 0.0
  %4523 = vmatpush.msra.mxu0 0.0
  %4524 = vmatpush.msra.mxu0 0.0
  %4525 = vmatpush.msra.mxu0 0.0
  %4526 = vmatpush.msra.mxu0 0.0
  %4527 = vmatpush.msra.mxu0 0.0
  %4528 = vmatpush.msra.mxu0 0.0
  %4529 = vmatpush.msra.mxu0 0.0
  %4530 = vmatpush.msra.mxu0 %v4511
  %4531 = vmatpush.msra.mxu0 %v4510
  %4532 = vmatpush.msra.mxu0 %v4509
  %4533 = vmatpush.msra.mxu0 %v4508
  %4534 = vmatmul.f32.gmra.mxu0 %v4513
  %v4535 = vpop.f32.mrf.mxu0
  %v4536 = vadd.f32 0.0, %v4535
  %4537 = vmatmul.f32.gmra.mxu0 %v4516
  %v4538 = vpop.f32.mrf.mxu0
  %v4539 = vadd.f32 0.0, %v4538
  %4540 = vdwg.mxu0
  %v4541 = vadd.f32 %v4501, %v4536
  %v4542 = vadd.f32 %v4504, %v4539
  %v4543 = vadd.f32 %v4541, %v2205
  %v4544 = vadd.f32 %v4542, %v2205
  %v4545 = vsel %vm371, %v4543, 0.0
  %v4546 = vsel %vm1713, %v4544, 0.0
  %v4547 = vadd.f32 %v4545, %v4546
  %4548 = vadd.xlane.f32.xlu0 %v4547
  %v4549 = vpop.xlane.xlu0 %4548
  %v4550 = vrot.slane %v4549, 4
  %v4551 = vadd.f32 %v4549, %v4550
  %v4552 = vrot.slane %v4551, 2
  %v4553 = vadd.f32 %v4551, %v4552
  %v4554 = vrot.slane %v4553, 1
  %v4555 = vadd.f32 %v4553, %v4554
  %s4556 = vtos %v4555
  %v4557 = vmul.f32 %v4543, %v4543
  %v4558 = vmul.f32 %v4544, %v4544
  %v4559 = vsel %vm371, %v4557, 0.0
  %v4560 = vsel %vm1713, %v4558, 0.0
  %v4561 = vadd.f32 %v4559, %v4560
  %4562 = vadd.xlane.f32.xlu0 %v4561
  %v4563 = vpop.xlane.xlu0 %4562
  %v4564 = vrot.slane %v4563, 4
  %v4565 = vadd.f32 %v4563, %v4564
  %v4566 = vrot.slane %v4565, 2
  %v4567 = vadd.f32 %v4565, %v4566
  %v4568 = vrot.slane %v4567, 1
  %v4569 = vadd.f32 %v4567, %v4568
  %s4570 = vtos %v4569
  %s4571 = smul.f32 %s4556, 0.002232143
  %s4572 = smul.f32 %s4570, 0.002232143
  %s4573 = smul.f32 %s4571, %s4571
  %s4574 = ssub.f32 %s4572, %s4573
  %s4575 = sadd.f32 %s4574, 1e-05
  %v4576 = vstv %s4575
  %v4577 = vrsqrt.pop %v4576
  %v4578 = vmul.f32 %v4577, %v4576
  %v4579 = vmul.f32 %v4578, %v4577
  %v4580 = vmul.f32 0.5, %v4579
  %v4581 = vsub.f32 1.5, %v4580
  %v4582 = vmul.f32 %v4577, %v4581
  %vm4583 = vweird.f32 %v4576
  %vm4584 = vweird.f32 %v4577
  %vm4585 = vmor %vm4583, %vm4584
  %v4586 = vsel %vm4585, %v4577, %v4582
  %s4587 = vtos %v4586
  %v4588 = vstv %s4587
  %v4589 = vmul.f32 %v97, %v4588
  %v4590 = vstv %s4571
  %v4591 = vmul.f32 %v4590, %v4589
  %v4592 = vsub.f32 %v98, %v4591
  %v4594 = vperm.slane %v4589, 0
  %v4596 = vmul.f32 %v4543, %v4594
  %v4597 = vmul.f32 %v4544, %v4594
  %v4599 = vperm.slane %v4592, 0
  %v4601 = vadd.f32 %v4596, %v4599
  %v4602 = vadd.f32 %v4597, %v4599
  %v4603 = vmax.f32 %v4601, 0.0
  %v4604 = vmax.f32 %v4602, 0.0
  %s4605 = scalar_lea.vmem [#allocation5], 16
  %4606 = vst.msk [vmem:[%s4605 + $0x2] sm:$0xff] %vm371, %v4603
  %4607 = vst.msk [vmem:[%s4605 + $0xa] sm:$0x3f] %vm1713, %v4604
  %4608 = vst.msk [vmem:[%s4605] sm:$0x1] %vm2092, %v4603
  %4609 = vst.msk [vmem:[%s4605 + $0x1] sm:$0x1] %vm2092, %v4603
  %v4610 = vld [vmem:[%s4605] sm:$0xff]
  %v4611 = vld [vmem:[%s4605 + $0x8] sm:$0x3f]
  %v4612 = vld [vmem:[%s14] sm:$0xff]
  %v4613 = vld [vmem:[%s14 + $0x8] sm:$0xff]
  %v4614 = vld [vmem:[%s14 + $0x10] sm:$0xff]
  %v4615 = vld [vmem:[%s14 + $0x18] sm:$0xff]
  %v4616 = vld [vmem:[%s4605 + $0x1] sm:$0xff]
  %v4617 = vld [vmem:[%s4605 + $0x9] sm:$0x3f]
  %v4618 = vld [vmem:[%s2281] sm:$0xff]
  %v4619 = vld [vmem:[%s2281 + $0x8] sm:$0xff]
  %v4620 = vld [vmem:[%s2281 + $0x10] sm:$0xff]
  %v4621 = vld [vmem:[%s2281 + $0x18] sm:$0xff]
  %v4623 = vsel %vm371, %v4616, 0
  %v4626 = vsel %vm371, %v4617, 0
  %4628 = vmatpush.msra.mxu0 0.0
  %4629 = vmatpush.msra.mxu0 0.0
  %4630 = vmatpush.msra.mxu0 0.0
  %4631 = vmatpush.msra.mxu0 0.0
  %4632 = vmatpush.msra.mxu0 0.0
  %4633 = vmatpush.msra.mxu0 0.0
  %4634 = vmatpush.msra.mxu0 0.0
  %4635 = vmatpush.msra.mxu0 0.0
  %4636 = vmatpush.msra.mxu0 0.0
  %4637 = vmatpush.msra.mxu0 0.0
  %4638 = vmatpush.msra.mxu0 0.0
  %4639 = vmatpush.msra.mxu0 0.0
  %4640 = vmatpush.msra.mxu0 %v4621
  %4641 = vmatpush.msra.mxu0 %v4620
  %4642 = vmatpush.msra.mxu0 %v4619
  %4643 = vmatpush.msra.mxu0 %v4618
  %4644 = vmatmul.f32.gmra.mxu0 %v4623
  %v4645 = vpop.f32.mrf.mxu0
  %v4646 = vadd.f32 0.0, %v4645
  %4647 = vmatmul.f32.gmra.mxu0 %v4626
  %v4648 = vpop.f32.mrf.mxu0
  %v4649 = vadd.f32 0.0, %v4648
  %4650 = vdwg.mxu0
  %v4652 = vsel %vm371, %v4610, 0
  %v4655 = vsel %vm371, %v4611, 0
  %4657 = vmatpush.msra.mxu0 0.0
  %4658 = vmatpush.msra.mxu0 0.0
  %4659 = vmatpush.msra.mxu0 0.0
  %4660 = vmatpush.msra.mxu0 0.0
  %4661 = vmatpush.msra.mxu0 0.0
  %4662 = vmatpush.msra.mxu0 0.0
  %4663 = vmatpush.msra.mxu0 0.0
  %4664 = vmatpush.msra.mxu0 0.0
  %4665 = vmatpush.msra.mxu0 0.0
  %4666 = vmatpush.msra.mxu0 0.0
  %4667 = vmatpush.msra.mxu0 0.0
  %4668 = vmatpush.msra.mxu0 0.0
  %4669 = vmatpush.msra.mxu0 %v4615
  %4670 = vmatpush.msra.mxu0 %v4614
  %4671 = vmatpush.msra.mxu0 %v4613
  %4672 = vmatpush.msra.mxu0 %v4612
  %4673 = vmatmul.f32.gmra.mxu0 %v4652
  %v4674 = vpop.f32.mrf.mxu0
  %v4675 = vadd.f32 %v4646, %v4674
  %4676 = vmatmul.f32.gmra.mxu0 %v4655
  %v4677 = vpop.f32.mrf.mxu0
  %v4678 = vadd.f32 %v4649, %v4677
  %4679 = vdwg.mxu0
  %v4680 = vld [vmem:[%s4605 + $0x2] sm:$0xff]
  %v4681 = vld [vmem:[%s4605 + $0xa] sm:$0x3f]
  %v4682 = vld [vmem:[%s2346] sm:$0xff]
  %v4683 = vld [vmem:[%s2346 + $0x8] sm:$0xff]
  %v4684 = vld [vmem:[%s2346 + $0x10] sm:$0xff]
  %v4685 = vld [vmem:[%s2346 + $0x18] sm:$0xff]
  %v4687 = vsel %vm371, %v4680, 0
  %v4690 = vsel %vm371, %v4681, 0
  %4692 = vmatpush.msra.mxu0 0.0
  %4693 = vmatpush.msra.mxu0 0.0
  %4694 = vmatpush.msra.mxu0 0.0
  %4695 = vmatpush.msra.mxu0 0.0
  %4696 = vmatpush.msra.mxu0 0.0
  %4697 = vmatpush.msra.mxu0 0.0
  %4698 = vmatpush.msra.mxu0 0.0
  %4699 = vmatpush.msra.mxu0 0.0
  %4700 = vmatpush.msra.mxu0 0.0
  %4701 = vmatpush.msra.mxu0 0.0
  %4702 = vmatpush.msra.mxu0 0.0
  %4703 = vmatpush.msra.mxu0 0.0
  %4704 = vmatpush.msra.mxu0 %v4685
  %4705 = vmatpush.msra.mxu0 %v4684
  %4706 = vmatpush.msra.mxu0 %v4683
  %4707 = vmatpush.msra.mxu0 %v4682
  %4708 = vmatmul.f32.gmra.mxu0 %v4687
  %v4709 = vpop.f32.mrf.mxu0
  %v4710 = vadd.f32 0.0, %v4709
  %4711 = vmatmul.f32.gmra.mxu0 %v4690
  %v4712 = vpop.f32.mrf.mxu0
  %v4713 = vadd.f32 0.0, %v4712
  %4714 = vdwg.mxu0
  %v4715 = vadd.f32 %v4675, %v4710
  %v4716 = vadd.f32 %v4678, %v4713
  %v4717 = vadd.f32 %v4715, %v2383
  %v4718 = vadd.f32 %v4716, %v2383
  %v4719 = vsel %vm371, %v4717, 0.0
  %v4720 = vsel %vm1713, %v4718, 0.0
  %v4721 = vadd.f32 %v4719, %v4720
  %4722 = vadd.xlane.f32.xlu0 %v4721
  %v4723 = vpop.xlane.xlu0 %4722
  %v4724 = vrot.slane %v4723, 4
  %v4725 = vadd.f32 %v4723, %v4724
  %v4726 = vrot.slane %v4725, 2
  %v4727 = vadd.f32 %v4725, %v4726
  %v4728 = vrot.slane %v4727, 1
  %v4729 = vadd.f32 %v4727, %v4728
  %s4730 = vtos %v4729
  %v4731 = vmul.f32 %v4717, %v4717
  %v4732 = vmul.f32 %v4718, %v4718
  %v4733 = vsel %vm371, %v4731, 0.0
  %v4734 = vsel %vm1713, %v4732, 0.0
  %v4735 = vadd.f32 %v4733, %v4734
  %4736 = vadd.xlane.f32.xlu0 %v4735
  %v4737 = vpop.xlane.xlu0 %4736
  %v4738 = vrot.slane %v4737, 4
  %v4739 = vadd.f32 %v4737, %v4738
  %v4740 = vrot.slane %v4739, 2
  %v4741 = vadd.f32 %v4739, %v4740
  %v4742 = vrot.slane %v4741, 1
  %v4743 = vadd.f32 %v4741, %v4742
  %s4744 = vtos %v4743
  %s4745 = smul.f32 %s4730, 0.002232143
  %s4746 = smul.f32 %s4744, 0.002232143
  %s4747 = smul.f32 %s4745, %s4745
  %s4748 = ssub.f32 %s4746, %s4747
  %s4749 = sadd.f32 %s4748, 1e-05
  %v4750 = vstv %s4749
  %v4751 = vrsqrt.pop %v4750
  %v4752 = vmul.f32 %v4751, %v4750
  %v4753 = vmul.f32 %v4752, %v4751
  %v4754 = vmul.f32 0.5, %v4753
  %v4755 = vsub.f32 1.5, %v4754
  %v4756 = vmul.f32 %v4751, %v4755
  %vm4757 = vweird.f32 %v4750
  %vm4758 = vweird.f32 %v4751
  %vm4759 = vmor %vm4757, %vm4758
  %v4760 = vsel %vm4759, %v4751, %v4756
  %s4761 = vtos %v4760
  %v4762 = vstv %s4761
  %v4763 = vmul.f32 %v100, %v4762
  %v4764 = vstv %s4745
  %v4765 = vmul.f32 %v4764, %v4763
  %v4766 = vsub.f32 %v101, %v4765
  %v4768 = vperm.slane %v4763, 0
  %v4770 = vmul.f32 %v4717, %v4768
  %v4771 = vmul.f32 %v4718, %v4768
  %v4773 = vperm.slane %v4766, 0
  %v4775 = vadd.f32 %v4770, %v4773
  %v4776 = vadd.f32 %v4771, %v4773
  %v4777 = vmax.f32 %v4775, 0.0
  %v4778 = vmax.f32 %v4776, 0.0
  %s4779 = scalar_lea.vmem %s18, 16
  %4780 = vst.msk [vmem:[%s4779] sm:$0xff] %vm371, %v4777
  %4781 = vst.msk [vmem:[%s4779 + $0x8] sm:$0x3f] %vm1713, %v4778
  %v4782 = vsel %vm371, %v4777, 0.0
  %v4783 = vsel %vm1713, %v4778, 0.0
  %v4784 = vadd.f32 %v4782, %v4783
  %4785 = vadd.xlane.f32.xlu0 %v4784
  %v4786 = vpop.xlane.xlu0 %4785
  %v4787 = vrot.slane %v4786, 4
  %v4788 = vadd.f32 %v4786, %v4787
  %v4789 = vrot.slane %v4788, 2
  %v4790 = vadd.f32 %v4788, %v4789
  %v4791 = vrot.slane %v4790, 1
  %v4792 = vadd.f32 %v4790, %v4791
  %s4793 = vtos %v4792
  %s4794 = sadd.f32 %s2461, %s4793
  %v4795 = vmul.f32 %v4777, %v4777
  %v4796 = vmul.f32 %v4778, %v4778
  %v4797 = vsel %vm371, %v4795, 0.0
  %v4798 = vsel %vm1713, %v4796, 0.0
  %v4799 = vadd.f32 %v4797, %v4798
  %4800 = vadd.xlane.f32.xlu0 %v4799
  %v4801 = vpop.xlane.xlu0 %4800
  %v4802 = vrot.slane %v4801, 4
  %v4803 = vadd.f32 %v4801, %v4802
  %v4804 = vrot.slane %v4803, 2
  %v4805 = vadd.f32 %v4803, %v4804
  %v4806 = vrot.slane %v4805, 1
  %v4807 = vadd.f32 %v4805, %v4806
  %s4808 = vtos %v4807
  %s4809 = sadd.f32 %s2476, %s4808
  %s4810 = smul.f32 %s4794, 0.0011160715
  %s4811 = smul.f32 %s4809, 0.0011160715
  %s4812 = smul.f32 %s4810, %s4810
  %s4813 = ssub.f32 %s4811, %s4812
  %s4814 = sadd.f32 %s4813, 1e-05
  %v4815 = vstv %s4814
  %v4816 = vrsqrt.pop %v4815
  %v4817 = vmul.f32 %v4816, %v4815
  %v4818 = vmul.f32 %v4817, %v4816
  %v4819 = vmul.f32 0.5, %v4818
  %v4820 = vsub.f32 1.5, %v4819
  %v4821 = vmul.f32 %v4816, %v4820
  %vm4822 = vweird.f32 %v4815
  %vm4823 = vweird.f32 %v4816
  %vm4824 = vmor %vm4822, %vm4823
  %v4825 = vsel %vm4824, %v4816, %v4821
  %s4826 = vtos %v4825
  %v4827 = vld [vmem:[%s18] sm:$0xff]
  %v4828 = vld [vmem:[%s18 + $0x8] sm:$0x3f]
  %v4829 = vld [vmem:[%s18 + $0x10] sm:$0xff]
  %v4830 = vld [vmem:[%s18 + $0x18] sm:$0x3f]
  %v4831 = vstv %s4810
  %v4832 = vsub.f32 %v4827, %v4831
  %v4833 = vsub.f32 %v4828, %v4831
  %v4834 = vsub.f32 %v4829, %v4831
  %v4835 = vsub.f32 %v4830, %v4831
  %v4836 = vstv %s4826
  %v4837 = vmul.f32 %v4832, %v4836
  %v4838 = vmul.f32 %v4833, %v4836
  %v4839 = vmul.f32 %v4834, %v4836
  %v4840 = vmul.f32 %v4835, %v4836
  %4841 = vst.msk [vmem:[%s18] sm:$0xff] %vm371, %v4837
  %4842 = vst.msk [vmem:[%s18 + $0x8] sm:$0x3f] %vm1713, %v4838
  %4843 = vst.msk [vmem:[%s18 + $0x10] sm:$0xff] %vm371, %v4839
  %4844 = vst.msk [vmem:[%s18 + $0x18] sm:$0x3f] %vm1713, %v4840
  // Predicated region
  $region74: #{fairseq_wav2vec1_forward.1} parent=0 // pred_check
    _
  $region75: #{fairseq_wav2vec1_forward.1} parent=0 // pred_check_branch
    %4846 = sbr.rel (0) target = $region77
  $region76: #{fairseq_wav2vec1_forward.1} parent=0 // pred_region
    _
  $region77: #{fairseq_wav2vec1_forward.1} parent=0 // pred_fallthru
    _
  // Predicated region
  $region78: #{fairseq_wav2vec1_forward.1} parent=0 // pred_check
    _
  $region79: #{fairseq_wav2vec1_forward.1} parent=0 // pred_check_branch
    %4848 = sbr.rel (0) target = $region81
  $region80: #{fairseq_wav2vec1_forward.1} parent=0 // pred_region
    _
  $region81: #{fairseq_wav2vec1_forward.1} parent=0 // pred_fallthru
    _

</llo_original>
